<compile_context>
chip_gen: v7x
topology: tpu7x:2x2x1
jax: 0.10.0
libtpu: 0.0.40
codegen_flags: <defaults>
</compile_context>

<pallas_src>
import jax
import jax.numpy as jnp
from jax.experimental import pallas as pl
from jax.experimental.pallas import tpu as pltpu


def basic_block_kernel(x_ref, w1_ref, w2_ref, s1_ref, b1_ref, s2_ref, b2_ref,
                       out_ref, mid_pad_ref):
    # x_ref:       (1, H+2, W+2, Cp) bf16 spatially padded NHWC input (one image)
    # w1/w2_ref:   (3, 3*Cp, Cp)     bf16 K-packed weights: [dy, dx*Cp + cin, cout]
    # s*/b*_ref:   (1, Cp)           f32 folded BatchNorm scale / shift
    # out_ref:     (1, H, W, Cp)     f32
    # mid_pad_ref: VMEM (H+2, W+2, Cp) bf16 scratch (zero-haloed conv1 activation)
    Hp, Wp, Cp = mid_pad_ref.shape
    H, W = Hp - 2, Wp - 2
    HW = H * W

    def conv3x3(img_pad, w_ref):
        # img_pad: (Hp, Wp, Cp) bf16 with a zero spatial halo.
        # Build the 3-dx-tap slab ONCE per conv.  The lane-axis concat offsets
        # are multiples of Cp=128 (aligned); only the dx=1/2 W-slices are
        # sublane-misaligned relayouts.
        slab = jnp.concatenate(
            [img_pad[:, 0:W, :], img_pad[:, 1:1 + W, :], img_pad[:, 2:2 + W, :]],
            axis=-1)                                       # (Hp, W, 3*Cp) bf16
        slab2 = slab.reshape(Hp * W, 3 * Cp)               # layout-free when W % 8 == 0
        acc = jnp.zeros((HW, Cp), jnp.float32)
        for dy in range(3):                                # dy shift = aligned sublane slice
            lhs = slab2[dy * W:dy * W + HW, :]             # (HW, 3*Cp) bf16
            acc = acc + jnp.dot(lhs, w_ref[dy],            # K = 3*Cp bf16 MXU matmul
                                preferred_element_type=jnp.float32)
        return acc, slab2

    x = x_ref[0]                                           # (Hp, Wp, Cp) bf16

    # ---- conv1 (3 K-packed bf16 matmuls) + folded bn1 + Hardtanh(0, 20) ------
    acc1, slab1 = conv3x3(x, w1_ref)
    mid = jnp.clip(acc1 * s1_ref[...] + b1_ref[...], 0.0, 20.0)   # (HW, Cp) f32

    # ---- stash conv1 activation (bf16) in the zero-haloed scratch ------------
    # Halo rows are cleared unconditionally EVERY grid step (no program_id
    # gating), so this is correct under megacore / core-parallel sharding.
    # Interior rows are written full-width with the zero halo columns composed
    # into the value -> aligned, unmasked full-row stores.
    zcol = jnp.zeros((H, 1, Cp), jnp.bfloat16)
    mid_rows = jnp.concatenate(
        [zcol, mid.reshape(H, W, Cp).astype(jnp.bfloat16), zcol], axis=1)  # (H, Wp, Cp)
    mid_pad_ref[0, :, :] = jnp.zeros((Wp, Cp), jnp.bfloat16)
    mid_pad_ref[Hp - 1, :, :] = jnp.zeros((Wp, Cp), jnp.bfloat16)
    mid_pad_ref[1:1 + H, :, :] = mid_rows

    # ---- conv2 + folded bn2 --------------------------------------------------
    acc2, _ = conv3x3(mid_pad_ref[...], w2_ref)
    out = acc2 * s2_ref[...] + b2_ref[...]

    # ---- residual add + Hardtanh(0, 20) --------------------------------------
    # residual[h, w, c] = x[h+1, w+1, c] = slab1[(h+1)*W + w, Cp + c]: an
    # aligned (sublane offset W, lane offset Cp) slice of an already
    # materialised value -> no extra relayout copy.
    residual = slab1[W:W + HW, Cp:2 * Cp].astype(jnp.float32)
    out = jnp.clip(out + residual, 0.0, 20.0)
    out_ref[0] = out.reshape(H, W, Cp).astype(out_ref.dtype)


def basic_block(x_nchw, conv1_w, bn1, conv2_w, bn2, *, eps=1e-5):
    """BasicBlock forward (stride=1, downsample=None, eval-mode BN).

    x_nchw:   (N, C, H, W)  float input, PyTorch NCHW layout.
    conv*_w:  (C, C, 3, 3)  PyTorch OIHW conv weights (bias-free).
    bn*:      dict with 'gamma', 'beta', 'mean', 'var' of shape (C,).
    Returns (N, C, H, W) float32.
    """
    N, C_in, H, W = x_nchw.shape
    C_out = conv1_w.shape[0]
    assert conv1_w.shape == (C_out, C_in, 3, 3)
    assert conv2_w.shape == (C_out, C_out, 3, 3)
    assert C_in == C_out, "identity residual requires inplanes == planes"
    C = C_in
    Cp = ((C + 127) // 128) * 128          # lane-dense channel padding
    Hp, Wp = H + 2, W + 2

    # NHWC, spatial halo pad (conv padding=1), channel pad to Cp, cast to bf16.
    x = jnp.transpose(x_nchw, (0, 2, 3, 1))
    x = jnp.pad(x, ((0, 0), (1, 1), (1, 1), (0, Cp - C))).astype(jnp.bfloat16)

    def pack_w(w):
        # (Cout, Cin, 3, 3) -> (3, 3*Cp, Cp): index [dy, dx*Cp + cin, cout], bf16.
        w = jnp.transpose(w.astype(jnp.float32), (2, 3, 1, 0))      # (dy, dx, cin, cout)
        w = jnp.pad(w, ((0, 0), (0, 0), (0, Cp - C), (0, Cp - C)))
        return w.reshape(3, 3 * Cp, Cp).astype(jnp.bfloat16)

    def fold_bn(p):  # inference-mode BN folded into per-channel scale/shift (f32)
        scale = p["gamma"] / jnp.sqrt(p["var"] + eps)
        shift = p["beta"] - p["mean"] * scale
        scale = jnp.pad(scale.astype(jnp.float32), (0, Cp - C), constant_values=1.0)
        shift = jnp.pad(shift.astype(jnp.float32), (0, Cp - C))
        return scale.reshape(1, Cp), shift.reshape(1, Cp)

    w1, w2 = pack_w(conv1_w), pack_w(conv2_w)
    s1, b1 = fold_bn(bn1)
    s2, b2 = fold_bn(bn2)

    def const_spec(shape):  # grid-invariant operand: single VMEM buffer
        return pl.BlockSpec(shape, lambda n: (0,) * len(shape),
                            pipeline_mode=pl.Buffered(1))

    out = pl.pallas_call(
        basic_block_kernel,
        out_shape=jax.ShapeDtypeStruct((N, H, W, Cp), jnp.float32),
        grid=(N,),
        in_specs=[
            pl.BlockSpec((1, Hp, Wp, Cp), lambda n: (n, 0, 0, 0)),   # x (double-buffered)
            const_spec((3, 3 * Cp, Cp)),                             # w1
            const_spec((3, 3 * Cp, Cp)),                             # w2
            const_spec((1, Cp)), const_spec((1, Cp)),                # scale1, shift1
            const_spec((1, Cp)), const_spec((1, Cp)),                # scale2, shift2
        ],
        out_specs=pl.BlockSpec((1, H, W, Cp), lambda n: (n, 0, 0, 0)),
        scratch_shapes=[pltpu.VMEM((Hp, Wp, Cp), jnp.bfloat16)],
        compiler_params=pltpu.CompilerParams(
            dimension_semantics=("parallel",),
            vmem_limit_bytes=32 * 1024 * 1024),
    )(x, w1, w2, s1, b1, s2, b2)

    out = out[:, :, :, :C]                       # drop channel padding
    # TODO(synk): NHWC consumers could skip this transpose (extra HBM pass).
    return jnp.transpose(out, (0, 3, 1, 2))      # back to NCHW


def _reference_basic_block(x, w1, bn1, w2, bn2, eps=1e-5):
    """Pure-JAX f32 reference (for a self-check)."""
    def conv(a, w):
        return jax.lax.conv_general_dilated(
            a, w, window_strides=(1, 1), padding=((1, 1), (1, 1)),
            dimension_numbers=("NCHW", "OIHW", "NCHW"))

    def bn(a, p):
        scale = p["gamma"] / jnp.sqrt(p["var"] + eps)
        shift = p["beta"] - p["mean"] * scale
        return a * scale[None, :, None, None] + shift[None, :, None, None]

    out = jnp.clip(bn(conv(x, w1), bn1), 0.0, 20.0)
    out = bn(conv(out, w2), bn2)
    return jnp.clip(out + x, 0.0, 20.0)


if __name__ == "__main__":
    key = jax.random.PRNGKey(0)
    N, C, H, W = 2, 16, 16, 16
    keys = jax.random.split(key, 11)

    x = jax.random.normal(keys[0], (N, C, H, W), dtype=jnp.float32)
    w_scale = (2.0 / (C * 9)) ** 0.5
    conv1_w = jax.random.normal(keys[1], (C, C, 3, 3), jnp.float32) * w_scale
    conv2_w = jax.random.normal(keys[2], (C, C, 3, 3), jnp.float32) * w_scale
    bn1 = dict(
        gamma=1.0 + 0.1 * jax.random.normal(keys[3], (C,), jnp.float32),
        beta=0.1 * jax.random.normal(keys[4], (C,), jnp.float32),
        mean=0.1 * jax.random.normal(keys[5], (C,), jnp.float32),
        var=jax.random.uniform(keys[6], (C,), jnp.float32, 0.5, 1.5),
    )
    bn2 = dict(
        gamma=1.0 + 0.1 * jax.random.normal(keys[7], (C,), jnp.float32),
        beta=0.1 * jax.random.normal(keys[8], (C,), jnp.float32),
        mean=0.1 * jax.random.normal(keys[9], (C,), jnp.float32),
        var=jax.random.uniform(keys[10], (C,), jnp.float32, 0.5, 1.5),
    )

    y = basic_block(x, conv1_w, bn1, conv2_w, bn2)
    y = jax.block_until_ready(y)

    y_ref = _reference_basic_block(x, conv1_w, bn1, conv2_w, bn2)
    # bf16 MXU operands -> compare against the f32 reference with a
    # bf16-appropriate tolerance.
    assert jnp.allclose(y, y_ref, atol=1e-1, rtol=2e-2), (
        f"kernel mismatch, max abs err = {float(jnp.max(jnp.abs(y - y_ref)))}")
    print("KERNEL_OK")
</pallas_src>

<mosaic_0001>
module attributes {stable_mosaic.version = 11 : i64} {
  func.func @basic_block_kernel(%arg0: i32, %arg1: memref<1x18x18x128xbf16, #tpu.memory_space<vmem>>, %arg2: memref<3x384x128xbf16, #tpu.memory_space<vmem>>, %arg3: memref<3x384x128xbf16, #tpu.memory_space<vmem>>, %arg4: memref<1x128xf32, #tpu.memory_space<vmem>>, %arg5: memref<1x128xf32, #tpu.memory_space<vmem>>, %arg6: memref<1x128xf32, #tpu.memory_space<vmem>>, %arg7: memref<1x128xf32, #tpu.memory_space<vmem>>, %arg8: memref<1x16x16x128xf32, #tpu.memory_space<vmem>>, %arg9: memref<18x18x128xbf16, #tpu.memory_space<vmem>>) attributes {dimension_semantics = [#tpu.dimension_semantics<parallel>], iteration_bounds = array<i64: 2>, scalar_prefetch = 0 : i64, scratch_operands = 1 : i64, tpu.core_type = #tpu.core_type<tc>, window_params = [{transform_indices = @transform_0, window_bounds = array<i64: 1, 18, 18, 128>}, {pipeline_mode = #tpu.pipeline_mode<synchronous>, transform_indices = @transform_1, window_bounds = array<i64: 3, 384, 128>}, {pipeline_mode = #tpu.pipeline_mode<synchronous>, transform_indices = @transform_2, window_bounds = array<i64: 3, 384, 128>}, {pipeline_mode = #tpu.pipeline_mode<synchronous>, transform_indices = @transform_3, window_bounds = array<i64: 1, 128>}, {pipeline_mode = #tpu.pipeline_mode<synchronous>, transform_indices = @transform_4, window_bounds = array<i64: 1, 128>}, {pipeline_mode = #tpu.pipeline_mode<synchronous>, transform_indices = @transform_5, window_bounds = array<i64: 1, 128>}, {pipeline_mode = #tpu.pipeline_mode<synchronous>, transform_indices = @transform_6, window_bounds = array<i64: 1, 128>}, {transform_indices = @transform_7, window_bounds = array<i64: 1, 16, 16, 128>}]} {
    %c0 = arith.constant 0 : index
    %c0_0 = arith.constant 0 : index
    %c0_1 = arith.constant 0 : index
    %c0_2 = arith.constant 0 : index
    %0 = vector.load %arg1[%c0, %c0_0, %c0_1, %c0_2] : memref<1x18x18x128xbf16, #tpu.memory_space<vmem>>, vector<1x18x18x128xbf16>
    %1 = vector.shape_cast %0 : vector<1x18x18x128xbf16> to vector<18x18x128xbf16>
    %2 = vector.extract_strided_slice %1 {offsets = [0, 0, 0], sizes = [18, 16, 128], strides = [1, 1, 1]} : vector<18x18x128xbf16> to vector<18x16x128xbf16>
    %3 = vector.extract_strided_slice %1 {offsets = [0, 1, 0], sizes = [18, 16, 128], strides = [1, 1, 1]} : vector<18x18x128xbf16> to vector<18x16x128xbf16>
    %4 = vector.extract_strided_slice %1 {offsets = [0, 2, 0], sizes = [18, 16, 128], strides = [1, 1, 1]} : vector<18x18x128xbf16> to vector<18x16x128xbf16>
    %5 = tpu.concatenate %2, %3, %4 in 2 : vector<18x16x128xbf16>, vector<18x16x128xbf16>, vector<18x16x128xbf16> -> vector<18x16x384xbf16>
    %6 = vector.shape_cast %5 : vector<18x16x384xbf16> to vector<288x384xbf16>
    %cst = arith.constant 0.000000e+00 : f32
    %7 = vector.broadcast %cst : f32 to vector<256x128xf32>
    %8 = vector.extract_strided_slice %6 {offsets = [0, 0], sizes = [256, 384], strides = [1, 1]} : vector<288x384xbf16> to vector<256x384xbf16>
    %c0_3 = arith.constant 0 : index
    %c0_4 = arith.constant 0 : index
    %c0_5 = arith.constant 0 : index
    %9 = vector.load %arg2[%c0_3, %c0_4, %c0_5] : memref<3x384x128xbf16, #tpu.memory_space<vmem>>, vector<1x384x128xbf16>
    %10 = vector.shape_cast %9 : vector<1x384x128xbf16> to vector<384x128xbf16>
    %cst_6 = arith.constant dense<0.000000e+00> : vector<256x128xf32>
    %11 = tpu.matmul %8, %10, %cst_6 {dimension_numbers = #tpu.dot_dimension_numbers<[1], [0], [0], [1], [0, 0, 1, 1], [], []>} : vector<256x384xbf16>, vector<384x128xbf16>, vector<256x128xf32> -> vector<256x128xf32>
    %12 = arith.addf %7, %11 : vector<256x128xf32>
    %13 = vector.extract_strided_slice %6 {offsets = [16, 0], sizes = [256, 384], strides = [1, 1]} : vector<288x384xbf16> to vector<256x384xbf16>
    %c1 = arith.constant 1 : index
    %c0_7 = arith.constant 0 : index
    %c0_8 = arith.constant 0 : index
    %14 = vector.load %arg2[%c1, %c0_7, %c0_8] : memref<3x384x128xbf16, #tpu.memory_space<vmem>>, vector<1x384x128xbf16>
    %15 = vector.shape_cast %14 : vector<1x384x128xbf16> to vector<384x128xbf16>
    %cst_9 = arith.constant dense<0.000000e+00> : vector<256x128xf32>
    %16 = tpu.matmul %13, %15, %cst_9 {dimension_numbers = #tpu.dot_dimension_numbers<[1], [0], [0], [1], [0, 0, 1, 1], [], []>} : vector<256x384xbf16>, vector<384x128xbf16>, vector<256x128xf32> -> vector<256x128xf32>
    %17 = arith.addf %12, %16 : vector<256x128xf32>
    %18 = vector.extract_strided_slice %6 {offsets = [32, 0], sizes = [256, 384], strides = [1, 1]} : vector<288x384xbf16> to vector<256x384xbf16>
    %c2 = arith.constant 2 : index
    %c0_10 = arith.constant 0 : index
    %c0_11 = arith.constant 0 : index
    %19 = vector.load %arg2[%c2, %c0_10, %c0_11] : memref<3x384x128xbf16, #tpu.memory_space<vmem>>, vector<1x384x128xbf16>
    %20 = vector.shape_cast %19 : vector<1x384x128xbf16> to vector<384x128xbf16>
    %cst_12 = arith.constant dense<0.000000e+00> : vector<256x128xf32>
    %21 = tpu.matmul %18, %20, %cst_12 {dimension_numbers = #tpu.dot_dimension_numbers<[1], [0], [0], [1], [0, 0, 1, 1], [], []>} : vector<256x384xbf16>, vector<384x128xbf16>, vector<256x128xf32> -> vector<256x128xf32>
    %22 = arith.addf %17, %21 : vector<256x128xf32>
    %c0_13 = arith.constant 0 : index
    %c0_14 = arith.constant 0 : index
    %23 = vector.load %arg4[%c0_13, %c0_14] : memref<1x128xf32, #tpu.memory_space<vmem>>, vector<1x128xf32>
    %24 = vector.broadcast %23 : vector<1x128xf32> to vector<256x128xf32>
    %25 = arith.mulf %22, %24 : vector<256x128xf32>
    %c0_15 = arith.constant 0 : index
    %c0_16 = arith.constant 0 : index
    %26 = vector.load %arg5[%c0_15, %c0_16] : memref<1x128xf32, #tpu.memory_space<vmem>>, vector<1x128xf32>
    %27 = vector.broadcast %26 : vector<1x128xf32> to vector<256x128xf32>
    %28 = arith.addf %25, %27 : vector<256x128xf32>
    %cst_17 = arith.constant 0.000000e+00 : f32
    %cst_18 = arith.constant 2.000000e+01 : f32
    %29 = vector.broadcast %cst_17 : f32 to vector<256x128xf32>
    %30 = arith.maximumf %29, %28 : vector<256x128xf32>
    %31 = vector.broadcast %cst_18 : f32 to vector<256x128xf32>
    %32 = arith.minimumf %31, %30 : vector<256x128xf32>
    %cst_19 = arith.constant 0.000000e+00 : bf16
    %33 = vector.broadcast %cst_19 : bf16 to vector<16x1x128xbf16>
    %34 = vector.shape_cast %32 : vector<256x128xf32> to vector<16x16x128xf32>
    %35 = arith.truncf %34 : vector<16x16x128xf32> to vector<16x16x128xbf16>
    %36 = tpu.concatenate %33, %35, %33 in 1 : vector<16x1x128xbf16>, vector<16x16x128xbf16>, vector<16x1x128xbf16> -> vector<16x18x128xbf16>
    %cst_20 = arith.constant 0.000000e+00 : bf16
    %37 = vector.broadcast %cst_20 : bf16 to vector<18x128xbf16>
    %c0_21 = arith.constant 0 : index
    %c0_22 = arith.constant 0 : index
    %c0_23 = arith.constant 0 : index
    %38 = vector.load %arg9[%c0_21, %c0_22, %c0_23] : memref<18x18x128xbf16, #tpu.memory_space<vmem>>, vector<1x18x128xbf16>
    %39 = vector.shape_cast %38 : vector<1x18x128xbf16> to vector<18x128xbf16>
    %40 = vector.shape_cast %37 : vector<18x128xbf16> to vector<1x18x128xbf16>
    tpu.vector_store %arg9[%c0_21, %c0_22, %c0_23], %40 {strides = array<i32>} : memref<18x18x128xbf16, #tpu.memory_space<vmem>>, vector<1x18x128xbf16>,
    %cst_24 = arith.constant 0.000000e+00 : bf16
    %41 = vector.broadcast %cst_24 : bf16 to vector<18x128xbf16>
    %c17 = arith.constant 17 : index
    %c0_25 = arith.constant 0 : index
    %c0_26 = arith.constant 0 : index
    %42 = vector.load %arg9[%c17, %c0_25, %c0_26] : memref<18x18x128xbf16, #tpu.memory_space<vmem>>, vector<1x18x128xbf16>
    %43 = vector.shape_cast %42 : vector<1x18x128xbf16> to vector<18x128xbf16>
    %44 = vector.shape_cast %41 : vector<18x128xbf16> to vector<1x18x128xbf16>
    tpu.vector_store %arg9[%c17, %c0_25, %c0_26], %44 {strides = array<i32>} : memref<18x18x128xbf16, #tpu.memory_space<vmem>>, vector<1x18x128xbf16>,
    %c1_27 = arith.constant 1 : index
    %c0_28 = arith.constant 0 : index
    %c0_29 = arith.constant 0 : index
    %45 = vector.load %arg9[%c1_27, %c0_28, %c0_29] : memref<18x18x128xbf16, #tpu.memory_space<vmem>>, vector<16x18x128xbf16>
    tpu.vector_store %arg9[%c1_27, %c0_28, %c0_29], %36 {strides = array<i32>} : memref<18x18x128xbf16, #tpu.memory_space<vmem>>, vector<16x18x128xbf16>,
    %c0_30 = arith.constant 0 : index
    %c0_31 = arith.constant 0 : index
    %c0_32 = arith.constant 0 : index
    %46 = vector.load %arg9[%c0_30, %c0_31, %c0_32] : memref<18x18x128xbf16, #tpu.memory_space<vmem>>, vector<18x18x128xbf16>
    %47 = vector.extract_strided_slice %46 {offsets = [0, 0, 0], sizes = [18, 16, 128], strides = [1, 1, 1]} : vector<18x18x128xbf16> to vector<18x16x128xbf16>
    %48 = vector.extract_strided_slice %46 {offsets = [0, 1, 0], sizes = [18, 16, 128], strides = [1, 1, 1]} : vector<18x18x128xbf16> to vector<18x16x128xbf16>
    %49 = vector.extract_strided_slice %46 {offsets = [0, 2, 0], sizes = [18, 16, 128], strides = [1, 1, 1]} : vector<18x18x128xbf16> to vector<18x16x128xbf16>
    %50 = tpu.concatenate %47, %48, %49 in 2 : vector<18x16x128xbf16>, vector<18x16x128xbf16>, vector<18x16x128xbf16> -> vector<18x16x384xbf16>
    %51 = vector.shape_cast %50 : vector<18x16x384xbf16> to vector<288x384xbf16>
    %cst_33 = arith.constant 0.000000e+00 : f32
    %52 = vector.broadcast %cst_33 : f32 to vector<256x128xf32>
    %53 = vector.extract_strided_slice %51 {offsets = [0, 0], sizes = [256, 384], strides = [1, 1]} : vector<288x384xbf16> to vector<256x384xbf16>
    %c0_34 = arith.constant 0 : index
    %c0_35 = arith.constant 0 : index
    %c0_36 = arith.constant 0 : index
    %54 = vector.load %arg3[%c0_34, %c0_35, %c0_36] : memref<3x384x128xbf16, #tpu.memory_space<vmem>>, vector<1x384x128xbf16>
    %55 = vector.shape_cast %54 : vector<1x384x128xbf16> to vector<384x128xbf16>
    %cst_37 = arith.constant dense<0.000000e+00> : vector<256x128xf32>
    %56 = tpu.matmul %53, %55, %cst_37 {dimension_numbers = #tpu.dot_dimension_numbers<[1], [0], [0], [1], [0, 0, 1, 1], [], []>} : vector<256x384xbf16>, vector<384x128xbf16>, vector<256x128xf32> -> vector<256x128xf32>
    %57 = arith.addf %52, %56 : vector<256x128xf32>
    %58 = vector.extract_strided_slice %51 {offsets = [16, 0], sizes = [256, 384], strides = [1, 1]} : vector<288x384xbf16> to vector<256x384xbf16>
    %c1_38 = arith.constant 1 : index
    %c0_39 = arith.constant 0 : index
    %c0_40 = arith.constant 0 : index
    %59 = vector.load %arg3[%c1_38, %c0_39, %c0_40] : memref<3x384x128xbf16, #tpu.memory_space<vmem>>, vector<1x384x128xbf16>
    %60 = vector.shape_cast %59 : vector<1x384x128xbf16> to vector<384x128xbf16>
    %cst_41 = arith.constant dense<0.000000e+00> : vector<256x128xf32>
    %61 = tpu.matmul %58, %60, %cst_41 {dimension_numbers = #tpu.dot_dimension_numbers<[1], [0], [0], [1], [0, 0, 1, 1], [], []>} : vector<256x384xbf16>, vector<384x128xbf16>, vector<256x128xf32> -> vector<256x128xf32>
    %62 = arith.addf %57, %61 : vector<256x128xf32>
    %63 = vector.extract_strided_slice %51 {offsets = [32, 0], sizes = [256, 384], strides = [1, 1]} : vector<288x384xbf16> to vector<256x384xbf16>
    %c2_42 = arith.constant 2 : index
    %c0_43 = arith.constant 0 : index
    %c0_44 = arith.constant 0 : index
    %64 = vector.load %arg3[%c2_42, %c0_43, %c0_44] : memref<3x384x128xbf16, #tpu.memory_space<vmem>>, vector<1x384x128xbf16>
    %65 = vector.shape_cast %64 : vector<1x384x128xbf16> to vector<384x128xbf16>
    %cst_45 = arith.constant dense<0.000000e+00> : vector<256x128xf32>
    %66 = tpu.matmul %63, %65, %cst_45 {dimension_numbers = #tpu.dot_dimension_numbers<[1], [0], [0], [1], [0, 0, 1, 1], [], []>} : vector<256x384xbf16>, vector<384x128xbf16>, vector<256x128xf32> -> vector<256x128xf32>
    %67 = arith.addf %62, %66 : vector<256x128xf32>
    %c0_46 = arith.constant 0 : index
    %c0_47 = arith.constant 0 : index
    %68 = vector.load %arg6[%c0_46, %c0_47] : memref<1x128xf32, #tpu.memory_space<vmem>>, vector<1x128xf32>
    %69 = vector.broadcast %68 : vector<1x128xf32> to vector<256x128xf32>
    %70 = arith.mulf %67, %69 : vector<256x128xf32>
    %c0_48 = arith.constant 0 : index
    %c0_49 = arith.constant 0 : index
    %71 = vector.load %arg7[%c0_48, %c0_49] : memref<1x128xf32, #tpu.memory_space<vmem>>, vector<1x128xf32>
    %72 = vector.broadcast %71 : vector<1x128xf32> to vector<256x128xf32>
    %73 = arith.addf %70, %72 : vector<256x128xf32>
    %74 = vector.extract_strided_slice %6 {offsets = [16, 128], sizes = [256, 128], strides = [1, 1]} : vector<288x384xbf16> to vector<256x128xbf16>
    %75 = arith.extf %74 : vector<256x128xbf16> to vector<256x128xf32>
    %76 = arith.addf %73, %75 : vector<256x128xf32>
    %cst_50 = arith.constant 0.000000e+00 : f32
    %cst_51 = arith.constant 2.000000e+01 : f32
    %77 = vector.broadcast %cst_50 : f32 to vector<256x128xf32>
    %78 = arith.maximumf %77, %76 : vector<256x128xf32>
    %79 = vector.broadcast %cst_51 : f32 to vector<256x128xf32>
    %80 = arith.minimumf %79, %78 : vector<256x128xf32>
    %81 = vector.shape_cast %80 : vector<256x128xf32> to vector<16x16x128xf32>
    %c0_52 = arith.constant 0 : index
    %c0_53 = arith.constant 0 : index
    %c0_54 = arith.constant 0 : index
    %c0_55 = arith.constant 0 : index
    %82 = vector.load %arg8[%c0_52, %c0_53, %c0_54, %c0_55] : memref<1x16x16x128xf32, #tpu.memory_space<vmem>>, vector<1x16x16x128xf32>
    %83 = vector.shape_cast %82 : vector<1x16x16x128xf32> to vector<16x16x128xf32>
    %84 = vector.shape_cast %81 : vector<16x16x128xf32> to vector<1x16x16x128xf32>
    tpu.vector_store %arg8[%c0_52, %c0_53, %c0_54, %c0_55], %84 {strides = array<i32>} : memref<1x16x16x128xf32, #tpu.memory_space<vmem>>, vector<1x16x16x128xf32>,
    return
  }
  func.func @transform_0(%arg0: i32) -> (i32, i32, i32, i32) {
    %c0_i32 = arith.constant 0 : i32
    %c0_i32_0 = arith.constant 0 : i32
    %c0_i32_1 = arith.constant 0 : i32
    %c0_i32_2 = arith.constant 0 : i32
    return %arg0, %c0_i32, %c0_i32_0, %c0_i32_1 : i32, i32, i32, i32
  }
  func.func @transform_1(%arg0: i32) -> (i32, i32, i32) {
    %c0_i32 = arith.constant 0 : i32
    %c0_i32_0 = arith.constant 0 : i32
    %c0_i32_1 = arith.constant 0 : i32
    %c0_i32_2 = arith.constant 0 : i32
    return %c0_i32, %c0_i32_0, %c0_i32_1 : i32, i32, i32
  }
  func.func @transform_2(%arg0: i32) -> (i32, i32, i32) {
    %c0_i32 = arith.constant 0 : i32
    %c0_i32_0 = arith.constant 0 : i32
    %c0_i32_1 = arith.constant 0 : i32
    %c0_i32_2 = arith.constant 0 : i32
    return %c0_i32, %c0_i32_0, %c0_i32_1 : i32, i32, i32
  }
  func.func @transform_3(%arg0: i32) -> (i32, i32) {
    %c0_i32 = arith.constant 0 : i32
    %c0_i32_0 = arith.constant 0 : i32
    %c0_i32_1 = arith.constant 0 : i32
    return %c0_i32, %c0_i32_0 : i32, i32
  }
  func.func @transform_4(%arg0: i32) -> (i32, i32) {
    %c0_i32 = arith.constant 0 : i32
    %c0_i32_0 = arith.constant 0 : i32
    %c0_i32_1 = arith.constant 0 : i32
    return %c0_i32, %c0_i32_0 : i32, i32
  }
  func.func @transform_5(%arg0: i32) -> (i32, i32) {
    %c0_i32 = arith.constant 0 : i32
    %c0_i32_0 = arith.constant 0 : i32
    %c0_i32_1 = arith.constant 0 : i32
    return %c0_i32, %c0_i32_0 : i32, i32
  }
  func.func @transform_6(%arg0: i32) -> (i32, i32) {
    %c0_i32 = arith.constant 0 : i32
    %c0_i32_0 = arith.constant 0 : i32
    %c0_i32_1 = arith.constant 0 : i32
    return %c0_i32, %c0_i32_0 : i32, i32
  }
  func.func @transform_7(%arg0: i32) -> (i32, i32, i32, i32) {
    %c0_i32 = arith.constant 0 : i32
    %c0_i32_0 = arith.constant 0 : i32
    %c0_i32_1 = arith.constant 0 : i32
    %c0_i32_2 = arith.constant 0 : i32
    return %arg0, %c0_i32, %c0_i32_0, %c0_i32_1 : i32, i32, i32, i32
  }
}

</mosaic_0001>

<llo_original>
// kernel: tpu_custom_call.1
$region0: #{tpu_custom_call.1}
  #allocation0 [shape = 'u32[]', space=smem, size = 0x4, offset = 0x4, fixed_abs, tag = 'smem constant byte address 0x4 - core index']
  #allocation1 [shape = 'u32[144,128]{1,0:T(1,128)}', space=vmem, size = 0x12000, scoped, tag = 'internal scratch']
  #allocation2 [shape = 'bf16[18,18,128]{2,1,0:T(8,128)(2,1)}', space=vmem, size = 0x1b000, scoped, tag = 'scratch operand']
  %s0 = inlined_call_operand.vmem [shape: bf16[2,18,18,128], index: 0, kind: input, shape index: {}]
  %s1 = inlined_call_operand.vmem [shape: bf16[3,384,128], index: 1, kind: input, shape index: {}]
  %s2 = inlined_call_operand.hbm [shape: bf16[3,384,128], index: 2, kind: input, shape index: {}]
  %s3 = inlined_call_operand.vmem [shape: f32[1,128], index: 3, kind: input, shape index: {}]
  %s4 = inlined_call_operand.vmem [shape: f32[1,128], index: 4, kind: input, shape index: {}]
  %s5 = inlined_call_operand.vmem [shape: f32[1,128], index: 5, kind: input, shape index: {}]
  %s6 = inlined_call_operand.vmem [shape: f32[1,128], index: 6, kind: input, shape index: {}]
  %s7 = inlined_call_operand.hbm [shape: f32[2,16,16,128], index: 7, kind: output, shape index: {}]
  %s8 = sld [smem:[#allocation0]]
  $region65: #{tpu_custom_call.1} parent=0
    _
  %s10 = ssub.s32 1, %s8
  %s11 = scalar_select 0, %s10, %s8
  $region1: #{tpu_custom_call.1} parent=0
    #allocation3 [shape = 'u8[294912]{0}', space=vmem, size = 0x48000, scoped, tag = 'input window, operand 2, single buffered']
    #allocation4 [shape = 's32[2]{0}', space=sflag, size = 0x8, scoped, tag = 'scoped memory for tpu_custom_call.1']
    #allocation5 [shape = 's32[2]{0}', space=sflag, size = 0x8, scoped, tag = 'scoped memory for tpu_custom_call.1']
    #allocation6 [shape = 'u8[262144]{0}', space=vmem, size = 0x40000, scoped, tag = 'output window, operand 0']
    %12 = vsyncpa [#allocation4], 0
    %13 = vsyncpa [#allocation5], 0
    %s14 = scalar_lea.sflag [#allocation5], 1
    %15 = vsyncpa %s14, 0
    loop: start=0, step=1, limit=4
    $region2: #{tpu_custom_call.1} parent=1 // loop_pre_header
      _
    $region3: #{tpu_custom_call.1} parent=1 // loop_header
      %s17 = sphi 0, %s21
      %p18 = scmp.ge.s32.totalorder %s17, 4
      %s27 = sphi 0, %s29
      %s30 = sphi 0, %s27
      %s31 = sphi 0, %s30
      %s47 = sphi 0, %s31
      %s51 = sphi 0, %s51
      %s53 = sphi 0, %s51
      %s54 = sphi 0, %s53
      %s68 = sphi 0, %s54
      %s72 = sphi 0, %s72
      %s74 = sphi 0, %s72
      %s75 = sphi 0, %s74
      %s89 = sphi 0, %s75
      %s93 = sphi 0, %s93
      %s95 = sphi 0, %s93
      %s96 = sphi 0, %s95
      %s110 = sphi 0, %s96
      %s114 = sphi 0, %s114
      %s116 = sphi 0, %s114
      %s117 = sphi 0, %s116
      %s131 = sphi 0, %s117
      %s135 = sphi 0, %s135
      %s137 = sphi 0, %s135
      %s138 = sphi 0, %s137
      %s152 = sphi 0, %s138
      %s156 = sphi 0, %s156
      %s158 = sphi 0, %s156
      %s159 = sphi 0, %s158
      %s173 = sphi 0, %s159
      %s179 = sphi 0, %s181
      %s182 = sphi 0, %s179
      %s183 = sphi 0, %s182
      %s199 = sphi 0, %s183
    $region4: #{tpu_custom_call.1} parent=1 // loop_header_branch
      %20 = sbr.rel (%p18) target = $region8
    $region5: #{tpu_custom_call.1} parent=1 // loop_body
      %s22 = ssub.s32 %s17, 1
      %s23 = ssub.s32 %s17, 2
      %s24 = sadd.s32 %s17, 1
      %s25 = ssub.s32 %s17, %s24
      %p26 = scmp.eq.s32.totalorder %s25, 0
      %s28 = sadd.s32 %s27, 1
      %s29 = scalar_select %p26, %s27, %s28
      %p32 = pneg %p26
      %p33 = scmp.eq.s32.totalorder %s17, 1
      %p34 = por %p32, %p33
      %p35 = scmp.ne.s32.totalorder %s27, %s30
      %p36 = scmp.eq.s32.totalorder %s17, 0
      %p37 = por %p35, %p36
      %p38 = scmp.ne.s32.totalorder %s27, %s30
      %p39 = scmp.eq.s32.totalorder %s22, 1
      %p40 = por %p38, %p39
      %p41 = scmp.ne.s32.totalorder %s30, %s31
      %p42 = scmp.eq.s32.totalorder %s22, 0
      %p43 = por %p41, %p42
      %p44 = scmp.ne.s32.totalorder %s30, %s31
      %p45 = scmp.eq.s32.totalorder %s23, 1
      %p46 = por %p44, %p45
      %p48 = scmp.ne.s32.totalorder %s31, %s47
      %p49 = scmp.eq.s32.totalorder %s23, 0
      %p50 = por %p48, %p49
      %s52 = sadd.s32 %s51, 1
      %p55 = scmp.eq.s32.totalorder %s17, 1
      %p56 = scmp.ne.s32.totalorder %s51, %s53
      %p57 = scmp.eq.s32.totalorder %s17, 0
      %p58 = por %p56, %p57
      %p59 = scmp.ne.s32.totalorder %s51, %s53
      %p60 = scmp.eq.s32.totalorder %s22, 1
      %p61 = por %p59, %p60
      %p62 = scmp.ne.s32.totalorder %s53, %s54
      %p63 = scmp.eq.s32.totalorder %s22, 0
      %p64 = por %p62, %p63
      %p65 = scmp.ne.s32.totalorder %s53, %s54
      %p66 = scmp.eq.s32.totalorder %s23, 1
      %p67 = por %p65, %p66
      %p69 = scmp.ne.s32.totalorder %s54, %s68
      %p70 = scmp.eq.s32.totalorder %s23, 0
      %p71 = por %p69, %p70
      %s73 = sadd.s32 %s72, 1
      %p76 = scmp.eq.s32.totalorder %s17, 1
      %p77 = scmp.ne.s32.totalorder %s72, %s74
      %p78 = scmp.eq.s32.totalorder %s17, 0
      %p79 = por %p77, %p78
      %p80 = scmp.ne.s32.totalorder %s72, %s74
      %p81 = scmp.eq.s32.totalorder %s22, 1
      %p82 = por %p80, %p81
      %p83 = scmp.ne.s32.totalorder %s74, %s75
      %p84 = scmp.eq.s32.totalorder %s22, 0
      %p85 = por %p83, %p84
      %p86 = scmp.ne.s32.totalorder %s74, %s75
      %p87 = scmp.eq.s32.totalorder %s23, 1
      %p88 = por %p86, %p87
      %p90 = scmp.ne.s32.totalorder %s75, %s89
      %p91 = scmp.eq.s32.totalorder %s23, 0
      %p92 = por %p90, %p91
      %s94 = sadd.s32 %s93, 1
      %p97 = scmp.eq.s32.totalorder %s17, 1
      %p98 = scmp.ne.s32.totalorder %s93, %s95
      %p99 = scmp.eq.s32.totalorder %s17, 0
      %p100 = por %p98, %p99
      %p101 = scmp.ne.s32.totalorder %s93, %s95
      %p102 = scmp.eq.s32.totalorder %s22, 1
      %p103 = por %p101, %p102
      %p104 = scmp.ne.s32.totalorder %s95, %s96
      %p105 = scmp.eq.s32.totalorder %s22, 0
      %p106 = por %p104, %p105
      %p107 = scmp.ne.s32.totalorder %s95, %s96
      %p108 = scmp.eq.s32.totalorder %s23, 1
      %p109 = por %p107, %p108
      %p111 = scmp.ne.s32.totalorder %s96, %s110
      %p112 = scmp.eq.s32.totalorder %s23, 0
      %p113 = por %p111, %p112
      %s115 = sadd.s32 %s114, 1
      %p118 = scmp.eq.s32.totalorder %s17, 1
      %p119 = scmp.ne.s32.totalorder %s114, %s116
      %p120 = scmp.eq.s32.totalorder %s17, 0
      %p121 = por %p119, %p120
      %p122 = scmp.ne.s32.totalorder %s114, %s116
      %p123 = scmp.eq.s32.totalorder %s22, 1
      %p124 = por %p122, %p123
      %p125 = scmp.ne.s32.totalorder %s116, %s117
      %p126 = scmp.eq.s32.totalorder %s22, 0
      %p127 = por %p125, %p126
      %p128 = scmp.ne.s32.totalorder %s116, %s117
      %p129 = scmp.eq.s32.totalorder %s23, 1
      %p130 = por %p128, %p129
      %p132 = scmp.ne.s32.totalorder %s117, %s131
      %p133 = scmp.eq.s32.totalorder %s23, 0
      %p134 = por %p132, %p133
      %s136 = sadd.s32 %s135, 1
      %p139 = scmp.eq.s32.totalorder %s17, 1
      %p140 = scmp.ne.s32.totalorder %s135, %s137
      %p141 = scmp.eq.s32.totalorder %s17, 0
      %p142 = por %p140, %p141
      %p143 = scmp.ne.s32.totalorder %s135, %s137
      %p144 = scmp.eq.s32.totalorder %s22, 1
      %p145 = por %p143, %p144
      %p146 = scmp.ne.s32.totalorder %s137, %s138
      %p147 = scmp.eq.s32.totalorder %s22, 0
      %p148 = por %p146, %p147
      %p149 = scmp.ne.s32.totalorder %s137, %s138
      %p150 = scmp.eq.s32.totalorder %s23, 1
      %p151 = por %p149, %p150
      %p153 = scmp.ne.s32.totalorder %s138, %s152
      %p154 = scmp.eq.s32.totalorder %s23, 0
      %p155 = por %p153, %p154
      %s157 = sadd.s32 %s156, 1
      %p160 = scmp.eq.s32.totalorder %s17, 1
      %p161 = scmp.ne.s32.totalorder %s156, %s158
      %p162 = scmp.eq.s32.totalorder %s17, 0
      %p163 = por %p161, %p162
      %p164 = scmp.ne.s32.totalorder %s156, %s158
      %p165 = scmp.eq.s32.totalorder %s22, 1
      %p166 = por %p164, %p165
      %p167 = scmp.ne.s32.totalorder %s158, %s159
      %p168 = scmp.eq.s32.totalorder %s22, 0
      %p169 = por %p167, %p168
      %p170 = scmp.ne.s32.totalorder %s158, %s159
      %p171 = scmp.eq.s32.totalorder %s23, 1
      %p172 = por %p170, %p171
      %p174 = scmp.ne.s32.totalorder %s159, %s173
      %p175 = scmp.eq.s32.totalorder %s23, 0
      %p176 = por %p174, %p175
      %s177 = ssub.s32 %s17, %s24
      %p178 = scmp.eq.s32.totalorder %s177, 0
      %s180 = sadd.s32 %s179, 1
      %s181 = scalar_select %p178, %s179, %s180
      %p184 = pneg %p178
      %p185 = scmp.eq.s32.totalorder %s17, 1
      %p186 = por %p184, %p185
      %p187 = scmp.ne.s32.totalorder %s179, %s182
      %p188 = scmp.eq.s32.totalorder %s17, 0
      %p189 = por %p187, %p188
      %p190 = scmp.ne.s32.totalorder %s179, %s182
      %p191 = scmp.eq.s32.totalorder %s22, 1
      %p192 = por %p190, %p191
      %p193 = scmp.ne.s32.totalorder %s182, %s183
      %p194 = scmp.eq.s32.totalorder %s22, 0
      %p195 = por %p193, %p194
      %p196 = scmp.ne.s32.totalorder %s182, %s183
      %p197 = scmp.eq.s32.totalorder %s23, 1
      %p198 = por %p196, %p197
      %p200 = scmp.ne.s32.totalorder %s183, %s199
      %p201 = scmp.eq.s32.totalorder %s23, 0
      %p202 = por %p200, %p201
      %p203 = scmp.le.s32.totalorder 1, %s17
      %p204 = scmp.lt.s32.totalorder %s17, 3
      %p205 = pnand %p203, %p204
      %p206 = pneg %p205
      // Predicated region
      $region9: #{tpu_custom_call.1} parent=5 // pred_check
        _
      $region10: #{tpu_custom_call.1} parent=5 // pred_check_branch
        %208 = sbr.rel (%p205) target = $region12
      $region11: #{tpu_custom_call.1} parent=5 // pred_region
        %s209 = ssub.s32 %s17, 1
        // Predicated region
        $region13: #{tpu_custom_call.1} parent=11 // pred_check
          %p210 = pneg %p64
        $region14: #{tpu_custom_call.1} parent=11 // pred_check_branch
          %212 = sbr.rel (%p210) target = $region16
        $region15: #{tpu_custom_call.1} parent=11 // pred_region
          _
        $region16: #{tpu_custom_call.1} parent=11 // pred_fallthru
          _
        // Predicated region
        $region17: #{tpu_custom_call.1} parent=11 // pred_check
          %p213 = pneg %p85
        $region18: #{tpu_custom_call.1} parent=11 // pred_check_branch
          %215 = sbr.rel (%p213) target = $region20
        $region19: #{tpu_custom_call.1} parent=11 // pred_region
          %s217 = ssub.s32 9216, 9216
          %218 = vsyncadd [#allocation4], %s217
          %s219 = sshll.u32 [#allocation3], 4
          %s220 = int_to_ptr.vmem [resolvable:$true] %s219
          %225 = dma.hbm_to_vmem [thread:$0]  %s2, 9216, %s220, [#allocation4], 64, 64, 4
        $region20: #{tpu_custom_call.1} parent=11 // pred_fallthru
          _
        // Predicated region
        $region21: #{tpu_custom_call.1} parent=11 // pred_check
          %p226 = pneg %p106
        $region22: #{tpu_custom_call.1} parent=11 // pred_check_branch
          %228 = sbr.rel (%p226) target = $region24
        $region23: #{tpu_custom_call.1} parent=11 // pred_region
          _
        $region24: #{tpu_custom_call.1} parent=11 // pred_fallthru
          _
        // Predicated region
        $region25: #{tpu_custom_call.1} parent=11 // pred_check
          %p229 = pneg %p127
        $region26: #{tpu_custom_call.1} parent=11 // pred_check_branch
          %231 = sbr.rel (%p229) target = $region28
        $region27: #{tpu_custom_call.1} parent=11 // pred_region
          _
        $region28: #{tpu_custom_call.1} parent=11 // pred_fallthru
          _
        // Predicated region
        $region29: #{tpu_custom_call.1} parent=11 // pred_check
          %p232 = pneg %p148
        $region30: #{tpu_custom_call.1} parent=11 // pred_check_branch
          %234 = sbr.rel (%p232) target = $region32
        $region31: #{tpu_custom_call.1} parent=11 // pred_region
          _
        $region32: #{tpu_custom_call.1} parent=11 // pred_fallthru
          _
        // Predicated region
        $region33: #{tpu_custom_call.1} parent=11 // pred_check
          %p235 = pneg %p169
        $region34: #{tpu_custom_call.1} parent=11 // pred_check_branch
          %237 = sbr.rel (%p235) target = $region36
        $region35: #{tpu_custom_call.1} parent=11 // pred_region
          _
        $region36: #{tpu_custom_call.1} parent=11 // pred_fallthru
          _
      $region12: #{tpu_custom_call.1} parent=5 // pred_fallthru
        _
      %p238 = scmp.lt.s32.totalorder %s17, 2
      // Predicated region
      $region37: #{tpu_custom_call.1} parent=5 // pred_check
        %p239 = pneg %p238
      $region38: #{tpu_custom_call.1} parent=5 // pred_check_branch
        %241 = sbr.rel (%p239) target = $region40
      $region39: #{tpu_custom_call.1} parent=5 // pred_region
        // Predicated region
        $region41: #{tpu_custom_call.1} parent=39 // pred_check
          %p242 = pneg %p37
        $region42: #{tpu_custom_call.1} parent=39 // pred_check_branch
          %244 = sbr.rel (%p242) target = $region44
        $region43: #{tpu_custom_call.1} parent=39 // pred_region
          %p245 = scmp.lt.s32.totalorder %s17, 1
          %s246 = scalar_select %p245, %s17, 1
          %s247 = smul.addr %s246, 54
          %s248 = smul.addr %s247, 4
          %s249 = scalar_lea.vmem %s0, %s248
        $region44: #{tpu_custom_call.1} parent=39 // pred_fallthru
          _
      $region40: #{tpu_custom_call.1} parent=5 // pred_fallthru
        _
      %p250 = scmp.le.s32.totalorder 1, %s17
      %p251 = scmp.lt.s32.totalorder %s17, 3
      %p252 = pnand %p250, %p251
      %p253 = pneg %p252
      // Predicated region
      $region45: #{tpu_custom_call.1} parent=5 // pred_check
        _
      $region46: #{tpu_custom_call.1} parent=5 // pred_check_branch
        %255 = sbr.rel (%p252) target = $region48
      $region47: #{tpu_custom_call.1} parent=5 // pred_region
        %s256 = ssub.s32 %s17, 1
        // Predicated region
        $region49: #{tpu_custom_call.1} parent=47 // pred_check
          %p257 = pneg %p85
        $region50: #{tpu_custom_call.1} parent=47 // pred_check_branch
          %259 = sbr.rel (%p257) target = $region52
        $region51: #{tpu_custom_call.1} parent=47 // pred_region
          %260 = dma.done [#allocation4], 9216
        $region52: #{tpu_custom_call.1} parent=47 // pred_fallthru
          _
        %p261 = scmp.lt.s32.totalorder %s22, 1
        %s262 = scalar_select %p261, %s22, 1
        %s263 = smul.addr %s262, 54
        %s264 = smul.addr %s263, 4
        %s265 = scalar_lea.vmem %s0, %s264
        %p266 = pneg %p43
        %p267 = pneg %p40
        %p268 = pneg %p64
        %p269 = pneg %p61
        %p270 = pneg %p85
        %p271 = pneg %p82
        %p272 = pneg %p106
        %p273 = pneg %p103
        %p274 = pneg %p127
        %p275 = pneg %p124
        %p276 = pneg %p148
        %p277 = pneg %p145
        %p278 = pneg %p169
        %p279 = pneg %p166
        %p280 = pneg %p195
        %p281 = pneg %p192
        %s282 = sand.u32 %s182, 1
        %s283 = scalar_lea.sflag [#allocation5], %s282
        %s284 = sand.u32 %s182, 1
        %s285 = smul.addr %s284, 256
        %s286 = scalar_lea.vmem [#allocation6], %s285
        %p287 = scmp.lt.s32.totalorder %s22, 1
        %s288 = scalar_select %p287, %s22, 1
        %s289 = smul.addr %s288, 54
        %s290 = smul.addr %s289, 4
        %s291 = scalar_lea.vmem %s0, %s290
        %v293 = vld [vmem:[%s291] sm:$0xf]
        %v294 = vld [vmem:[%s291 + $0x4] sm:$0xf]
        %v295 = vld [vmem:[%s291 + $0x8] sm:$0x1]
        %v296 = vld [vmem:[%s291 + $0xc] sm:$0xf]
        %v297 = vld [vmem:[%s291 + $0x10] sm:$0xf]
        %v298 = vld [vmem:[%s291 + $0x14] sm:$0x1]
        %v299 = vld [vmem:[%s291 + $0x18] sm:$0xf]
        %v300 = vld [vmem:[%s291 + $0x1c] sm:$0xf]
        %v301 = vld [vmem:[%s291 + $0x20] sm:$0x1]
        %v302 = vld [vmem:[%s291 + $0x24] sm:$0xf]
        %v303 = vld [vmem:[%s291 + $0x28] sm:$0xf]
        %v304 = vld [vmem:[%s291 + $0x2c] sm:$0x1]
        %v305 = vld [vmem:[%s291 + $0x30] sm:$0xf]
        %v306 = vld [vmem:[%s291 + $0x34] sm:$0xf]
        %v307 = vld [vmem:[%s291 + $0x38] sm:$0x1]
        %v308 = vld [vmem:[%s291 + $0x3c] sm:$0xf]
        %v309 = vld [vmem:[%s291 + $0x40] sm:$0xf]
        %v310 = vld [vmem:[%s291 + $0x44] sm:$0x1]
        %v311 = vld [vmem:[%s291 + $0x48] sm:$0xf]
        %v312 = vld [vmem:[%s291 + $0x4c] sm:$0xf]
        %v313 = vld [vmem:[%s291 + $0x50] sm:$0x1]
        %v314 = vld [vmem:[%s291 + $0x54] sm:$0xf]
        %v315 = vld [vmem:[%s291 + $0x58] sm:$0xf]
        %v316 = vld [vmem:[%s291 + $0x5c] sm:$0x1]
        %v317 = vld [vmem:[%s291 + $0x60] sm:$0xf]
        %v318 = vld [vmem:[%s291 + $0x64] sm:$0xf]
        %v319 = vld [vmem:[%s291 + $0x68] sm:$0x1]
        %v320 = vld [vmem:[%s291 + $0x6c] sm:$0xf]
        %v321 = vld [vmem:[%s291 + $0x70] sm:$0xf]
        %v322 = vld [vmem:[%s291 + $0x74] sm:$0x1]
        %v323 = vld [vmem:[%s291 + $0x78] sm:$0xf]
        %v324 = vld [vmem:[%s291 + $0x7c] sm:$0xf]
        %v325 = vld [vmem:[%s291 + $0x80] sm:$0x1]
        %v326 = vld [vmem:[%s291 + $0x84] sm:$0xf]
        %v327 = vld [vmem:[%s291 + $0x88] sm:$0xf]
        %v328 = vld [vmem:[%s291 + $0x8c] sm:$0x1]
        %v329 = vld [vmem:[%s291 + $0x90] sm:$0xf]
        %v330 = vld [vmem:[%s291 + $0x94] sm:$0xf]
        %v331 = vld [vmem:[%s291 + $0x98] sm:$0x1]
        %v332 = vld [vmem:[%s291 + $0x9c] sm:$0xf]
        %v333 = vld [vmem:[%s291 + $0xa0] sm:$0xf]
        %v334 = vld [vmem:[%s291 + $0xa4] sm:$0x1]
        %v335 = vld [vmem:[%s291 + $0xa8] sm:$0xf]
        %v336 = vld [vmem:[%s291 + $0xac] sm:$0xf]
        %v337 = vld [vmem:[%s291 + $0xb0] sm:$0x1]
        %v338 = vld [vmem:[%s291 + $0xb4] sm:$0xf]
        %v339 = vld [vmem:[%s291 + $0xb8] sm:$0xf]
        %v340 = vld [vmem:[%s291 + $0xbc] sm:$0x1]
        %v341 = vld [vmem:[%s291 + $0xc0] sm:$0xf]
        %v342 = vld [vmem:[%s291 + $0xc4] sm:$0xf]
        %v343 = vld [vmem:[%s291 + $0xc8] sm:$0x1]
        %v344 = vld [vmem:[%s291 + $0xcc] sm:$0xf]
        %v345 = vld [vmem:[%s291 + $0xd0] sm:$0xf]
        %v346 = vld [vmem:[%s291 + $0xd4] sm:$0x1]
        %v383 = vunpack.c.l.b16 %v293
        %v384 = vunpack.c.l.b16 %v294
        %v385 = vunpack.c.l.b16 %v296
        %v386 = vunpack.c.l.b16 %v297
        %v387 = vunpack.c.l.b16 %v299
        %v388 = vunpack.c.l.b16 %v300
        %v389 = vunpack.c.l.b16 %v302
        %v390 = vunpack.c.l.b16 %v303
        %v391 = vunpack.c.l.b16 %v305
        %v392 = vunpack.c.l.b16 %v306
        %v393 = vunpack.c.l.b16 %v308
        %v394 = vunpack.c.l.b16 %v309
        %v395 = vunpack.c.l.b16 %v311
        %v396 = vunpack.c.l.b16 %v312
        %v397 = vunpack.c.l.b16 %v314
        %v398 = vunpack.c.l.b16 %v315
        %v399 = vunpack.c.l.b16 %v317
        %v400 = vunpack.c.l.b16 %v318
        %v401 = vunpack.c.l.b16 %v320
        %v402 = vunpack.c.l.b16 %v321
        %v403 = vunpack.c.l.b16 %v323
        %v404 = vunpack.c.l.b16 %v324
        %v405 = vunpack.c.l.b16 %v326
        %v406 = vunpack.c.l.b16 %v327
        %v407 = vunpack.c.l.b16 %v329
        %v408 = vunpack.c.l.b16 %v330
        %v409 = vunpack.c.l.b16 %v332
        %v410 = vunpack.c.l.b16 %v333
        %v411 = vunpack.c.l.b16 %v335
        %v412 = vunpack.c.l.b16 %v336
        %v413 = vunpack.c.l.b16 %v338
        %v414 = vunpack.c.l.b16 %v339
        %v415 = vunpack.c.l.b16 %v341
        %v416 = vunpack.c.l.b16 %v342
        %v417 = vunpack.c.l.b16 %v344
        %v418 = vunpack.c.l.b16 %v345
        %v419 = vpack.c.b16 %v384, %v383
        %v420 = vpack.c.b16 %v386, %v385
        %v421 = vpack.c.b16 %v388, %v387
        %v422 = vpack.c.b16 %v390, %v389
        %v423 = vpack.c.b16 %v392, %v391
        %v424 = vpack.c.b16 %v394, %v393
        %v425 = vpack.c.b16 %v396, %v395
        %v426 = vpack.c.b16 %v398, %v397
        %v427 = vpack.c.b16 %v400, %v399
        %v428 = vpack.c.b16 %v402, %v401
        %v429 = vpack.c.b16 %v404, %v403
        %v430 = vpack.c.b16 %v406, %v405
        %v431 = vpack.c.b16 %v408, %v407
        %v432 = vpack.c.b16 %v410, %v409
        %v433 = vpack.c.b16 %v412, %v411
        %v434 = vpack.c.b16 %v414, %v413
        %v435 = vpack.c.b16 %v416, %v415
        %v436 = vpack.c.b16 %v418, %v417
        %v473 = vunpack.c.l.b16 %v295
        %v474 = vunpack.c.l.b16 %v298
        %v475 = vunpack.c.l.b16 %v301
        %v476 = vunpack.c.l.b16 %v304
        %v477 = vunpack.c.l.b16 %v307
        %v478 = vunpack.c.l.b16 %v310
        %v479 = vunpack.c.l.b16 %v313
        %v480 = vunpack.c.l.b16 %v316
        %v481 = vunpack.c.l.b16 %v319
        %v482 = vunpack.c.l.b16 %v322
        %v483 = vunpack.c.l.b16 %v325
        %v484 = vunpack.c.l.b16 %v328
        %v485 = vunpack.c.l.b16 %v331
        %v486 = vunpack.c.l.b16 %v334
        %v487 = vunpack.c.l.b16 %v337
        %v488 = vunpack.c.l.b16 %v340
        %v489 = vunpack.c.l.b16 %v343
        %v490 = vunpack.c.l.b16 %v346
        %v491 = vpack.c.b16 %v473, %v473
        %v492 = vpack.c.b16 %v474, %v474
        %v493 = vpack.c.b16 %v475, %v475
        %v494 = vpack.c.b16 %v476, %v476
        %v495 = vpack.c.b16 %v477, %v477
        %v496 = vpack.c.b16 %v478, %v478
        %v497 = vpack.c.b16 %v479, %v479
        %v498 = vpack.c.b16 %v480, %v480
        %v499 = vpack.c.b16 %v481, %v481
        %v500 = vpack.c.b16 %v482, %v482
        %v501 = vpack.c.b16 %v483, %v483
        %v502 = vpack.c.b16 %v484, %v484
        %v503 = vpack.c.b16 %v485, %v485
        %v504 = vpack.c.b16 %v486, %v486
        %v505 = vpack.c.b16 %v487, %v487
        %v506 = vpack.c.b16 %v488, %v488
        %v507 = vpack.c.b16 %v489, %v489
        %v508 = vpack.c.b16 %v490, %v490
        %vm509 = vsmask.f32 7424
        %v511 = vshrl.u32 %v419, 16
        %v513 = vshll.u32 %v419, 16
        %v515 = vrot.slane %v513, 1
        %v516 = vor.u32 %v511, %v515
        %v518 = vshll.u32 %v491, 16
        %v520 = vrot.slane %v518, 1
        %v521 = vsel %vm509, %v516, %v520
        %v523 = vshrl.u32 %v420, 16
        %v525 = vshll.u32 %v420, 16
        %v527 = vrot.slane %v525, 1
        %v528 = vor.u32 %v523, %v527
        %v530 = vshll.u32 %v492, 16
        %v532 = vrot.slane %v530, 1
        %v533 = vsel %vm509, %v528, %v532
        %v535 = vshrl.u32 %v421, 16
        %v537 = vshll.u32 %v421, 16
        %v539 = vrot.slane %v537, 1
        %v540 = vor.u32 %v535, %v539
        %v542 = vshll.u32 %v493, 16
        %v544 = vrot.slane %v542, 1
        %v545 = vsel %vm509, %v540, %v544
        %v547 = vshrl.u32 %v422, 16
        %v549 = vshll.u32 %v422, 16
        %v551 = vrot.slane %v549, 1
        %v552 = vor.u32 %v547, %v551
        %v554 = vshll.u32 %v494, 16
        %v556 = vrot.slane %v554, 1
        %v557 = vsel %vm509, %v552, %v556
        %v559 = vshrl.u32 %v423, 16
        %v561 = vshll.u32 %v423, 16
        %v563 = vrot.slane %v561, 1
        %v564 = vor.u32 %v559, %v563
        %v566 = vshll.u32 %v495, 16
        %v568 = vrot.slane %v566, 1
        %v569 = vsel %vm509, %v564, %v568
        %v571 = vshrl.u32 %v424, 16
        %v573 = vshll.u32 %v424, 16
        %v575 = vrot.slane %v573, 1
        %v576 = vor.u32 %v571, %v575
        %v578 = vshll.u32 %v496, 16
        %v580 = vrot.slane %v578, 1
        %v581 = vsel %vm509, %v576, %v580
        %v583 = vshrl.u32 %v425, 16
        %v585 = vshll.u32 %v425, 16
        %v587 = vrot.slane %v585, 1
        %v588 = vor.u32 %v583, %v587
        %v590 = vshll.u32 %v497, 16
        %v592 = vrot.slane %v590, 1
        %v593 = vsel %vm509, %v588, %v592
        %v595 = vshrl.u32 %v426, 16
        %v597 = vshll.u32 %v426, 16
        %v599 = vrot.slane %v597, 1
        %v600 = vor.u32 %v595, %v599
        %v602 = vshll.u32 %v498, 16
        %v604 = vrot.slane %v602, 1
        %v605 = vsel %vm509, %v600, %v604
        %v607 = vshrl.u32 %v427, 16
        %v609 = vshll.u32 %v427, 16
        %v611 = vrot.slane %v609, 1
        %v612 = vor.u32 %v607, %v611
        %v614 = vshll.u32 %v499, 16
        %v616 = vrot.slane %v614, 1
        %v617 = vsel %vm509, %v612, %v616
        %v619 = vshrl.u32 %v428, 16
        %v621 = vshll.u32 %v428, 16
        %v623 = vrot.slane %v621, 1
        %v624 = vor.u32 %v619, %v623
        %v626 = vshll.u32 %v500, 16
        %v628 = vrot.slane %v626, 1
        %v629 = vsel %vm509, %v624, %v628
        %v631 = vshrl.u32 %v429, 16
        %v633 = vshll.u32 %v429, 16
        %v635 = vrot.slane %v633, 1
        %v636 = vor.u32 %v631, %v635
        %v638 = vshll.u32 %v501, 16
        %v640 = vrot.slane %v638, 1
        %v641 = vsel %vm509, %v636, %v640
        %v643 = vshrl.u32 %v430, 16
        %v645 = vshll.u32 %v430, 16
        %v647 = vrot.slane %v645, 1
        %v648 = vor.u32 %v643, %v647
        %v650 = vshll.u32 %v502, 16
        %v652 = vrot.slane %v650, 1
        %v653 = vsel %vm509, %v648, %v652
        %v655 = vshrl.u32 %v431, 16
        %v657 = vshll.u32 %v431, 16
        %v659 = vrot.slane %v657, 1
        %v660 = vor.u32 %v655, %v659
        %v662 = vshll.u32 %v503, 16
        %v664 = vrot.slane %v662, 1
        %v665 = vsel %vm509, %v660, %v664
        %v667 = vshrl.u32 %v432, 16
        %v669 = vshll.u32 %v432, 16
        %v671 = vrot.slane %v669, 1
        %v672 = vor.u32 %v667, %v671
        %v674 = vshll.u32 %v504, 16
        %v676 = vrot.slane %v674, 1
        %v677 = vsel %vm509, %v672, %v676
        %v679 = vshrl.u32 %v433, 16
        %v681 = vshll.u32 %v433, 16
        %v683 = vrot.slane %v681, 1
        %v684 = vor.u32 %v679, %v683
        %v686 = vshll.u32 %v505, 16
        %v688 = vrot.slane %v686, 1
        %v689 = vsel %vm509, %v684, %v688
        %v691 = vshrl.u32 %v434, 16
        %v693 = vshll.u32 %v434, 16
        %v695 = vrot.slane %v693, 1
        %v696 = vor.u32 %v691, %v695
        %v698 = vshll.u32 %v506, 16
        %v700 = vrot.slane %v698, 1
        %v701 = vsel %vm509, %v696, %v700
        %v703 = vshrl.u32 %v435, 16
        %v705 = vshll.u32 %v435, 16
        %v707 = vrot.slane %v705, 1
        %v708 = vor.u32 %v703, %v707
        %v710 = vshll.u32 %v507, 16
        %v712 = vrot.slane %v710, 1
        %v713 = vsel %vm509, %v708, %v712
        %v715 = vshrl.u32 %v436, 16
        %v717 = vshll.u32 %v436, 16
        %v719 = vrot.slane %v717, 1
        %v720 = vor.u32 %v715, %v719
        %v722 = vshll.u32 %v508, 16
        %v724 = vrot.slane %v722, 1
        %v725 = vsel %vm509, %v720, %v724
        %vm744 = vcmask 1046528
        %v745 = vrot.slane %v419, 1
        %v746 = vrot.slane %v491, 1
        %v747 = vsel %vm744, %v745, %v746
        %v748 = vrot.slane %v420, 1
        %v749 = vrot.slane %v492, 1
        %v750 = vsel %vm744, %v748, %v749
        %v751 = vrot.slane %v421, 1
        %v752 = vrot.slane %v493, 1
        %v753 = vsel %vm744, %v751, %v752
        %v754 = vrot.slane %v422, 1
        %v755 = vrot.slane %v494, 1
        %v756 = vsel %vm744, %v754, %v755
        %v757 = vrot.slane %v423, 1
        %v758 = vrot.slane %v495, 1
        %v759 = vsel %vm744, %v757, %v758
        %v760 = vrot.slane %v424, 1
        %v761 = vrot.slane %v496, 1
        %v762 = vsel %vm744, %v760, %v761
        %v763 = vrot.slane %v425, 1
        %v764 = vrot.slane %v497, 1
        %v765 = vsel %vm744, %v763, %v764
        %v766 = vrot.slane %v426, 1
        %v767 = vrot.slane %v498, 1
        %v768 = vsel %vm744, %v766, %v767
        %v769 = vrot.slane %v427, 1
        %v770 = vrot.slane %v499, 1
        %v771 = vsel %vm744, %v769, %v770
        %v772 = vrot.slane %v428, 1
        %v773 = vrot.slane %v500, 1
        %v774 = vsel %vm744, %v772, %v773
        %v775 = vrot.slane %v429, 1
        %v776 = vrot.slane %v501, 1
        %v777 = vsel %vm744, %v775, %v776
        %v778 = vrot.slane %v430, 1
        %v779 = vrot.slane %v502, 1
        %v780 = vsel %vm744, %v778, %v779
        %v781 = vrot.slane %v431, 1
        %v782 = vrot.slane %v503, 1
        %v783 = vsel %vm744, %v781, %v782
        %v784 = vrot.slane %v432, 1
        %v785 = vrot.slane %v504, 1
        %v786 = vsel %vm744, %v784, %v785
        %v787 = vrot.slane %v433, 1
        %v788 = vrot.slane %v505, 1
        %v789 = vsel %vm744, %v787, %v788
        %v790 = vrot.slane %v434, 1
        %v791 = vrot.slane %v506, 1
        %v792 = vsel %vm744, %v790, %v791
        %v793 = vrot.slane %v435, 1
        %v794 = vrot.slane %v507, 1
        %v795 = vsel %vm744, %v793, %v794
        %v796 = vrot.slane %v436, 1
        %v797 = vrot.slane %v508, 1
        %v798 = vsel %vm744, %v796, %v797
        %v817 = vld [vmem:[%s1] sm:$0xf]
        %v818 = vld [vmem:[%s1 + $0x4] sm:$0xf]
        %v819 = vld [vmem:[%s1 + $0x8] sm:$0xf]
        %v820 = vld [vmem:[%s1 + $0xc] sm:$0xf]
        %v821 = vld [vmem:[%s1 + $0x10] sm:$0xf]
        %v822 = vld [vmem:[%s1 + $0x14] sm:$0xf]
        %v823 = vld [vmem:[%s1 + $0x18] sm:$0xf]
        %v824 = vld [vmem:[%s1 + $0x1c] sm:$0xf]
        %v825 = vld [vmem:[%s1 + $0x20] sm:$0xf]
        %v826 = vld [vmem:[%s1 + $0x24] sm:$0xf]
        %v827 = vld [vmem:[%s1 + $0x28] sm:$0xf]
        %v828 = vld [vmem:[%s1 + $0x2c] sm:$0xf]
        %v829 = vld [vmem:[%s1 + $0x30] sm:$0xf]
        %v830 = vld [vmem:[%s1 + $0x34] sm:$0xf]
        %v831 = vld [vmem:[%s1 + $0x38] sm:$0xf]
        %v832 = vld [vmem:[%s1 + $0x3c] sm:$0xf]
        %v833 = vld [vmem:[%s1 + $0x40] sm:$0xf]
        %v834 = vld [vmem:[%s1 + $0x44] sm:$0xf]
        %v835 = vld [vmem:[%s1 + $0x48] sm:$0xf]
        %v836 = vld [vmem:[%s1 + $0x4c] sm:$0xf]
        %v837 = vld [vmem:[%s1 + $0x50] sm:$0xf]
        %v838 = vld [vmem:[%s1 + $0x54] sm:$0xf]
        %v839 = vld [vmem:[%s1 + $0x58] sm:$0xf]
        %v840 = vld [vmem:[%s1 + $0x5c] sm:$0xf]
        %v841 = vld [vmem:[%s1 + $0x60] sm:$0xf]
        %v842 = vld [vmem:[%s1 + $0x64] sm:$0xf]
        %v843 = vld [vmem:[%s1 + $0x68] sm:$0xf]
        %v844 = vld [vmem:[%s1 + $0x6c] sm:$0xf]
        %v845 = vld [vmem:[%s1 + $0x70] sm:$0xf]
        %v846 = vld [vmem:[%s1 + $0x74] sm:$0xf]
        %v847 = vld [vmem:[%s1 + $0x78] sm:$0xf]
        %v848 = vld [vmem:[%s1 + $0x7c] sm:$0xf]
        %v849 = vld [vmem:[%s1 + $0x80] sm:$0xf]
        %v850 = vld [vmem:[%s1 + $0x84] sm:$0xf]
        %v851 = vld [vmem:[%s1 + $0x88] sm:$0xf]
        %v852 = vld [vmem:[%s1 + $0x8c] sm:$0xf]
        %v853 = vld [vmem:[%s1 + $0x90] sm:$0xf]
        %v854 = vld [vmem:[%s1 + $0x94] sm:$0xf]
        %v855 = vld [vmem:[%s1 + $0x98] sm:$0xf]
        %v856 = vld [vmem:[%s1 + $0x9c] sm:$0xf]
        %v857 = vld [vmem:[%s1 + $0xa0] sm:$0xf]
        %v858 = vld [vmem:[%s1 + $0xa4] sm:$0xf]
        %v859 = vld [vmem:[%s1 + $0xa8] sm:$0xf]
        %v860 = vld [vmem:[%s1 + $0xac] sm:$0xf]
        %v861 = vld [vmem:[%s1 + $0xb0] sm:$0xf]
        %v862 = vld [vmem:[%s1 + $0xb4] sm:$0xf]
        %v863 = vld [vmem:[%s1 + $0xb8] sm:$0xf]
        %v864 = vld [vmem:[%s1 + $0xbc] sm:$0xf]
        %s865 = scalar_lea.vmem %s1, 192
        %v866 = vld [vmem:[%s865] sm:$0xf]
        %v867 = vld [vmem:[%s865 + $0x4] sm:$0xf]
        %v868 = vld [vmem:[%s865 + $0x8] sm:$0xf]
        %v869 = vld [vmem:[%s865 + $0xc] sm:$0xf]
        %v870 = vld [vmem:[%s865 + $0x10] sm:$0xf]
        %v871 = vld [vmem:[%s865 + $0x14] sm:$0xf]
        %v872 = vld [vmem:[%s865 + $0x18] sm:$0xf]
        %v873 = vld [vmem:[%s865 + $0x1c] sm:$0xf]
        %v874 = vld [vmem:[%s865 + $0x20] sm:$0xf]
        %v875 = vld [vmem:[%s865 + $0x24] sm:$0xf]
        %v876 = vld [vmem:[%s865 + $0x28] sm:$0xf]
        %v877 = vld [vmem:[%s865 + $0x2c] sm:$0xf]
        %v878 = vld [vmem:[%s865 + $0x30] sm:$0xf]
        %v879 = vld [vmem:[%s865 + $0x34] sm:$0xf]
        %v880 = vld [vmem:[%s865 + $0x38] sm:$0xf]
        %v881 = vld [vmem:[%s865 + $0x3c] sm:$0xf]
        %v882 = vld [vmem:[%s865 + $0x40] sm:$0xf]
        %v883 = vld [vmem:[%s865 + $0x44] sm:$0xf]
        %v884 = vld [vmem:[%s865 + $0x48] sm:$0xf]
        %v885 = vld [vmem:[%s865 + $0x4c] sm:$0xf]
        %v886 = vld [vmem:[%s865 + $0x50] sm:$0xf]
        %v887 = vld [vmem:[%s865 + $0x54] sm:$0xf]
        %v888 = vld [vmem:[%s865 + $0x58] sm:$0xf]
        %v889 = vld [vmem:[%s865 + $0x5c] sm:$0xf]
        %v890 = vld [vmem:[%s865 + $0x60] sm:$0xf]
        %v891 = vld [vmem:[%s865 + $0x64] sm:$0xf]
        %v892 = vld [vmem:[%s865 + $0x68] sm:$0xf]
        %v893 = vld [vmem:[%s865 + $0x6c] sm:$0xf]
        %v894 = vld [vmem:[%s865 + $0x70] sm:$0xf]
        %v895 = vld [vmem:[%s865 + $0x74] sm:$0xf]
        %v896 = vld [vmem:[%s865 + $0x78] sm:$0xf]
        %v897 = vld [vmem:[%s865 + $0x7c] sm:$0xf]
        %v898 = vld [vmem:[%s865 + $0x80] sm:$0xf]
        %v899 = vld [vmem:[%s865 + $0x84] sm:$0xf]
        %v900 = vld [vmem:[%s865 + $0x88] sm:$0xf]
        %v901 = vld [vmem:[%s865 + $0x8c] sm:$0xf]
        %v902 = vld [vmem:[%s865 + $0x90] sm:$0xf]
        %v903 = vld [vmem:[%s865 + $0x94] sm:$0xf]
        %v904 = vld [vmem:[%s865 + $0x98] sm:$0xf]
        %v905 = vld [vmem:[%s865 + $0x9c] sm:$0xf]
        %v906 = vld [vmem:[%s865 + $0xa0] sm:$0xf]
        %v907 = vld [vmem:[%s865 + $0xa4] sm:$0xf]
        %v908 = vld [vmem:[%s865 + $0xa8] sm:$0xf]
        %v909 = vld [vmem:[%s865 + $0xac] sm:$0xf]
        %v910 = vld [vmem:[%s865 + $0xb0] sm:$0xf]
        %v911 = vld [vmem:[%s865 + $0xb4] sm:$0xf]
        %v912 = vld [vmem:[%s865 + $0xb8] sm:$0xf]
        %v913 = vld [vmem:[%s865 + $0xbc] sm:$0xf]
        %v962 = vunpack.c.l.b16 %v866
        %v963 = vunpack.c.l.b16 %v867
        %v964 = vunpack.c.l.b16 %v868
        %v965 = vunpack.c.l.b16 %v869
        %v966 = vunpack.c.l.b16 %v870
        %v967 = vunpack.c.l.b16 %v871
        %v968 = vunpack.c.l.b16 %v872
        %v969 = vunpack.c.l.b16 %v873
        %v970 = vunpack.c.l.b16 %v874
        %v971 = vunpack.c.l.b16 %v875
        %v972 = vunpack.c.l.b16 %v876
        %v973 = vunpack.c.l.b16 %v877
        %v974 = vunpack.c.l.b16 %v878
        %v975 = vunpack.c.l.b16 %v879
        %v976 = vunpack.c.l.b16 %v880
        %v977 = vunpack.c.l.b16 %v881
        %v978 = vunpack.c.l.b16 %v882
        %v979 = vunpack.c.l.b16 %v883
        %v980 = vunpack.c.l.b16 %v884
        %v981 = vunpack.c.l.b16 %v885
        %v982 = vunpack.c.l.b16 %v886
        %v983 = vunpack.c.l.b16 %v887
        %v984 = vunpack.c.l.b16 %v888
        %v985 = vunpack.c.l.b16 %v889
        %v986 = vunpack.c.l.b16 %v890
        %v987 = vunpack.c.l.b16 %v891
        %v988 = vunpack.c.l.b16 %v892
        %v989 = vunpack.c.l.b16 %v893
        %v990 = vunpack.c.l.b16 %v894
        %v991 = vunpack.c.l.b16 %v895
        %v992 = vunpack.c.l.b16 %v896
        %v993 = vunpack.c.l.b16 %v897
        %v994 = vunpack.c.l.b16 %v898
        %v995 = vunpack.c.l.b16 %v899
        %v996 = vunpack.c.l.b16 %v900
        %v997 = vunpack.c.l.b16 %v901
        %v998 = vunpack.c.l.b16 %v902
        %v999 = vunpack.c.l.b16 %v903
        %v1000 = vunpack.c.l.b16 %v904
        %v1001 = vunpack.c.l.b16 %v905
        %v1002 = vunpack.c.l.b16 %v906
        %v1003 = vunpack.c.l.b16 %v907
        %v1004 = vunpack.c.l.b16 %v908
        %v1005 = vunpack.c.l.b16 %v909
        %v1006 = vunpack.c.l.b16 %v910
        %v1007 = vunpack.c.l.b16 %v911
        %v1008 = vunpack.c.l.b16 %v912
        %v1009 = vunpack.c.l.b16 %v913
        %v1010 = vpack.c.b16 %v963, %v962
        %v1011 = vpack.c.b16 %v965, %v964
        %v1012 = vpack.c.b16 %v967, %v966
        %v1013 = vpack.c.b16 %v969, %v968
        %v1014 = vpack.c.b16 %v971, %v970
        %v1015 = vpack.c.b16 %v973, %v972
        %v1016 = vpack.c.b16 %v975, %v974
        %v1017 = vpack.c.b16 %v977, %v976
        %v1018 = vpack.c.b16 %v979, %v978
        %v1019 = vpack.c.b16 %v981, %v980
        %v1020 = vpack.c.b16 %v983, %v982
        %v1021 = vpack.c.b16 %v985, %v984
        %v1022 = vpack.c.b16 %v987, %v986
        %v1023 = vpack.c.b16 %v989, %v988
        %v1024 = vpack.c.b16 %v991, %v990
        %v1025 = vpack.c.b16 %v993, %v992
        %v1026 = vpack.c.b16 %v995, %v994
        %v1027 = vpack.c.b16 %v997, %v996
        %v1028 = vpack.c.b16 %v999, %v998
        %v1029 = vpack.c.b16 %v1001, %v1000
        %v1030 = vpack.c.b16 %v1003, %v1002
        %v1031 = vpack.c.b16 %v1005, %v1004
        %v1032 = vpack.c.b16 %v1007, %v1006
        %v1033 = vpack.c.b16 %v1009, %v1008
        %1058 = vmatprep.subr.bf16.mxu0 0
        %1059 = vmatpush1.bf16.msra.mxu0 %v1010
        %1060 = vmatprep.subr.bf16.mxu0 0
        %1061 = vmatpush1.bf16.msra.mxu0 %v1011
        %1062 = vmatprep.subr.bf16.mxu0 0
        %1063 = vmatpush1.bf16.msra.mxu0 %v1012
        %1064 = vmatprep.subr.bf16.mxu0 0
        %1065 = vmatpush1.bf16.msra.mxu0 %v1013
        %1066 = vmatprep.subr.bf16.mxu0 0
        %1067 = vmatpush1.bf16.msra.mxu0 %v1014
        %1068 = vmatprep.subr.bf16.mxu0 0
        %1069 = vmatpush1.bf16.msra.mxu0 %v1015
        %1070 = vmatprep.subr.bf16.mxu0 0
        %1071 = vmatpush1.bf16.msra.mxu0 %v1016
        %1072 = vmatprep.subr.bf16.mxu0 0
        %1073 = vmatpush1.bf16.msra.mxu0 %v1017
        %1074 = vmatprep.subr.bf16.mxu0 0
        %1075 = vmatpush1.bf16.msra.mxu0 %v1018
        %1076 = vmatprep.subr.bf16.mxu0 0
        %1077 = vmatpush1.bf16.msra.mxu0 %v1019
        %1078 = vmatprep.subr.bf16.mxu0 0
        %1079 = vmatpush1.bf16.msra.mxu0 %v1020
        %1080 = vmatprep.subr.bf16.mxu0 0
        %1081 = vmatpush1.bf16.msra.mxu0 %v1021
        %1082 = vmatprep.subr.bf16.mxu0 0
        %1083 = vmatpush1.bf16.msra.mxu0 %v1022
        %1084 = vmatprep.subr.bf16.mxu0 0
        %1085 = vmatpush1.bf16.msra.mxu0 %v1023
        %1086 = vmatprep.subr.bf16.mxu0 0
        %1087 = vmatpush1.bf16.msra.mxu0 %v1024
        %1088 = vmatprep.subr.bf16.mxu0 0
        %1089 = vmatpush1.bf16.msra.mxu0 %v1025
        %1090 = vmatprep.mubr.bf16.mxu0 %v533
        %1091 = vmatmul.mubr.bf16.gmra.mrb[0].mxu0 %v420
        %v1092 = vpop.f32.mrb[0].mxu0
        %v1093 = vadd.f32 0.0, %v1092
        %v1094 = vpop.f32.mrb[0].mxu0
        %v1095 = vpop.f32.mrb[0].mxu0
        %v1096 = vadd.f32 0.0, %v1095
        %v1097 = vpop.f32.mrb[0].mxu0
        %1098 = vmatprep.mubr.bf16.mxu0 %v545
        %1099 = vmatmul.mubr.bf16.gmra.mrb[0].mxu0 %v421
        %v1100 = vpop.f32.mrb[0].mxu0
        %v1101 = vadd.f32 0.0, %v1100
        %v1102 = vpop.f32.mrb[0].mxu0
        %v1103 = vpop.f32.mrb[0].mxu0
        %v1104 = vadd.f32 0.0, %v1103
        %v1105 = vpop.f32.mrb[0].mxu0
        %1106 = vmatprep.mubr.bf16.mxu0 %v557
        %1107 = vmatmul.mubr.bf16.gmra.mrb[0].mxu0 %v422
        %v1108 = vpop.f32.mrb[0].mxu0
        %v1109 = vadd.f32 0.0, %v1108
        %v1110 = vpop.f32.mrb[0].mxu0
        %v1111 = vpop.f32.mrb[0].mxu0
        %v1112 = vadd.f32 0.0, %v1111
        %v1113 = vpop.f32.mrb[0].mxu0
        %1114 = vmatprep.mubr.bf16.mxu0 %v569
        %1115 = vmatmul.mubr.bf16.gmra.mrb[0].mxu0 %v423
        %v1116 = vpop.f32.mrb[0].mxu0
        %v1117 = vadd.f32 0.0, %v1116
        %v1118 = vpop.f32.mrb[0].mxu0
        %v1119 = vpop.f32.mrb[0].mxu0
        %v1120 = vadd.f32 0.0, %v1119
        %v1121 = vpop.f32.mrb[0].mxu0
        %1122 = vmatprep.mubr.bf16.mxu0 %v581
        %1123 = vmatmul.mubr.bf16.gmra.mrb[0].mxu0 %v424
        %v1124 = vpop.f32.mrb[0].mxu0
        %v1125 = vadd.f32 0.0, %v1124
        %v1126 = vpop.f32.mrb[0].mxu0
        %v1127 = vpop.f32.mrb[0].mxu0
        %v1128 = vadd.f32 0.0, %v1127
        %v1129 = vpop.f32.mrb[0].mxu0
        %1130 = vmatprep.mubr.bf16.mxu0 %v593
        %1131 = vmatmul.mubr.bf16.gmra.mrb[0].mxu0 %v425
        %v1132 = vpop.f32.mrb[0].mxu0
        %v1133 = vadd.f32 0.0, %v1132
        %v1134 = vpop.f32.mrb[0].mxu0
        %v1135 = vpop.f32.mrb[0].mxu0
        %v1136 = vadd.f32 0.0, %v1135
        %v1137 = vpop.f32.mrb[0].mxu0
        %1138 = vmatprep.mubr.bf16.mxu0 %v605
        %1139 = vmatmul.mubr.bf16.gmra.mrb[0].mxu0 %v426
        %v1140 = vpop.f32.mrb[0].mxu0
        %v1141 = vadd.f32 0.0, %v1140
        %v1142 = vpop.f32.mrb[0].mxu0
        %v1143 = vpop.f32.mrb[0].mxu0
        %v1144 = vadd.f32 0.0, %v1143
        %v1145 = vpop.f32.mrb[0].mxu0
        %1146 = vmatprep.mubr.bf16.mxu0 %v617
        %1147 = vmatmul.mubr.bf16.gmra.mrb[0].mxu0 %v427
        %v1148 = vpop.f32.mrb[0].mxu0
        %v1149 = vadd.f32 0.0, %v1148
        %v1150 = vpop.f32.mrb[0].mxu0
        %v1151 = vpop.f32.mrb[0].mxu0
        %v1152 = vadd.f32 0.0, %v1151
        %v1153 = vpop.f32.mrb[0].mxu0
        %1154 = vmatprep.mubr.bf16.mxu0 %v629
        %1155 = vmatmul.mubr.bf16.gmra.mrb[0].mxu0 %v428
        %v1156 = vpop.f32.mrb[0].mxu0
        %v1157 = vadd.f32 0.0, %v1156
        %v1158 = vpop.f32.mrb[0].mxu0
        %v1159 = vpop.f32.mrb[0].mxu0
        %v1160 = vadd.f32 0.0, %v1159
        %v1161 = vpop.f32.mrb[0].mxu0
        %1162 = vmatprep.mubr.bf16.mxu0 %v641
        %1163 = vmatmul.mubr.bf16.gmra.mrb[0].mxu0 %v429
        %v1164 = vpop.f32.mrb[0].mxu0
        %v1165 = vadd.f32 0.0, %v1164
        %v1166 = vpop.f32.mrb[0].mxu0
        %v1167 = vpop.f32.mrb[0].mxu0
        %v1168 = vadd.f32 0.0, %v1167
        %v1169 = vpop.f32.mrb[0].mxu0
        %1170 = vmatprep.mubr.bf16.mxu0 %v653
        %1171 = vmatmul.mubr.bf16.gmra.mrb[0].mxu0 %v430
        %v1172 = vpop.f32.mrb[0].mxu0
        %v1173 = vadd.f32 0.0, %v1172
        %v1174 = vpop.f32.mrb[0].mxu0
        %v1175 = vpop.f32.mrb[0].mxu0
        %v1176 = vadd.f32 0.0, %v1175
        %v1177 = vpop.f32.mrb[0].mxu0
        %1178 = vmatprep.mubr.bf16.mxu0 %v665
        %1179 = vmatmul.mubr.bf16.gmra.mrb[0].mxu0 %v431
        %v1180 = vpop.f32.mrb[0].mxu0
        %v1181 = vadd.f32 0.0, %v1180
        %v1182 = vpop.f32.mrb[0].mxu0
        %v1183 = vpop.f32.mrb[0].mxu0
        %v1184 = vadd.f32 0.0, %v1183
        %v1185 = vpop.f32.mrb[0].mxu0
        %1186 = vmatprep.mubr.bf16.mxu0 %v677
        %1187 = vmatmul.mubr.bf16.gmra.mrb[0].mxu0 %v432
        %v1188 = vpop.f32.mrb[0].mxu0
        %v1189 = vadd.f32 0.0, %v1188
        %v1190 = vpop.f32.mrb[0].mxu0
        %v1191 = vpop.f32.mrb[0].mxu0
        %v1192 = vadd.f32 0.0, %v1191
        %v1193 = vpop.f32.mrb[0].mxu0
        %1194 = vmatprep.mubr.bf16.mxu0 %v689
        %1195 = vmatmul.mubr.bf16.gmra.mrb[0].mxu0 %v433
        %v1196 = vpop.f32.mrb[0].mxu0
        %v1197 = vadd.f32 0.0, %v1196
        %v1198 = vpop.f32.mrb[0].mxu0
        %v1199 = vpop.f32.mrb[0].mxu0
        %v1200 = vadd.f32 0.0, %v1199
        %v1201 = vpop.f32.mrb[0].mxu0
        %1202 = vmatprep.mubr.bf16.mxu0 %v701
        %1203 = vmatmul.mubr.bf16.gmra.mrb[0].mxu0 %v434
        %v1204 = vpop.f32.mrb[0].mxu0
        %v1205 = vadd.f32 0.0, %v1204
        %v1206 = vpop.f32.mrb[0].mxu0
        %v1207 = vpop.f32.mrb[0].mxu0
        %v1208 = vadd.f32 0.0, %v1207
        %v1209 = vpop.f32.mrb[0].mxu0
        %1210 = vmatprep.mubr.bf16.mxu0 %v713
        %1211 = vmatmul.mubr.bf16.gmra.mrb[0].mxu0 %v435
        %v1212 = vpop.f32.mrb[0].mxu0
        %v1213 = vadd.f32 0.0, %v1212
        %v1214 = vpop.f32.mrb[0].mxu0
        %v1215 = vpop.f32.mrb[0].mxu0
        %v1216 = vadd.f32 0.0, %v1215
        %v1217 = vpop.f32.mrb[0].mxu0
        %1218 = vdwg.mxu0
        %1219 = vmatprep.subr.bf16.mxu0 0
        %1220 = vmatpush1.bf16.msra.mxu0 %v1026
        %1221 = vmatprep.subr.bf16.mxu0 0
        %1222 = vmatpush1.bf16.msra.mxu0 %v1027
        %1223 = vmatprep.subr.bf16.mxu0 0
        %1224 = vmatpush1.bf16.msra.mxu0 %v1028
        %1225 = vmatprep.subr.bf16.mxu0 0
        %1226 = vmatpush1.bf16.msra.mxu0 %v1029
        %1227 = vmatprep.subr.bf16.mxu0 0
        %1228 = vmatpush1.bf16.msra.mxu0 %v1030
        %1229 = vmatprep.subr.bf16.mxu0 0
        %1230 = vmatpush1.bf16.msra.mxu0 %v1031
        %1231 = vmatprep.subr.bf16.mxu0 0
        %1232 = vmatpush1.bf16.msra.mxu0 %v1032
        %1233 = vmatprep.subr.bf16.mxu0 0
        %1234 = vmatpush1.bf16.msra.mxu0 %v1033
        %1235 = vmatprep.subr.bf16.mxu0 0
        %1236 = vmatpush1.bf16.msra.mxu0 0
        %1237 = vmatprep.subr.bf16.mxu0 0
        %1238 = vmatpush1.bf16.msra.mxu0 0
        %1239 = vmatprep.subr.bf16.mxu0 0
        %1240 = vmatpush1.bf16.msra.mxu0 0
        %1241 = vmatprep.subr.bf16.mxu0 0
        %1242 = vmatpush1.bf16.msra.mxu0 0
        %1243 = vmatprep.subr.bf16.mxu0 0
        %1244 = vmatpush1.bf16.msra.mxu0 0
        %1245 = vmatprep.subr.bf16.mxu0 0
        %1246 = vmatpush1.bf16.msra.mxu0 0
        %1247 = vmatprep.subr.bf16.mxu0 0
        %1248 = vmatpush1.bf16.msra.mxu0 0
        %1249 = vmatprep.subr.bf16.mxu0 0
        %1250 = vmatpush1.bf16.msra.mxu0 0
        %1251 = vmatprep.mubr.bf16.mxu0 0
        %1252 = vmatmul.mubr.bf16.gmra.mrb[0].mxu0 %v750
        %v1253 = vpop.f32.mrb[0].mxu0
        %v1254 = vadd.f32 %v1093, %v1253
        %v1255 = vpop.f32.mrb[0].mxu0
        %v1256 = vpop.f32.mrb[0].mxu0
        %v1257 = vadd.f32 %v1096, %v1256
        %v1258 = vpop.f32.mrb[0].mxu0
        %1259 = vmatprep.mubr.bf16.mxu0 0
        %1260 = vmatmul.mubr.bf16.gmra.mrb[0].mxu0 %v753
        %v1261 = vpop.f32.mrb[0].mxu0
        %v1262 = vadd.f32 %v1101, %v1261
        %v1263 = vpop.f32.mrb[0].mxu0
        %v1264 = vpop.f32.mrb[0].mxu0
        %v1265 = vadd.f32 %v1104, %v1264
        %v1266 = vpop.f32.mrb[0].mxu0
        %1267 = vmatprep.mubr.bf16.mxu0 0
        %1268 = vmatmul.mubr.bf16.gmra.mrb[0].mxu0 %v756
        %v1269 = vpop.f32.mrb[0].mxu0
        %v1270 = vadd.f32 %v1109, %v1269
        %v1271 = vpop.f32.mrb[0].mxu0
        %v1272 = vpop.f32.mrb[0].mxu0
        %v1273 = vadd.f32 %v1112, %v1272
        %v1274 = vpop.f32.mrb[0].mxu0
        %1275 = vmatprep.mubr.bf16.mxu0 0
        %1276 = vmatmul.mubr.bf16.gmra.mrb[0].mxu0 %v759
        %v1277 = vpop.f32.mrb[0].mxu0
        %v1278 = vadd.f32 %v1117, %v1277
        %v1279 = vpop.f32.mrb[0].mxu0
        %v1280 = vpop.f32.mrb[0].mxu0
        %v1281 = vadd.f32 %v1120, %v1280
        %v1282 = vpop.f32.mrb[0].mxu0
        %1283 = vmatprep.mubr.bf16.mxu0 0
        %1284 = vmatmul.mubr.bf16.gmra.mrb[0].mxu0 %v762
        %v1285 = vpop.f32.mrb[0].mxu0
        %v1286 = vadd.f32 %v1125, %v1285
        %v1287 = vpop.f32.mrb[0].mxu0
        %v1288 = vpop.f32.mrb[0].mxu0
        %v1289 = vadd.f32 %v1128, %v1288
        %v1290 = vpop.f32.mrb[0].mxu0
        %1291 = vmatprep.mubr.bf16.mxu0 0
        %1292 = vmatmul.mubr.bf16.gmra.mrb[0].mxu0 %v765
        %v1293 = vpop.f32.mrb[0].mxu0
        %v1294 = vadd.f32 %v1133, %v1293
        %v1295 = vpop.f32.mrb[0].mxu0
        %v1296 = vpop.f32.mrb[0].mxu0
        %v1297 = vadd.f32 %v1136, %v1296
        %v1298 = vpop.f32.mrb[0].mxu0
        %1299 = vmatprep.mubr.bf16.mxu0 0
        %1300 = vmatmul.mubr.bf16.gmra.mrb[0].mxu0 %v768
        %v1301 = vpop.f32.mrb[0].mxu0
        %v1302 = vadd.f32 %v1141, %v1301
        %v1303 = vpop.f32.mrb[0].mxu0
        %v1304 = vpop.f32.mrb[0].mxu0
        %v1305 = vadd.f32 %v1144, %v1304
        %v1306 = vpop.f32.mrb[0].mxu0
        %1307 = vmatprep.mubr.bf16.mxu0 0
        %1308 = vmatmul.mubr.bf16.gmra.mrb[0].mxu0 %v771
        %v1309 = vpop.f32.mrb[0].mxu0
        %v1310 = vadd.f32 %v1149, %v1309
        %v1311 = vpop.f32.mrb[0].mxu0
        %v1312 = vpop.f32.mrb[0].mxu0
        %v1313 = vadd.f32 %v1152, %v1312
        %v1314 = vpop.f32.mrb[0].mxu0
        %1315 = vmatprep.mubr.bf16.mxu0 0
        %1316 = vmatmul.mubr.bf16.gmra.mrb[0].mxu0 %v774
        %v1317 = vpop.f32.mrb[0].mxu0
        %v1318 = vadd.f32 %v1157, %v1317
        %v1319 = vpop.f32.mrb[0].mxu0
        %v1320 = vpop.f32.mrb[0].mxu0
        %v1321 = vadd.f32 %v1160, %v1320
        %v1322 = vpop.f32.mrb[0].mxu0
        %1323 = vmatprep.mubr.bf16.mxu0 0
        %1324 = vmatmul.mubr.bf16.gmra.mrb[0].mxu0 %v777
        %v1325 = vpop.f32.mrb[0].mxu0
        %v1326 = vadd.f32 %v1165, %v1325
        %v1327 = vpop.f32.mrb[0].mxu0
        %v1328 = vpop.f32.mrb[0].mxu0
        %v1329 = vadd.f32 %v1168, %v1328
        %v1330 = vpop.f32.mrb[0].mxu0
        %1331 = vmatprep.mubr.bf16.mxu0 0
        %1332 = vmatmul.mubr.bf16.gmra.mrb[0].mxu0 %v780
        %v1333 = vpop.f32.mrb[0].mxu0
        %v1334 = vadd.f32 %v1173, %v1333
        %v1335 = vpop.f32.mrb[0].mxu0
        %v1336 = vpop.f32.mrb[0].mxu0
        %v1337 = vadd.f32 %v1176, %v1336
        %v1338 = vpop.f32.mrb[0].mxu0
        %1339 = vmatprep.mubr.bf16.mxu0 0
        %1340 = vmatmul.mubr.bf16.gmra.mrb[0].mxu0 %v783
        %v1341 = vpop.f32.mrb[0].mxu0
        %v1342 = vadd.f32 %v1181, %v1341
        %v1343 = vpop.f32.mrb[0].mxu0
        %v1344 = vpop.f32.mrb[0].mxu0
        %v1345 = vadd.f32 %v1184, %v1344
        %v1346 = vpop.f32.mrb[0].mxu0
        %1347 = vmatprep.mubr.bf16.mxu0 0
        %1348 = vmatmul.mubr.bf16.gmra.mrb[0].mxu0 %v786
        %v1349 = vpop.f32.mrb[0].mxu0
        %v1350 = vadd.f32 %v1189, %v1349
        %v1351 = vpop.f32.mrb[0].mxu0
        %v1352 = vpop.f32.mrb[0].mxu0
        %v1353 = vadd.f32 %v1192, %v1352
        %v1354 = vpop.f32.mrb[0].mxu0
        %1355 = vmatprep.mubr.bf16.mxu0 0
        %1356 = vmatmul.mubr.bf16.gmra.mrb[0].mxu0 %v789
        %v1357 = vpop.f32.mrb[0].mxu0
        %v1358 = vadd.f32 %v1197, %v1357
        %v1359 = vpop.f32.mrb[0].mxu0
        %v1360 = vpop.f32.mrb[0].mxu0
        %v1361 = vadd.f32 %v1200, %v1360
        %v1362 = vpop.f32.mrb[0].mxu0
        %1363 = vmatprep.mubr.bf16.mxu0 0
        %1364 = vmatmul.mubr.bf16.gmra.mrb[0].mxu0 %v792
        %v1365 = vpop.f32.mrb[0].mxu0
        %v1366 = vadd.f32 %v1205, %v1365
        %v1367 = vpop.f32.mrb[0].mxu0
        %v1368 = vpop.f32.mrb[0].mxu0
        %v1369 = vadd.f32 %v1208, %v1368
        %v1370 = vpop.f32.mrb[0].mxu0
        %1371 = vmatprep.mubr.bf16.mxu0 0
        %1372 = vmatmul.mubr.bf16.gmra.mrb[0].mxu0 %v795
        %v1373 = vpop.f32.mrb[0].mxu0
        %v1374 = vadd.f32 %v1213, %v1373
        %v1375 = vpop.f32.mrb[0].mxu0
        %v1376 = vpop.f32.mrb[0].mxu0
        %v1377 = vadd.f32 %v1216, %v1376
        %v1378 = vpop.f32.mrb[0].mxu0
        %1379 = vdwg.mxu0
        %v1428 = vunpack.c.l.b16 %v817
        %v1429 = vunpack.c.l.b16 %v818
        %v1430 = vunpack.c.l.b16 %v819
        %v1431 = vunpack.c.l.b16 %v820
        %v1432 = vunpack.c.l.b16 %v821
        %v1433 = vunpack.c.l.b16 %v822
        %v1434 = vunpack.c.l.b16 %v823
        %v1435 = vunpack.c.l.b16 %v824
        %v1436 = vunpack.c.l.b16 %v825
        %v1437 = vunpack.c.l.b16 %v826
        %v1438 = vunpack.c.l.b16 %v827
        %v1439 = vunpack.c.l.b16 %v828
        %v1440 = vunpack.c.l.b16 %v829
        %v1441 = vunpack.c.l.b16 %v830
        %v1442 = vunpack.c.l.b16 %v831
        %v1443 = vunpack.c.l.b16 %v832
        %v1444 = vunpack.c.l.b16 %v833
        %v1445 = vunpack.c.l.b16 %v834
        %v1446 = vunpack.c.l.b16 %v835
        %v1447 = vunpack.c.l.b16 %v836
        %v1448 = vunpack.c.l.b16 %v837
        %v1449 = vunpack.c.l.b16 %v838
        %v1450 = vunpack.c.l.b16 %v839
        %v1451 = vunpack.c.l.b16 %v840
        %v1452 = vunpack.c.l.b16 %v841
        %v1453 = vunpack.c.l.b16 %v842
        %v1454 = vunpack.c.l.b16 %v843
        %v1455 = vunpack.c.l.b16 %v844
        %v1456 = vunpack.c.l.b16 %v845
        %v1457 = vunpack.c.l.b16 %v846
        %v1458 = vunpack.c.l.b16 %v847
        %v1459 = vunpack.c.l.b16 %v848
        %v1460 = vunpack.c.l.b16 %v849
        %v1461 = vunpack.c.l.b16 %v850
        %v1462 = vunpack.c.l.b16 %v851
        %v1463 = vunpack.c.l.b16 %v852
        %v1464 = vunpack.c.l.b16 %v853
        %v1465 = vunpack.c.l.b16 %v854
        %v1466 = vunpack.c.l.b16 %v855
        %v1467 = vunpack.c.l.b16 %v856
        %v1468 = vunpack.c.l.b16 %v857
        %v1469 = vunpack.c.l.b16 %v858
        %v1470 = vunpack.c.l.b16 %v859
        %v1471 = vunpack.c.l.b16 %v860
        %v1472 = vunpack.c.l.b16 %v861
        %v1473 = vunpack.c.l.b16 %v862
        %v1474 = vunpack.c.l.b16 %v863
        %v1475 = vunpack.c.l.b16 %v864
        %v1476 = vpack.c.b16 %v1429, %v1428
        %v1477 = vpack.c.b16 %v1431, %v1430
        %v1478 = vpack.c.b16 %v1433, %v1432
        %v1479 = vpack.c.b16 %v1435, %v1434
        %v1480 = vpack.c.b16 %v1437, %v1436
        %v1481 = vpack.c.b16 %v1439, %v1438
        %v1482 = vpack.c.b16 %v1441, %v1440
        %v1483 = vpack.c.b16 %v1443, %v1442
        %v1484 = vpack.c.b16 %v1445, %v1444
        %v1485 = vpack.c.b16 %v1447, %v1446
        %v1486 = vpack.c.b16 %v1449, %v1448
        %v1487 = vpack.c.b16 %v1451, %v1450
        %v1488 = vpack.c.b16 %v1453, %v1452
        %v1489 = vpack.c.b16 %v1455, %v1454
        %v1490 = vpack.c.b16 %v1457, %v1456
        %v1491 = vpack.c.b16 %v1459, %v1458
        %v1492 = vpack.c.b16 %v1461, %v1460
        %v1493 = vpack.c.b16 %v1463, %v1462
        %v1494 = vpack.c.b16 %v1465, %v1464
        %v1495 = vpack.c.b16 %v1467, %v1466
        %v1496 = vpack.c.b16 %v1469, %v1468
        %v1497 = vpack.c.b16 %v1471, %v1470
        %v1498 = vpack.c.b16 %v1473, %v1472
        %v1499 = vpack.c.b16 %v1475, %v1474
        %1524 = vmatprep.subr.bf16.mxu0 0
        %1525 = vmatpush1.bf16.msra.mxu0 %v1476
        %1526 = vmatprep.subr.bf16.mxu0 0
        %1527 = vmatpush1.bf16.msra.mxu0 %v1477
        %1528 = vmatprep.subr.bf16.mxu0 0
        %1529 = vmatpush1.bf16.msra.mxu0 %v1478
        %1530 = vmatprep.subr.bf16.mxu0 0
        %1531 = vmatpush1.bf16.msra.mxu0 %v1479
        %1532 = vmatprep.subr.bf16.mxu0 0
        %1533 = vmatpush1.bf16.msra.mxu0 %v1480
        %1534 = vmatprep.subr.bf16.mxu0 0
        %1535 = vmatpush1.bf16.msra.mxu0 %v1481
        %1536 = vmatprep.subr.bf16.mxu0 0
        %1537 = vmatpush1.bf16.msra.mxu0 %v1482
        %1538 = vmatprep.subr.bf16.mxu0 0
        %1539 = vmatpush1.bf16.msra.mxu0 %v1483
        %1540 = vmatprep.subr.bf16.mxu0 0
        %1541 = vmatpush1.bf16.msra.mxu0 %v1484
        %1542 = vmatprep.subr.bf16.mxu0 0
        %1543 = vmatpush1.bf16.msra.mxu0 %v1485
        %1544 = vmatprep.subr.bf16.mxu0 0
        %1545 = vmatpush1.bf16.msra.mxu0 %v1486
        %1546 = vmatprep.subr.bf16.mxu0 0
        %1547 = vmatpush1.bf16.msra.mxu0 %v1487
        %1548 = vmatprep.subr.bf16.mxu0 0
        %1549 = vmatpush1.bf16.msra.mxu0 %v1488
        %1550 = vmatprep.subr.bf16.mxu0 0
        %1551 = vmatpush1.bf16.msra.mxu0 %v1489
        %1552 = vmatprep.subr.bf16.mxu0 0
        %1553 = vmatpush1.bf16.msra.mxu0 %v1490
        %1554 = vmatprep.subr.bf16.mxu0 0
        %1555 = vmatpush1.bf16.msra.mxu0 %v1491
        %1556 = vmatprep.mubr.bf16.mxu0 %v521
        %1557 = vmatmul.mubr.bf16.gmra.mrb[0].mxu0 %v419
        %v1558 = vpop.f32.mrb[0].mxu0
        %v1559 = vadd.f32 %v1254, %v1558
        %v1560 = vpop.f32.mrb[0].mxu0
        %v1561 = vpop.f32.mrb[0].mxu0
        %v1562 = vadd.f32 %v1257, %v1561
        %v1563 = vpop.f32.mrb[0].mxu0
        %1564 = vmatprep.mubr.bf16.mxu0 %v533
        %1565 = vmatmul.mubr.bf16.gmra.mrb[0].mxu0 %v420
        %v1566 = vpop.f32.mrb[0].mxu0
        %v1567 = vadd.f32 %v1262, %v1566
        %v1568 = vpop.f32.mrb[0].mxu0
        %v1569 = vpop.f32.mrb[0].mxu0
        %v1570 = vadd.f32 %v1265, %v1569
        %v1571 = vpop.f32.mrb[0].mxu0
        %1572 = vmatprep.mubr.bf16.mxu0 %v545
        %1573 = vmatmul.mubr.bf16.gmra.mrb[0].mxu0 %v421
        %v1574 = vpop.f32.mrb[0].mxu0
        %v1575 = vadd.f32 %v1270, %v1574
        %v1576 = vpop.f32.mrb[0].mxu0
        %v1577 = vpop.f32.mrb[0].mxu0
        %v1578 = vadd.f32 %v1273, %v1577
        %v1579 = vpop.f32.mrb[0].mxu0
        %1580 = vmatprep.mubr.bf16.mxu0 %v557
        %1581 = vmatmul.mubr.bf16.gmra.mrb[0].mxu0 %v422
        %v1582 = vpop.f32.mrb[0].mxu0
        %v1583 = vadd.f32 %v1278, %v1582
        %v1584 = vpop.f32.mrb[0].mxu0
        %v1585 = vpop.f32.mrb[0].mxu0
        %v1586 = vadd.f32 %v1281, %v1585
        %v1587 = vpop.f32.mrb[0].mxu0
        %1588 = vmatprep.mubr.bf16.mxu0 %v569
        %1589 = vmatmul.mubr.bf16.gmra.mrb[0].mxu0 %v423
        %v1590 = vpop.f32.mrb[0].mxu0
        %v1591 = vadd.f32 %v1286, %v1590
        %v1592 = vpop.f32.mrb[0].mxu0
        %v1593 = vpop.f32.mrb[0].mxu0
        %v1594 = vadd.f32 %v1289, %v1593
        %v1595 = vpop.f32.mrb[0].mxu0
        %1596 = vmatprep.mubr.bf16.mxu0 %v581
        %1597 = vmatmul.mubr.bf16.gmra.mrb[0].mxu0 %v424
        %v1598 = vpop.f32.mrb[0].mxu0
        %v1599 = vadd.f32 %v1294, %v1598
        %v1600 = vpop.f32.mrb[0].mxu0
        %v1601 = vpop.f32.mrb[0].mxu0
        %v1602 = vadd.f32 %v1297, %v1601
        %v1603 = vpop.f32.mrb[0].mxu0
        %1604 = vmatprep.mubr.bf16.mxu0 %v593
        %1605 = vmatmul.mubr.bf16.gmra.mrb[0].mxu0 %v425
        %v1606 = vpop.f32.mrb[0].mxu0
        %v1607 = vadd.f32 %v1302, %v1606
        %v1608 = vpop.f32.mrb[0].mxu0
        %v1609 = vpop.f32.mrb[0].mxu0
        %v1610 = vadd.f32 %v1305, %v1609
        %v1611 = vpop.f32.mrb[0].mxu0
        %1612 = vmatprep.mubr.bf16.mxu0 %v605
        %1613 = vmatmul.mubr.bf16.gmra.mrb[0].mxu0 %v426
        %v1614 = vpop.f32.mrb[0].mxu0
        %v1615 = vadd.f32 %v1310, %v1614
        %v1616 = vpop.f32.mrb[0].mxu0
        %v1617 = vpop.f32.mrb[0].mxu0
        %v1618 = vadd.f32 %v1313, %v1617
        %v1619 = vpop.f32.mrb[0].mxu0
        %1620 = vmatprep.mubr.bf16.mxu0 %v617
        %1621 = vmatmul.mubr.bf16.gmra.mrb[0].mxu0 %v427
        %v1622 = vpop.f32.mrb[0].mxu0
        %v1623 = vadd.f32 %v1318, %v1622
        %v1624 = vpop.f32.mrb[0].mxu0
        %v1625 = vpop.f32.mrb[0].mxu0
        %v1626 = vadd.f32 %v1321, %v1625
        %v1627 = vpop.f32.mrb[0].mxu0
        %1628 = vmatprep.mubr.bf16.mxu0 %v629
        %1629 = vmatmul.mubr.bf16.gmra.mrb[0].mxu0 %v428
        %v1630 = vpop.f32.mrb[0].mxu0
        %v1631 = vadd.f32 %v1326, %v1630
        %v1632 = vpop.f32.mrb[0].mxu0
        %v1633 = vpop.f32.mrb[0].mxu0
        %v1634 = vadd.f32 %v1329, %v1633
        %v1635 = vpop.f32.mrb[0].mxu0
        %1636 = vmatprep.mubr.bf16.mxu0 %v641
        %1637 = vmatmul.mubr.bf16.gmra.mrb[0].mxu0 %v429
        %v1638 = vpop.f32.mrb[0].mxu0
        %v1639 = vadd.f32 %v1334, %v1638
        %v1640 = vpop.f32.mrb[0].mxu0
        %v1641 = vpop.f32.mrb[0].mxu0
        %v1642 = vadd.f32 %v1337, %v1641
        %v1643 = vpop.f32.mrb[0].mxu0
        %1644 = vmatprep.mubr.bf16.mxu0 %v653
        %1645 = vmatmul.mubr.bf16.gmra.mrb[0].mxu0 %v430
        %v1646 = vpop.f32.mrb[0].mxu0
        %v1647 = vadd.f32 %v1342, %v1646
        %v1648 = vpop.f32.mrb[0].mxu0
        %v1649 = vpop.f32.mrb[0].mxu0
        %v1650 = vadd.f32 %v1345, %v1649
        %v1651 = vpop.f32.mrb[0].mxu0
        %1652 = vmatprep.mubr.bf16.mxu0 %v665
        %1653 = vmatmul.mubr.bf16.gmra.mrb[0].mxu0 %v431
        %v1654 = vpop.f32.mrb[0].mxu0
        %v1655 = vadd.f32 %v1350, %v1654
        %v1656 = vpop.f32.mrb[0].mxu0
        %v1657 = vpop.f32.mrb[0].mxu0
        %v1658 = vadd.f32 %v1353, %v1657
        %v1659 = vpop.f32.mrb[0].mxu0
        %1660 = vmatprep.mubr.bf16.mxu0 %v677
        %1661 = vmatmul.mubr.bf16.gmra.mrb[0].mxu0 %v432
        %v1662 = vpop.f32.mrb[0].mxu0
        %v1663 = vadd.f32 %v1358, %v1662
        %v1664 = vpop.f32.mrb[0].mxu0
        %v1665 = vpop.f32.mrb[0].mxu0
        %v1666 = vadd.f32 %v1361, %v1665
        %v1667 = vpop.f32.mrb[0].mxu0
        %1668 = vmatprep.mubr.bf16.mxu0 %v689
        %1669 = vmatmul.mubr.bf16.gmra.mrb[0].mxu0 %v433
        %v1670 = vpop.f32.mrb[0].mxu0
        %v1671 = vadd.f32 %v1366, %v1670
        %v1672 = vpop.f32.mrb[0].mxu0
        %v1673 = vpop.f32.mrb[0].mxu0
        %v1674 = vadd.f32 %v1369, %v1673
        %v1675 = vpop.f32.mrb[0].mxu0
        %1676 = vmatprep.mubr.bf16.mxu0 %v701
        %1677 = vmatmul.mubr.bf16.gmra.mrb[0].mxu0 %v434
        %v1678 = vpop.f32.mrb[0].mxu0
        %v1679 = vadd.f32 %v1374, %v1678
        %v1680 = vpop.f32.mrb[0].mxu0
        %v1681 = vpop.f32.mrb[0].mxu0
        %v1682 = vadd.f32 %v1377, %v1681
        %v1683 = vpop.f32.mrb[0].mxu0
        %1684 = vdwg.mxu0
        %1685 = vmatprep.subr.bf16.mxu0 0
        %1686 = vmatpush1.bf16.msra.mxu0 %v1492
        %1687 = vmatprep.subr.bf16.mxu0 0
        %1688 = vmatpush1.bf16.msra.mxu0 %v1493
        %1689 = vmatprep.subr.bf16.mxu0 0
        %1690 = vmatpush1.bf16.msra.mxu0 %v1494
        %1691 = vmatprep.subr.bf16.mxu0 0
        %1692 = vmatpush1.bf16.msra.mxu0 %v1495
        %1693 = vmatprep.subr.bf16.mxu0 0
        %1694 = vmatpush1.bf16.msra.mxu0 %v1496
        %1695 = vmatprep.subr.bf16.mxu0 0
        %1696 = vmatpush1.bf16.msra.mxu0 %v1497
        %1697 = vmatprep.subr.bf16.mxu0 0
        %1698 = vmatpush1.bf16.msra.mxu0 %v1498
        %1699 = vmatprep.subr.bf16.mxu0 0
        %1700 = vmatpush1.bf16.msra.mxu0 %v1499
        %1701 = vmatprep.subr.bf16.mxu0 0
        %1702 = vmatpush1.bf16.msra.mxu0 0
        %1703 = vmatprep.subr.bf16.mxu0 0
        %1704 = vmatpush1.bf16.msra.mxu0 0
        %1705 = vmatprep.subr.bf16.mxu0 0
        %1706 = vmatpush1.bf16.msra.mxu0 0
        %1707 = vmatprep.subr.bf16.mxu0 0
        %1708 = vmatpush1.bf16.msra.mxu0 0
        %1709 = vmatprep.subr.bf16.mxu0 0
        %1710 = vmatpush1.bf16.msra.mxu0 0
        %1711 = vmatprep.subr.bf16.mxu0 0
        %1712 = vmatpush1.bf16.msra.mxu0 0
        %1713 = vmatprep.subr.bf16.mxu0 0
        %1714 = vmatpush1.bf16.msra.mxu0 0
        %1715 = vmatprep.subr.bf16.mxu0 0
        %1716 = vmatpush1.bf16.msra.mxu0 0
        %1717 = vmatprep.mubr.bf16.mxu0 0
        %1718 = vmatmul.mubr.bf16.gmra.mrb[0].mxu0 %v747
        %v1719 = vpop.f32.mrb[0].mxu0
        %v1720 = vadd.f32 %v1559, %v1719
        %v1721 = vpop.f32.mrb[0].mxu0
        %v1722 = vpop.f32.mrb[0].mxu0
        %v1723 = vadd.f32 %v1562, %v1722
        %v1724 = vpop.f32.mrb[0].mxu0
        %1725 = vmatprep.mubr.bf16.mxu0 0
        %1726 = vmatmul.mubr.bf16.gmra.mrb[0].mxu0 %v750
        %v1727 = vpop.f32.mrb[0].mxu0
        %v1728 = vadd.f32 %v1567, %v1727
        %v1729 = vpop.f32.mrb[0].mxu0
        %v1730 = vpop.f32.mrb[0].mxu0
        %v1731 = vadd.f32 %v1570, %v1730
        %v1732 = vpop.f32.mrb[0].mxu0
        %1733 = vmatprep.mubr.bf16.mxu0 0
        %1734 = vmatmul.mubr.bf16.gmra.mrb[0].mxu0 %v753
        %v1735 = vpop.f32.mrb[0].mxu0
        %v1736 = vadd.f32 %v1575, %v1735
        %v1737 = vpop.f32.mrb[0].mxu0
        %v1738 = vpop.f32.mrb[0].mxu0
        %v1739 = vadd.f32 %v1578, %v1738
        %v1740 = vpop.f32.mrb[0].mxu0
        %1741 = vmatprep.mubr.bf16.mxu0 0
        %1742 = vmatmul.mubr.bf16.gmra.mrb[0].mxu0 %v756
        %v1743 = vpop.f32.mrb[0].mxu0
        %v1744 = vadd.f32 %v1583, %v1743
        %v1745 = vpop.f32.mrb[0].mxu0
        %v1746 = vpop.f32.mrb[0].mxu0
        %v1747 = vadd.f32 %v1586, %v1746
        %v1748 = vpop.f32.mrb[0].mxu0
        %1749 = vmatprep.mubr.bf16.mxu0 0
        %1750 = vmatmul.mubr.bf16.gmra.mrb[0].mxu0 %v759
        %v1751 = vpop.f32.mrb[0].mxu0
        %v1752 = vadd.f32 %v1591, %v1751
        %v1753 = vpop.f32.mrb[0].mxu0
        %v1754 = vpop.f32.mrb[0].mxu0
        %v1755 = vadd.f32 %v1594, %v1754
        %v1756 = vpop.f32.mrb[0].mxu0
        %1757 = vmatprep.mubr.bf16.mxu0 0
        %1758 = vmatmul.mubr.bf16.gmra.mrb[0].mxu0 %v762
        %v1759 = vpop.f32.mrb[0].mxu0
        %v1760 = vadd.f32 %v1599, %v1759
        %v1761 = vpop.f32.mrb[0].mxu0
        %v1762 = vpop.f32.mrb[0].mxu0
        %v1763 = vadd.f32 %v1602, %v1762
        %v1764 = vpop.f32.mrb[0].mxu0
        %1765 = vmatprep.mubr.bf16.mxu0 0
        %1766 = vmatmul.mubr.bf16.gmra.mrb[0].mxu0 %v765
        %v1767 = vpop.f32.mrb[0].mxu0
        %v1768 = vadd.f32 %v1607, %v1767
        %v1769 = vpop.f32.mrb[0].mxu0
        %v1770 = vpop.f32.mrb[0].mxu0
        %v1771 = vadd.f32 %v1610, %v1770
        %v1772 = vpop.f32.mrb[0].mxu0
        %1773 = vmatprep.mubr.bf16.mxu0 0
        %1774 = vmatmul.mubr.bf16.gmra.mrb[0].mxu0 %v768
        %v1775 = vpop.f32.mrb[0].mxu0
        %v1776 = vadd.f32 %v1615, %v1775
        %v1777 = vpop.f32.mrb[0].mxu0
        %v1778 = vpop.f32.mrb[0].mxu0
        %v1779 = vadd.f32 %v1618, %v1778
        %v1780 = vpop.f32.mrb[0].mxu0
        %1781 = vmatprep.mubr.bf16.mxu0 0
        %1782 = vmatmul.mubr.bf16.gmra.mrb[0].mxu0 %v771
        %v1783 = vpop.f32.mrb[0].mxu0
        %v1784 = vadd.f32 %v1623, %v1783
        %v1785 = vpop.f32.mrb[0].mxu0
        %v1786 = vpop.f32.mrb[0].mxu0
        %v1787 = vadd.f32 %v1626, %v1786
        %v1788 = vpop.f32.mrb[0].mxu0
        %1789 = vmatprep.mubr.bf16.mxu0 0
        %1790 = vmatmul.mubr.bf16.gmra.mrb[0].mxu0 %v774
        %v1791 = vpop.f32.mrb[0].mxu0
        %v1792 = vadd.f32 %v1631, %v1791
        %v1793 = vpop.f32.mrb[0].mxu0
        %v1794 = vpop.f32.mrb[0].mxu0
        %v1795 = vadd.f32 %v1634, %v1794
        %v1796 = vpop.f32.mrb[0].mxu0
        %1797 = vmatprep.mubr.bf16.mxu0 0
        %1798 = vmatmul.mubr.bf16.gmra.mrb[0].mxu0 %v777
        %v1799 = vpop.f32.mrb[0].mxu0
        %v1800 = vadd.f32 %v1639, %v1799
        %v1801 = vpop.f32.mrb[0].mxu0
        %v1802 = vpop.f32.mrb[0].mxu0
        %v1803 = vadd.f32 %v1642, %v1802
        %v1804 = vpop.f32.mrb[0].mxu0
        %1805 = vmatprep.mubr.bf16.mxu0 0
        %1806 = vmatmul.mubr.bf16.gmra.mrb[0].mxu0 %v780
        %v1807 = vpop.f32.mrb[0].mxu0
        %v1808 = vadd.f32 %v1647, %v1807
        %v1809 = vpop.f32.mrb[0].mxu0
        %v1810 = vpop.f32.mrb[0].mxu0
        %v1811 = vadd.f32 %v1650, %v1810
        %v1812 = vpop.f32.mrb[0].mxu0
        %1813 = vmatprep.mubr.bf16.mxu0 0
        %1814 = vmatmul.mubr.bf16.gmra.mrb[0].mxu0 %v783
        %v1815 = vpop.f32.mrb[0].mxu0
        %v1816 = vadd.f32 %v1655, %v1815
        %v1817 = vpop.f32.mrb[0].mxu0
        %v1818 = vpop.f32.mrb[0].mxu0
        %v1819 = vadd.f32 %v1658, %v1818
        %v1820 = vpop.f32.mrb[0].mxu0
        %1821 = vmatprep.mubr.bf16.mxu0 0
        %1822 = vmatmul.mubr.bf16.gmra.mrb[0].mxu0 %v786
        %v1823 = vpop.f32.mrb[0].mxu0
        %v1824 = vadd.f32 %v1663, %v1823
        %v1825 = vpop.f32.mrb[0].mxu0
        %v1826 = vpop.f32.mrb[0].mxu0
        %v1827 = vadd.f32 %v1666, %v1826
        %v1828 = vpop.f32.mrb[0].mxu0
        %1829 = vmatprep.mubr.bf16.mxu0 0
        %1830 = vmatmul.mubr.bf16.gmra.mrb[0].mxu0 %v789
        %v1831 = vpop.f32.mrb[0].mxu0
        %v1832 = vadd.f32 %v1671, %v1831
        %v1833 = vpop.f32.mrb[0].mxu0
        %v1834 = vpop.f32.mrb[0].mxu0
        %v1835 = vadd.f32 %v1674, %v1834
        %v1836 = vpop.f32.mrb[0].mxu0
        %1837 = vmatprep.mubr.bf16.mxu0 0
        %1838 = vmatmul.mubr.bf16.gmra.mrb[0].mxu0 %v792
        %v1839 = vpop.f32.mrb[0].mxu0
        %v1840 = vadd.f32 %v1679, %v1839
        %v1841 = vpop.f32.mrb[0].mxu0
        %v1842 = vpop.f32.mrb[0].mxu0
        %v1843 = vadd.f32 %v1682, %v1842
        %v1844 = vpop.f32.mrb[0].mxu0
        %1845 = vdwg.mxu0
        %s1846 = scalar_lea.vmem %s1, 384
        %v1847 = vld [vmem:[%s1846] sm:$0xf]
        %v1848 = vld [vmem:[%s1846 + $0x4] sm:$0xf]
        %v1849 = vld [vmem:[%s1846 + $0x8] sm:$0xf]
        %v1850 = vld [vmem:[%s1846 + $0xc] sm:$0xf]
        %v1851 = vld [vmem:[%s1846 + $0x10] sm:$0xf]
        %v1852 = vld [vmem:[%s1846 + $0x14] sm:$0xf]
        %v1853 = vld [vmem:[%s1846 + $0x18] sm:$0xf]
        %v1854 = vld [vmem:[%s1846 + $0x1c] sm:$0xf]
        %v1855 = vld [vmem:[%s1846 + $0x20] sm:$0xf]
        %v1856 = vld [vmem:[%s1846 + $0x24] sm:$0xf]
        %v1857 = vld [vmem:[%s1846 + $0x28] sm:$0xf]
        %v1858 = vld [vmem:[%s1846 + $0x2c] sm:$0xf]
        %v1859 = vld [vmem:[%s1846 + $0x30] sm:$0xf]
        %v1860 = vld [vmem:[%s1846 + $0x34] sm:$0xf]
        %v1861 = vld [vmem:[%s1846 + $0x38] sm:$0xf]
        %v1862 = vld [vmem:[%s1846 + $0x3c] sm:$0xf]
        %v1863 = vld [vmem:[%s1846 + $0x40] sm:$0xf]
        %v1864 = vld [vmem:[%s1846 + $0x44] sm:$0xf]
        %v1865 = vld [vmem:[%s1846 + $0x48] sm:$0xf]
        %v1866 = vld [vmem:[%s1846 + $0x4c] sm:$0xf]
        %v1867 = vld [vmem:[%s1846 + $0x50] sm:$0xf]
        %v1868 = vld [vmem:[%s1846 + $0x54] sm:$0xf]
        %v1869 = vld [vmem:[%s1846 + $0x58] sm:$0xf]
        %v1870 = vld [vmem:[%s1846 + $0x5c] sm:$0xf]
        %v1871 = vld [vmem:[%s1846 + $0x60] sm:$0xf]
        %v1872 = vld [vmem:[%s1846 + $0x64] sm:$0xf]
        %v1873 = vld [vmem:[%s1846 + $0x68] sm:$0xf]
        %v1874 = vld [vmem:[%s1846 + $0x6c] sm:$0xf]
        %v1875 = vld [vmem:[%s1846 + $0x70] sm:$0xf]
        %v1876 = vld [vmem:[%s1846 + $0x74] sm:$0xf]
        %v1877 = vld [vmem:[%s1846 + $0x78] sm:$0xf]
        %v1878 = vld [vmem:[%s1846 + $0x7c] sm:$0xf]
        %v1879 = vld [vmem:[%s1846 + $0x80] sm:$0xf]
        %v1880 = vld [vmem:[%s1846 + $0x84] sm:$0xf]
        %v1881 = vld [vmem:[%s1846 + $0x88] sm:$0xf]
        %v1882 = vld [vmem:[%s1846 + $0x8c] sm:$0xf]
        %v1883 = vld [vmem:[%s1846 + $0x90] sm:$0xf]
        %v1884 = vld [vmem:[%s1846 + $0x94] sm:$0xf]
        %v1885 = vld [vmem:[%s1846 + $0x98] sm:$0xf]
        %v1886 = vld [vmem:[%s1846 + $0x9c] sm:$0xf]
        %v1887 = vld [vmem:[%s1846 + $0xa0] sm:$0xf]
        %v1888 = vld [vmem:[%s1846 + $0xa4] sm:$0xf]
        %v1889 = vld [vmem:[%s1846 + $0xa8] sm:$0xf]
        %v1890 = vld [vmem:[%s1846 + $0xac] sm:$0xf]
        %v1891 = vld [vmem:[%s1846 + $0xb0] sm:$0xf]
        %v1892 = vld [vmem:[%s1846 + $0xb4] sm:$0xf]
        %v1893 = vld [vmem:[%s1846 + $0xb8] sm:$0xf]
        %v1894 = vld [vmem:[%s1846 + $0xbc] sm:$0xf]
        %v1943 = vunpack.c.l.b16 %v1847
        %v1944 = vunpack.c.l.b16 %v1848
        %v1945 = vunpack.c.l.b16 %v1849
        %v1946 = vunpack.c.l.b16 %v1850
        %v1947 = vunpack.c.l.b16 %v1851
        %v1948 = vunpack.c.l.b16 %v1852
        %v1949 = vunpack.c.l.b16 %v1853
        %v1950 = vunpack.c.l.b16 %v1854
        %v1951 = vunpack.c.l.b16 %v1855
        %v1952 = vunpack.c.l.b16 %v1856
        %v1953 = vunpack.c.l.b16 %v1857
        %v1954 = vunpack.c.l.b16 %v1858
        %v1955 = vunpack.c.l.b16 %v1859
        %v1956 = vunpack.c.l.b16 %v1860
        %v1957 = vunpack.c.l.b16 %v1861
        %v1958 = vunpack.c.l.b16 %v1862
        %v1959 = vunpack.c.l.b16 %v1863
        %v1960 = vunpack.c.l.b16 %v1864
        %v1961 = vunpack.c.l.b16 %v1865
        %v1962 = vunpack.c.l.b16 %v1866
        %v1963 = vunpack.c.l.b16 %v1867
        %v1964 = vunpack.c.l.b16 %v1868
        %v1965 = vunpack.c.l.b16 %v1869
        %v1966 = vunpack.c.l.b16 %v1870
        %v1967 = vunpack.c.l.b16 %v1871
        %v1968 = vunpack.c.l.b16 %v1872
        %v1969 = vunpack.c.l.b16 %v1873
        %v1970 = vunpack.c.l.b16 %v1874
        %v1971 = vunpack.c.l.b16 %v1875
        %v1972 = vunpack.c.l.b16 %v1876
        %v1973 = vunpack.c.l.b16 %v1877
        %v1974 = vunpack.c.l.b16 %v1878
        %v1975 = vunpack.c.l.b16 %v1879
        %v1976 = vunpack.c.l.b16 %v1880
        %v1977 = vunpack.c.l.b16 %v1881
        %v1978 = vunpack.c.l.b16 %v1882
        %v1979 = vunpack.c.l.b16 %v1883
        %v1980 = vunpack.c.l.b16 %v1884
        %v1981 = vunpack.c.l.b16 %v1885
        %v1982 = vunpack.c.l.b16 %v1886
        %v1983 = vunpack.c.l.b16 %v1887
        %v1984 = vunpack.c.l.b16 %v1888
        %v1985 = vunpack.c.l.b16 %v1889
        %v1986 = vunpack.c.l.b16 %v1890
        %v1987 = vunpack.c.l.b16 %v1891
        %v1988 = vunpack.c.l.b16 %v1892
        %v1989 = vunpack.c.l.b16 %v1893
        %v1990 = vunpack.c.l.b16 %v1894
        %v1991 = vpack.c.b16 %v1944, %v1943
        %v1992 = vpack.c.b16 %v1946, %v1945
        %v1993 = vpack.c.b16 %v1948, %v1947
        %v1994 = vpack.c.b16 %v1950, %v1949
        %v1995 = vpack.c.b16 %v1952, %v1951
        %v1996 = vpack.c.b16 %v1954, %v1953
        %v1997 = vpack.c.b16 %v1956, %v1955
        %v1998 = vpack.c.b16 %v1958, %v1957
        %v1999 = vpack.c.b16 %v1960, %v1959
        %v2000 = vpack.c.b16 %v1962, %v1961
        %v2001 = vpack.c.b16 %v1964, %v1963
        %v2002 = vpack.c.b16 %v1966, %v1965
        %v2003 = vpack.c.b16 %v1968, %v1967
        %v2004 = vpack.c.b16 %v1970, %v1969
        %v2005 = vpack.c.b16 %v1972, %v1971
        %v2006 = vpack.c.b16 %v1974, %v1973
        %v2007 = vpack.c.b16 %v1976, %v1975
        %v2008 = vpack.c.b16 %v1978, %v1977
        %v2009 = vpack.c.b16 %v1980, %v1979
        %v2010 = vpack.c.b16 %v1982, %v1981
        %v2011 = vpack.c.b16 %v1984, %v1983
        %v2012 = vpack.c.b16 %v1986, %v1985
        %v2013 = vpack.c.b16 %v1988, %v1987
        %v2014 = vpack.c.b16 %v1990, %v1989
        %2039 = vmatprep.subr.bf16.mxu0 0
        %2040 = vmatpush1.bf16.msra.mxu0 %v1991
        %2041 = vmatprep.subr.bf16.mxu0 0
        %2042 = vmatpush1.bf16.msra.mxu0 %v1992
        %2043 = vmatprep.subr.bf16.mxu0 0
        %2044 = vmatpush1.bf16.msra.mxu0 %v1993
        %2045 = vmatprep.subr.bf16.mxu0 0
        %2046 = vmatpush1.bf16.msra.mxu0 %v1994
        %2047 = vmatprep.subr.bf16.mxu0 0
        %2048 = vmatpush1.bf16.msra.mxu0 %v1995
        %2049 = vmatprep.subr.bf16.mxu0 0
        %2050 = vmatpush1.bf16.msra.mxu0 %v1996
        %2051 = vmatprep.subr.bf16.mxu0 0
        %2052 = vmatpush1.bf16.msra.mxu0 %v1997
        %2053 = vmatprep.subr.bf16.mxu0 0
        %2054 = vmatpush1.bf16.msra.mxu0 %v1998
        %2055 = vmatprep.subr.bf16.mxu0 0
        %2056 = vmatpush1.bf16.msra.mxu0 %v1999
        %2057 = vmatprep.subr.bf16.mxu0 0
        %2058 = vmatpush1.bf16.msra.mxu0 %v2000
        %2059 = vmatprep.subr.bf16.mxu0 0
        %2060 = vmatpush1.bf16.msra.mxu0 %v2001
        %2061 = vmatprep.subr.bf16.mxu0 0
        %2062 = vmatpush1.bf16.msra.mxu0 %v2002
        %2063 = vmatprep.subr.bf16.mxu0 0
        %2064 = vmatpush1.bf16.msra.mxu0 %v2003
        %2065 = vmatprep.subr.bf16.mxu0 0
        %2066 = vmatpush1.bf16.msra.mxu0 %v2004
        %2067 = vmatprep.subr.bf16.mxu0 0
        %2068 = vmatpush1.bf16.msra.mxu0 %v2005
        %2069 = vmatprep.subr.bf16.mxu0 0
        %2070 = vmatpush1.bf16.msra.mxu0 %v2006
        %2071 = vmatprep.mubr.bf16.mxu0 %v545
        %2072 = vmatmul.mubr.bf16.gmra.mrb[0].mxu0 %v421
        %v2073 = vpop.f32.mrb[0].mxu0
        %v2074 = vadd.f32 0.0, %v2073
        %v2075 = vpop.f32.mrb[0].mxu0
        %v2076 = vpop.f32.mrb[0].mxu0
        %v2077 = vadd.f32 0.0, %v2076
        %v2078 = vpop.f32.mrb[0].mxu0
        %2079 = vmatprep.mubr.bf16.mxu0 %v557
        %2080 = vmatmul.mubr.bf16.gmra.mrb[0].mxu0 %v422
        %v2081 = vpop.f32.mrb[0].mxu0
        %v2082 = vadd.f32 0.0, %v2081
        %v2083 = vpop.f32.mrb[0].mxu0
        %v2084 = vpop.f32.mrb[0].mxu0
        %v2085 = vadd.f32 0.0, %v2084
        %v2086 = vpop.f32.mrb[0].mxu0
        %2087 = vmatprep.mubr.bf16.mxu0 %v569
        %2088 = vmatmul.mubr.bf16.gmra.mrb[0].mxu0 %v423
        %v2089 = vpop.f32.mrb[0].mxu0
        %v2090 = vadd.f32 0.0, %v2089
        %v2091 = vpop.f32.mrb[0].mxu0
        %v2092 = vpop.f32.mrb[0].mxu0
        %v2093 = vadd.f32 0.0, %v2092
        %v2094 = vpop.f32.mrb[0].mxu0
        %2095 = vmatprep.mubr.bf16.mxu0 %v581
        %2096 = vmatmul.mubr.bf16.gmra.mrb[0].mxu0 %v424
        %v2097 = vpop.f32.mrb[0].mxu0
        %v2098 = vadd.f32 0.0, %v2097
        %v2099 = vpop.f32.mrb[0].mxu0
        %v2100 = vpop.f32.mrb[0].mxu0
        %v2101 = vadd.f32 0.0, %v2100
        %v2102 = vpop.f32.mrb[0].mxu0
        %2103 = vmatprep.mubr.bf16.mxu0 %v593
        %2104 = vmatmul.mubr.bf16.gmra.mrb[0].mxu0 %v425
        %v2105 = vpop.f32.mrb[0].mxu0
        %v2106 = vadd.f32 0.0, %v2105
        %v2107 = vpop.f32.mrb[0].mxu0
        %v2108 = vpop.f32.mrb[0].mxu0
        %v2109 = vadd.f32 0.0, %v2108
        %v2110 = vpop.f32.mrb[0].mxu0
        %2111 = vmatprep.mubr.bf16.mxu0 %v605
        %2112 = vmatmul.mubr.bf16.gmra.mrb[0].mxu0 %v426
        %v2113 = vpop.f32.mrb[0].mxu0
        %v2114 = vadd.f32 0.0, %v2113
        %v2115 = vpop.f32.mrb[0].mxu0
        %v2116 = vpop.f32.mrb[0].mxu0
        %v2117 = vadd.f32 0.0, %v2116
        %v2118 = vpop.f32.mrb[0].mxu0
        %2119 = vmatprep.mubr.bf16.mxu0 %v617
        %2120 = vmatmul.mubr.bf16.gmra.mrb[0].mxu0 %v427
        %v2121 = vpop.f32.mrb[0].mxu0
        %v2122 = vadd.f32 0.0, %v2121
        %v2123 = vpop.f32.mrb[0].mxu0
        %v2124 = vpop.f32.mrb[0].mxu0
        %v2125 = vadd.f32 0.0, %v2124
        %v2126 = vpop.f32.mrb[0].mxu0
        %2127 = vmatprep.mubr.bf16.mxu0 %v629
        %2128 = vmatmul.mubr.bf16.gmra.mrb[0].mxu0 %v428
        %v2129 = vpop.f32.mrb[0].mxu0
        %v2130 = vadd.f32 0.0, %v2129
        %v2131 = vpop.f32.mrb[0].mxu0
        %v2132 = vpop.f32.mrb[0].mxu0
        %v2133 = vadd.f32 0.0, %v2132
        %v2134 = vpop.f32.mrb[0].mxu0
        %2135 = vmatprep.mubr.bf16.mxu0 %v641
        %2136 = vmatmul.mubr.bf16.gmra.mrb[0].mxu0 %v429
        %v2137 = vpop.f32.mrb[0].mxu0
        %v2138 = vadd.f32 0.0, %v2137
        %v2139 = vpop.f32.mrb[0].mxu0
        %v2140 = vpop.f32.mrb[0].mxu0
        %v2141 = vadd.f32 0.0, %v2140
        %v2142 = vpop.f32.mrb[0].mxu0
        %2143 = vmatprep.mubr.bf16.mxu0 %v653
        %2144 = vmatmul.mubr.bf16.gmra.mrb[0].mxu0 %v430
        %v2145 = vpop.f32.mrb[0].mxu0
        %v2146 = vadd.f32 0.0, %v2145
        %v2147 = vpop.f32.mrb[0].mxu0
        %v2148 = vpop.f32.mrb[0].mxu0
        %v2149 = vadd.f32 0.0, %v2148
        %v2150 = vpop.f32.mrb[0].mxu0
        %2151 = vmatprep.mubr.bf16.mxu0 %v665
        %2152 = vmatmul.mubr.bf16.gmra.mrb[0].mxu0 %v431
        %v2153 = vpop.f32.mrb[0].mxu0
        %v2154 = vadd.f32 0.0, %v2153
        %v2155 = vpop.f32.mrb[0].mxu0
        %v2156 = vpop.f32.mrb[0].mxu0
        %v2157 = vadd.f32 0.0, %v2156
        %v2158 = vpop.f32.mrb[0].mxu0
        %2159 = vmatprep.mubr.bf16.mxu0 %v677
        %2160 = vmatmul.mubr.bf16.gmra.mrb[0].mxu0 %v432
        %v2161 = vpop.f32.mrb[0].mxu0
        %v2162 = vadd.f32 0.0, %v2161
        %v2163 = vpop.f32.mrb[0].mxu0
        %v2164 = vpop.f32.mrb[0].mxu0
        %v2165 = vadd.f32 0.0, %v2164
        %v2166 = vpop.f32.mrb[0].mxu0
        %2167 = vmatprep.mubr.bf16.mxu0 %v689
        %2168 = vmatmul.mubr.bf16.gmra.mrb[0].mxu0 %v433
        %v2169 = vpop.f32.mrb[0].mxu0
        %v2170 = vadd.f32 0.0, %v2169
        %v2171 = vpop.f32.mrb[0].mxu0
        %v2172 = vpop.f32.mrb[0].mxu0
        %v2173 = vadd.f32 0.0, %v2172
        %v2174 = vpop.f32.mrb[0].mxu0
        %2175 = vmatprep.mubr.bf16.mxu0 %v701
        %2176 = vmatmul.mubr.bf16.gmra.mrb[0].mxu0 %v434
        %v2177 = vpop.f32.mrb[0].mxu0
        %v2178 = vadd.f32 0.0, %v2177
        %v2179 = vpop.f32.mrb[0].mxu0
        %v2180 = vpop.f32.mrb[0].mxu0
        %v2181 = vadd.f32 0.0, %v2180
        %v2182 = vpop.f32.mrb[0].mxu0
        %2183 = vmatprep.mubr.bf16.mxu0 %v713
        %2184 = vmatmul.mubr.bf16.gmra.mrb[0].mxu0 %v435
        %v2185 = vpop.f32.mrb[0].mxu0
        %v2186 = vadd.f32 0.0, %v2185
        %v2187 = vpop.f32.mrb[0].mxu0
        %v2188 = vpop.f32.mrb[0].mxu0
        %v2189 = vadd.f32 0.0, %v2188
        %v2190 = vpop.f32.mrb[0].mxu0
        %2191 = vmatprep.mubr.bf16.mxu0 %v725
        %2192 = vmatmul.mubr.bf16.gmra.mrb[0].mxu0 %v436
        %v2193 = vpop.f32.mrb[0].mxu0
        %v2194 = vadd.f32 0.0, %v2193
        %v2195 = vpop.f32.mrb[0].mxu0
        %v2196 = vpop.f32.mrb[0].mxu0
        %v2197 = vadd.f32 0.0, %v2196
        %v2198 = vpop.f32.mrb[0].mxu0
        %2199 = vdwg.mxu0
        %2200 = vmatprep.subr.bf16.mxu0 0
        %2201 = vmatpush1.bf16.msra.mxu0 %v2007
        %2202 = vmatprep.subr.bf16.mxu0 0
        %2203 = vmatpush1.bf16.msra.mxu0 %v2008
        %2204 = vmatprep.subr.bf16.mxu0 0
        %2205 = vmatpush1.bf16.msra.mxu0 %v2009
        %2206 = vmatprep.subr.bf16.mxu0 0
        %2207 = vmatpush1.bf16.msra.mxu0 %v2010
        %2208 = vmatprep.subr.bf16.mxu0 0
        %2209 = vmatpush1.bf16.msra.mxu0 %v2011
        %2210 = vmatprep.subr.bf16.mxu0 0
        %2211 = vmatpush1.bf16.msra.mxu0 %v2012
        %2212 = vmatprep.subr.bf16.mxu0 0
        %2213 = vmatpush1.bf16.msra.mxu0 %v2013
        %2214 = vmatprep.subr.bf16.mxu0 0
        %2215 = vmatpush1.bf16.msra.mxu0 %v2014
        %2216 = vmatprep.subr.bf16.mxu0 0
        %2217 = vmatpush1.bf16.msra.mxu0 0
        %2218 = vmatprep.subr.bf16.mxu0 0
        %2219 = vmatpush1.bf16.msra.mxu0 0
        %2220 = vmatprep.subr.bf16.mxu0 0
        %2221 = vmatpush1.bf16.msra.mxu0 0
        %2222 = vmatprep.subr.bf16.mxu0 0
        %2223 = vmatpush1.bf16.msra.mxu0 0
        %2224 = vmatprep.subr.bf16.mxu0 0
        %2225 = vmatpush1.bf16.msra.mxu0 0
        %2226 = vmatprep.subr.bf16.mxu0 0
        %2227 = vmatpush1.bf16.msra.mxu0 0
        %2228 = vmatprep.subr.bf16.mxu0 0
        %2229 = vmatpush1.bf16.msra.mxu0 0
        %2230 = vmatprep.subr.bf16.mxu0 0
        %2231 = vmatpush1.bf16.msra.mxu0 0
        %2232 = vmatprep.mubr.bf16.mxu0 0
        %2233 = vmatmul.mubr.bf16.gmra.mrb[0].mxu0 %v753
        %v2234 = vpop.f32.mrb[0].mxu0
        %v2235 = vadd.f32 %v2074, %v2234
        %v2236 = vpop.f32.mrb[0].mxu0
        %v2237 = vpop.f32.mrb[0].mxu0
        %v2238 = vadd.f32 %v2077, %v2237
        %v2239 = vpop.f32.mrb[0].mxu0
        %2240 = vmatprep.mubr.bf16.mxu0 0
        %2241 = vmatmul.mubr.bf16.gmra.mrb[0].mxu0 %v756
        %v2242 = vpop.f32.mrb[0].mxu0
        %v2243 = vadd.f32 %v2082, %v2242
        %v2244 = vpop.f32.mrb[0].mxu0
        %v2245 = vpop.f32.mrb[0].mxu0
        %v2246 = vadd.f32 %v2085, %v2245
        %v2247 = vpop.f32.mrb[0].mxu0
        %2248 = vmatprep.mubr.bf16.mxu0 0
        %2249 = vmatmul.mubr.bf16.gmra.mrb[0].mxu0 %v759
        %v2250 = vpop.f32.mrb[0].mxu0
        %v2251 = vadd.f32 %v2090, %v2250
        %v2252 = vpop.f32.mrb[0].mxu0
        %v2253 = vpop.f32.mrb[0].mxu0
        %v2254 = vadd.f32 %v2093, %v2253
        %v2255 = vpop.f32.mrb[0].mxu0
        %2256 = vmatprep.mubr.bf16.mxu0 0
        %2257 = vmatmul.mubr.bf16.gmra.mrb[0].mxu0 %v762
        %v2258 = vpop.f32.mrb[0].mxu0
        %v2259 = vadd.f32 %v2098, %v2258
        %v2260 = vpop.f32.mrb[0].mxu0
        %v2261 = vpop.f32.mrb[0].mxu0
        %v2262 = vadd.f32 %v2101, %v2261
        %v2263 = vpop.f32.mrb[0].mxu0
        %2264 = vmatprep.mubr.bf16.mxu0 0
        %2265 = vmatmul.mubr.bf16.gmra.mrb[0].mxu0 %v765
        %v2266 = vpop.f32.mrb[0].mxu0
        %v2267 = vadd.f32 %v2106, %v2266
        %v2268 = vpop.f32.mrb[0].mxu0
        %v2269 = vpop.f32.mrb[0].mxu0
        %v2270 = vadd.f32 %v2109, %v2269
        %v2271 = vpop.f32.mrb[0].mxu0
        %2272 = vmatprep.mubr.bf16.mxu0 0
        %2273 = vmatmul.mubr.bf16.gmra.mrb[0].mxu0 %v768
        %v2274 = vpop.f32.mrb[0].mxu0
        %v2275 = vadd.f32 %v2114, %v2274
        %v2276 = vpop.f32.mrb[0].mxu0
        %v2277 = vpop.f32.mrb[0].mxu0
        %v2278 = vadd.f32 %v2117, %v2277
        %v2279 = vpop.f32.mrb[0].mxu0
        %2280 = vmatprep.mubr.bf16.mxu0 0
        %2281 = vmatmul.mubr.bf16.gmra.mrb[0].mxu0 %v771
        %v2282 = vpop.f32.mrb[0].mxu0
        %v2283 = vadd.f32 %v2122, %v2282
        %v2284 = vpop.f32.mrb[0].mxu0
        %v2285 = vpop.f32.mrb[0].mxu0
        %v2286 = vadd.f32 %v2125, %v2285
        %v2287 = vpop.f32.mrb[0].mxu0
        %2288 = vmatprep.mubr.bf16.mxu0 0
        %2289 = vmatmul.mubr.bf16.gmra.mrb[0].mxu0 %v774
        %v2290 = vpop.f32.mrb[0].mxu0
        %v2291 = vadd.f32 %v2130, %v2290
        %v2292 = vpop.f32.mrb[0].mxu0
        %v2293 = vpop.f32.mrb[0].mxu0
        %v2294 = vadd.f32 %v2133, %v2293
        %v2295 = vpop.f32.mrb[0].mxu0
        %2296 = vmatprep.mubr.bf16.mxu0 0
        %2297 = vmatmul.mubr.bf16.gmra.mrb[0].mxu0 %v777
        %v2298 = vpop.f32.mrb[0].mxu0
        %v2299 = vadd.f32 %v2138, %v2298
        %v2300 = vpop.f32.mrb[0].mxu0
        %v2301 = vpop.f32.mrb[0].mxu0
        %v2302 = vadd.f32 %v2141, %v2301
        %v2303 = vpop.f32.mrb[0].mxu0
        %2304 = vmatprep.mubr.bf16.mxu0 0
        %2305 = vmatmul.mubr.bf16.gmra.mrb[0].mxu0 %v780
        %v2306 = vpop.f32.mrb[0].mxu0
        %v2307 = vadd.f32 %v2146, %v2306
        %v2308 = vpop.f32.mrb[0].mxu0
        %v2309 = vpop.f32.mrb[0].mxu0
        %v2310 = vadd.f32 %v2149, %v2309
        %v2311 = vpop.f32.mrb[0].mxu0
        %2312 = vmatprep.mubr.bf16.mxu0 0
        %2313 = vmatmul.mubr.bf16.gmra.mrb[0].mxu0 %v783
        %v2314 = vpop.f32.mrb[0].mxu0
        %v2315 = vadd.f32 %v2154, %v2314
        %v2316 = vpop.f32.mrb[0].mxu0
        %v2317 = vpop.f32.mrb[0].mxu0
        %v2318 = vadd.f32 %v2157, %v2317
        %v2319 = vpop.f32.mrb[0].mxu0
        %2320 = vmatprep.mubr.bf16.mxu0 0
        %2321 = vmatmul.mubr.bf16.gmra.mrb[0].mxu0 %v786
        %v2322 = vpop.f32.mrb[0].mxu0
        %v2323 = vadd.f32 %v2162, %v2322
        %v2324 = vpop.f32.mrb[0].mxu0
        %v2325 = vpop.f32.mrb[0].mxu0
        %v2326 = vadd.f32 %v2165, %v2325
        %v2327 = vpop.f32.mrb[0].mxu0
        %2328 = vmatprep.mubr.bf16.mxu0 0
        %2329 = vmatmul.mubr.bf16.gmra.mrb[0].mxu0 %v789
        %v2330 = vpop.f32.mrb[0].mxu0
        %v2331 = vadd.f32 %v2170, %v2330
        %v2332 = vpop.f32.mrb[0].mxu0
        %v2333 = vpop.f32.mrb[0].mxu0
        %v2334 = vadd.f32 %v2173, %v2333
        %v2335 = vpop.f32.mrb[0].mxu0
        %2336 = vmatprep.mubr.bf16.mxu0 0
        %2337 = vmatmul.mubr.bf16.gmra.mrb[0].mxu0 %v792
        %v2338 = vpop.f32.mrb[0].mxu0
        %v2339 = vadd.f32 %v2178, %v2338
        %v2340 = vpop.f32.mrb[0].mxu0
        %v2341 = vpop.f32.mrb[0].mxu0
        %v2342 = vadd.f32 %v2181, %v2341
        %v2343 = vpop.f32.mrb[0].mxu0
        %2344 = vmatprep.mubr.bf16.mxu0 0
        %2345 = vmatmul.mubr.bf16.gmra.mrb[0].mxu0 %v795
        %v2346 = vpop.f32.mrb[0].mxu0
        %v2347 = vadd.f32 %v2186, %v2346
        %v2348 = vpop.f32.mrb[0].mxu0
        %v2349 = vpop.f32.mrb[0].mxu0
        %v2350 = vadd.f32 %v2189, %v2349
        %v2351 = vpop.f32.mrb[0].mxu0
        %2352 = vmatprep.mubr.bf16.mxu0 0
        %2353 = vmatmul.mubr.bf16.gmra.mrb[0].mxu0 %v798
        %v2354 = vpop.f32.mrb[0].mxu0
        %v2355 = vadd.f32 %v2194, %v2354
        %v2356 = vpop.f32.mrb[0].mxu0
        %v2357 = vpop.f32.mrb[0].mxu0
        %v2358 = vadd.f32 %v2197, %v2357
        %v2359 = vpop.f32.mrb[0].mxu0
        %2360 = vdwg.mxu0
        %v2361 = vadd.f32 %v1720, %v2235
        %v2362 = vadd.f32 %v1723, %v2238
        %v2363 = vadd.f32 %v1728, %v2243
        %v2364 = vadd.f32 %v1731, %v2246
        %v2365 = vadd.f32 %v1736, %v2251
        %v2366 = vadd.f32 %v1739, %v2254
        %v2367 = vadd.f32 %v1744, %v2259
        %v2368 = vadd.f32 %v1747, %v2262
        %v2369 = vadd.f32 %v1752, %v2267
        %v2370 = vadd.f32 %v1755, %v2270
        %v2371 = vadd.f32 %v1760, %v2275
        %v2372 = vadd.f32 %v1763, %v2278
        %v2373 = vadd.f32 %v1768, %v2283
        %v2374 = vadd.f32 %v1771, %v2286
        %v2375 = vadd.f32 %v1776, %v2291
        %v2376 = vadd.f32 %v1779, %v2294
        %v2377 = vadd.f32 %v1784, %v2299
        %v2378 = vadd.f32 %v1787, %v2302
        %v2379 = vadd.f32 %v1792, %v2307
        %v2380 = vadd.f32 %v1795, %v2310
        %v2381 = vadd.f32 %v1800, %v2315
        %v2382 = vadd.f32 %v1803, %v2318
        %v2383 = vadd.f32 %v1808, %v2323
        %v2384 = vadd.f32 %v1811, %v2326
        %v2385 = vadd.f32 %v1816, %v2331
        %v2386 = vadd.f32 %v1819, %v2334
        %v2387 = vadd.f32 %v1824, %v2339
        %v2388 = vadd.f32 %v1827, %v2342
        %v2389 = vadd.f32 %v1832, %v2347
        %v2390 = vadd.f32 %v1835, %v2350
        %v2391 = vadd.f32 %v1840, %v2355
        %v2392 = vadd.f32 %v1843, %v2358
        %v2393 = vld [vmem:[%s3] sm:$0x1]
        %v2395 = vlaneseq
        %v2396 = vshrl.u32 %v2395, 7
        %v2397 = vsub.s32 0, %v2396
        %v2398 = vrot.slane %v2393, %v2397
        %v2400 = vmul.f32 %v2361, %v2398
        %v2401 = vmul.f32 %v2362, %v2398
        %v2402 = vmul.f32 %v2363, %v2398
        %v2403 = vmul.f32 %v2364, %v2398
        %v2404 = vmul.f32 %v2365, %v2398
        %v2405 = vmul.f32 %v2366, %v2398
        %v2406 = vmul.f32 %v2367, %v2398
        %v2407 = vmul.f32 %v2368, %v2398
        %v2408 = vmul.f32 %v2369, %v2398
        %v2409 = vmul.f32 %v2370, %v2398
        %v2410 = vmul.f32 %v2371, %v2398
        %v2411 = vmul.f32 %v2372, %v2398
        %v2412 = vmul.f32 %v2373, %v2398
        %v2413 = vmul.f32 %v2374, %v2398
        %v2414 = vmul.f32 %v2375, %v2398
        %v2415 = vmul.f32 %v2376, %v2398
        %v2416 = vmul.f32 %v2377, %v2398
        %v2417 = vmul.f32 %v2378, %v2398
        %v2418 = vmul.f32 %v2379, %v2398
        %v2419 = vmul.f32 %v2380, %v2398
        %v2420 = vmul.f32 %v2381, %v2398
        %v2421 = vmul.f32 %v2382, %v2398
        %v2422 = vmul.f32 %v2383, %v2398
        %v2423 = vmul.f32 %v2384, %v2398
        %v2424 = vmul.f32 %v2385, %v2398
        %v2425 = vmul.f32 %v2386, %v2398
        %v2426 = vmul.f32 %v2387, %v2398
        %v2427 = vmul.f32 %v2388, %v2398
        %v2428 = vmul.f32 %v2389, %v2398
        %v2429 = vmul.f32 %v2390, %v2398
        %v2430 = vmul.f32 %v2391, %v2398
        %v2431 = vmul.f32 %v2392, %v2398
        %v2432 = vld [vmem:[%s4] sm:$0x1]
        %v2434 = vlaneseq
        %v2435 = vshrl.u32 %v2434, 7
        %v2436 = vsub.s32 0, %v2435
        %v2437 = vrot.slane %v2432, %v2436
        %v2439 = vadd.f32 %v2400, %v2437
        %v2440 = vadd.f32 %v2401, %v2437
        %v2441 = vadd.f32 %v2402, %v2437
        %v2442 = vadd.f32 %v2403, %v2437
        %v2443 = vadd.f32 %v2404, %v2437
        %v2444 = vadd.f32 %v2405, %v2437
        %v2445 = vadd.f32 %v2406, %v2437
        %v2446 = vadd.f32 %v2407, %v2437
        %v2447 = vadd.f32 %v2408, %v2437
        %v2448 = vadd.f32 %v2409, %v2437
        %v2449 = vadd.f32 %v2410, %v2437
        %v2450 = vadd.f32 %v2411, %v2437
        %v2451 = vadd.f32 %v2412, %v2437
        %v2452 = vadd.f32 %v2413, %v2437
        %v2453 = vadd.f32 %v2414, %v2437
        %v2454 = vadd.f32 %v2415, %v2437
        %v2455 = vadd.f32 %v2416, %v2437
        %v2456 = vadd.f32 %v2417, %v2437
        %v2457 = vadd.f32 %v2418, %v2437
        %v2458 = vadd.f32 %v2419, %v2437
        %v2459 = vadd.f32 %v2420, %v2437
        %v2460 = vadd.f32 %v2421, %v2437
        %v2461 = vadd.f32 %v2422, %v2437
        %v2462 = vadd.f32 %v2423, %v2437
        %v2463 = vadd.f32 %v2424, %v2437
        %v2464 = vadd.f32 %v2425, %v2437
        %v2465 = vadd.f32 %v2426, %v2437
        %v2466 = vadd.f32 %v2427, %v2437
        %v2467 = vadd.f32 %v2428, %v2437
        %v2468 = vadd.f32 %v2429, %v2437
        %v2469 = vadd.f32 %v2430, %v2437
        %v2470 = vadd.f32 %v2431, %v2437
        %v2471 = vmax.f32 %v2439, 0.0
        %v2472 = vmax.f32 %v2440, 0.0
        %v2473 = vmax.f32 %v2441, 0.0
        %v2474 = vmax.f32 %v2442, 0.0
        %v2475 = vmax.f32 %v2443, 0.0
        %v2476 = vmax.f32 %v2444, 0.0
        %v2477 = vmax.f32 %v2445, 0.0
        %v2478 = vmax.f32 %v2446, 0.0
        %v2479 = vmax.f32 %v2447, 0.0
        %v2480 = vmax.f32 %v2448, 0.0
        %v2481 = vmax.f32 %v2449, 0.0
        %v2482 = vmax.f32 %v2450, 0.0
        %v2483 = vmax.f32 %v2451, 0.0
        %v2484 = vmax.f32 %v2452, 0.0
        %v2485 = vmax.f32 %v2453, 0.0
        %v2486 = vmax.f32 %v2454, 0.0
        %v2487 = vmax.f32 %v2455, 0.0
        %v2488 = vmax.f32 %v2456, 0.0
        %v2489 = vmax.f32 %v2457, 0.0
        %v2490 = vmax.f32 %v2458, 0.0
        %v2491 = vmax.f32 %v2459, 0.0
        %v2492 = vmax.f32 %v2460, 0.0
        %v2493 = vmax.f32 %v2461, 0.0
        %v2494 = vmax.f32 %v2462, 0.0
        %v2495 = vmax.f32 %v2463, 0.0
        %v2496 = vmax.f32 %v2464, 0.0
        %v2497 = vmax.f32 %v2465, 0.0
        %v2498 = vmax.f32 %v2466, 0.0
        %v2499 = vmax.f32 %v2467, 0.0
        %v2500 = vmax.f32 %v2468, 0.0
        %v2501 = vmax.f32 %v2469, 0.0
        %v2502 = vmax.f32 %v2470, 0.0
        %v2503 = vmin.f32 %v2471, 20.0
        %v2504 = vmin.f32 %v2472, 20.0
        %v2505 = vmin.f32 %v2473, 20.0
        %v2506 = vmin.f32 %v2474, 20.0
        %v2507 = vmin.f32 %v2475, 20.0
        %v2508 = vmin.f32 %v2476, 20.0
        %v2509 = vmin.f32 %v2477, 20.0
        %v2510 = vmin.f32 %v2478, 20.0
        %v2511 = vmin.f32 %v2479, 20.0
        %v2512 = vmin.f32 %v2480, 20.0
        %v2513 = vmin.f32 %v2481, 20.0
        %v2514 = vmin.f32 %v2482, 20.0
        %v2515 = vmin.f32 %v2483, 20.0
        %v2516 = vmin.f32 %v2484, 20.0
        %v2517 = vmin.f32 %v2485, 20.0
        %v2518 = vmin.f32 %v2486, 20.0
        %v2519 = vmin.f32 %v2487, 20.0
        %v2520 = vmin.f32 %v2488, 20.0
        %v2521 = vmin.f32 %v2489, 20.0
        %v2522 = vmin.f32 %v2490, 20.0
        %v2523 = vmin.f32 %v2491, 20.0
        %v2524 = vmin.f32 %v2492, 20.0
        %v2525 = vmin.f32 %v2493, 20.0
        %v2526 = vmin.f32 %v2494, 20.0
        %v2527 = vmin.f32 %v2495, 20.0
        %v2528 = vmin.f32 %v2496, 20.0
        %v2529 = vmin.f32 %v2497, 20.0
        %v2530 = vmin.f32 %v2498, 20.0
        %v2531 = vmin.f32 %v2499, 20.0
        %v2532 = vmin.f32 %v2500, 20.0
        %v2533 = vmin.f32 %v2501, 20.0
        %v2534 = vmin.f32 %v2502, 20.0
        %v2535 = vpack.c.bf16 %v2504, %v2503
        %v2536 = vpack.c.bf16 %v2506, %v2505
        %v2537 = vpack.c.bf16 %v2508, %v2507
        %v2538 = vpack.c.bf16 %v2510, %v2509
        %v2539 = vpack.c.bf16 %v2512, %v2511
        %v2540 = vpack.c.bf16 %v2514, %v2513
        %v2541 = vpack.c.bf16 %v2516, %v2515
        %v2542 = vpack.c.bf16 %v2518, %v2517
        %v2543 = vpack.c.bf16 %v2520, %v2519
        %v2544 = vpack.c.bf16 %v2522, %v2521
        %v2545 = vpack.c.bf16 %v2524, %v2523
        %v2546 = vpack.c.bf16 %v2526, %v2525
        %v2547 = vpack.c.bf16 %v2528, %v2527
        %v2548 = vpack.c.bf16 %v2530, %v2529
        %v2549 = vpack.c.bf16 %v2532, %v2531
        %v2550 = vpack.c.bf16 %v2534, %v2533
        %v2552 = vshrl.u32 %v2535, 16
        %v2554 = vrot.slane %v2552, 7
        %v2555 = vshll.u32 %v2535, 16
        %v2557 = vor.u32 %v2554, %v2555
        %v2559 = vshrl.u32 %v2536, 16
        %v2561 = vrot.slane %v2559, 7
        %v2562 = vshll.u32 %v2536, 16
        %v2564 = vor.u32 %v2561, %v2562
        %v2566 = vshrl.u32 %v2537, 16
        %v2568 = vrot.slane %v2566, 7
        %v2569 = vshll.u32 %v2537, 16
        %v2571 = vor.u32 %v2568, %v2569
        %v2573 = vshrl.u32 %v2538, 16
        %v2575 = vrot.slane %v2573, 7
        %v2576 = vshll.u32 %v2538, 16
        %v2578 = vor.u32 %v2575, %v2576
        %v2580 = vshrl.u32 %v2539, 16
        %v2582 = vrot.slane %v2580, 7
        %v2583 = vshll.u32 %v2539, 16
        %v2585 = vor.u32 %v2582, %v2583
        %v2587 = vshrl.u32 %v2540, 16
        %v2589 = vrot.slane %v2587, 7
        %v2590 = vshll.u32 %v2540, 16
        %v2592 = vor.u32 %v2589, %v2590
        %v2594 = vshrl.u32 %v2541, 16
        %v2596 = vrot.slane %v2594, 7
        %v2597 = vshll.u32 %v2541, 16
        %v2599 = vor.u32 %v2596, %v2597
        %v2601 = vshrl.u32 %v2542, 16
        %v2603 = vrot.slane %v2601, 7
        %v2604 = vshll.u32 %v2542, 16
        %v2606 = vor.u32 %v2603, %v2604
        %v2608 = vshrl.u32 %v2543, 16
        %v2610 = vrot.slane %v2608, 7
        %v2611 = vshll.u32 %v2543, 16
        %v2613 = vor.u32 %v2610, %v2611
        %v2615 = vshrl.u32 %v2544, 16
        %v2617 = vrot.slane %v2615, 7
        %v2618 = vshll.u32 %v2544, 16
        %v2620 = vor.u32 %v2617, %v2618
        %v2622 = vshrl.u32 %v2545, 16
        %v2624 = vrot.slane %v2622, 7
        %v2625 = vshll.u32 %v2545, 16
        %v2627 = vor.u32 %v2624, %v2625
        %v2629 = vshrl.u32 %v2546, 16
        %v2631 = vrot.slane %v2629, 7
        %v2632 = vshll.u32 %v2546, 16
        %v2634 = vor.u32 %v2631, %v2632
        %v2636 = vshrl.u32 %v2547, 16
        %v2638 = vrot.slane %v2636, 7
        %v2639 = vshll.u32 %v2547, 16
        %v2641 = vor.u32 %v2638, %v2639
        %v2643 = vshrl.u32 %v2548, 16
        %v2645 = vrot.slane %v2643, 7
        %v2646 = vshll.u32 %v2548, 16
        %v2648 = vor.u32 %v2645, %v2646
        %v2650 = vshrl.u32 %v2549, 16
        %v2652 = vrot.slane %v2650, 7
        %v2653 = vshll.u32 %v2549, 16
        %v2655 = vor.u32 %v2652, %v2653
        %v2657 = vshrl.u32 %v2550, 16
        %v2659 = vrot.slane %v2657, 7
        %v2660 = vshll.u32 %v2550, 16
        %v2662 = vor.u32 %v2659, %v2660
        %vm2695 = vcmask 1040384
        %vm2696 = vsmask.f32 256
        %vm2697 = vmand %vm2695, %vm2696
        %v2698 = vsel %vm2697, 0, %v2557
        %v2699 = vsel %vm2697, 0, %v2564
        %v2700 = vsel %vm2697, 0, %v2571
        %v2701 = vsel %vm2697, 0, %v2578
        %v2702 = vsel %vm2697, 0, %v2585
        %v2703 = vsel %vm2697, 0, %v2592
        %v2704 = vsel %vm2697, 0, %v2599
        %v2705 = vsel %vm2697, 0, %v2606
        %v2706 = vsel %vm2697, 0, %v2613
        %v2707 = vsel %vm2697, 0, %v2620
        %v2708 = vsel %vm2697, 0, %v2627
        %v2709 = vsel %vm2697, 0, %v2634
        %v2710 = vsel %vm2697, 0, %v2641
        %v2711 = vsel %vm2697, 0, %v2648
        %v2712 = vsel %vm2697, 0, %v2655
        %v2713 = vsel %vm2697, 0, %v2662
        %v2714 = vsel %vm2697, %v2554, 0
        %v2715 = vsel %vm2697, %v2561, 0
        %v2716 = vsel %vm2697, %v2568, 0
        %v2717 = vsel %vm2697, %v2575, 0
        %v2718 = vsel %vm2697, %v2582, 0
        %v2719 = vsel %vm2697, %v2589, 0
        %v2720 = vsel %vm2697, %v2596, 0
        %v2721 = vsel %vm2697, %v2603, 0
        %v2722 = vsel %vm2697, %v2610, 0
        %v2723 = vsel %vm2697, %v2617, 0
        %v2724 = vsel %vm2697, %v2624, 0
        %v2725 = vsel %vm2697, %v2631, 0
        %v2726 = vsel %vm2697, %v2638, 0
        %v2727 = vsel %vm2697, %v2645, 0
        %v2728 = vsel %vm2697, %v2652, 0
        %v2729 = vsel %vm2697, %v2659, 0
        %2730 = vst [vmem:[#allocation2] sm:$0xf] 0
        %2731 = vst [vmem:[#allocation2 + $0x4] sm:$0xf] 0
        %2732 = vst [vmem:[#allocation2 + $0x8] sm:$0x1] 0
        %s2733 = scalar_lea.vmem [#allocation2], 204
        %2734 = vst [vmem:[%s2733] sm:$0xf] 0
        %2735 = vst [vmem:[%s2733 + $0x4] sm:$0xf] 0
        %2736 = vst [vmem:[%s2733 + $0x8] sm:$0x1] 0
        %v2769 = vunpack.c.l.b16 %v2698
        %v2770 = vunpack.c.h.b16 %v2698
        %v2771 = vunpack.c.l.b16 %v2714
        %v2772 = vunpack.c.l.b16 %v2699
        %v2773 = vunpack.c.h.b16 %v2699
        %v2774 = vunpack.c.l.b16 %v2715
        %v2775 = vunpack.c.l.b16 %v2700
        %v2776 = vunpack.c.h.b16 %v2700
        %v2777 = vunpack.c.l.b16 %v2716
        %v2778 = vunpack.c.l.b16 %v2701
        %v2779 = vunpack.c.h.b16 %v2701
        %v2780 = vunpack.c.l.b16 %v2717
        %v2781 = vunpack.c.l.b16 %v2702
        %v2782 = vunpack.c.h.b16 %v2702
        %v2783 = vunpack.c.l.b16 %v2718
        %v2784 = vunpack.c.l.b16 %v2703
        %v2785 = vunpack.c.h.b16 %v2703
        %v2786 = vunpack.c.l.b16 %v2719
        %v2787 = vunpack.c.l.b16 %v2704
        %v2788 = vunpack.c.h.b16 %v2704
        %v2789 = vunpack.c.l.b16 %v2720
        %v2790 = vunpack.c.l.b16 %v2705
        %v2791 = vunpack.c.h.b16 %v2705
        %v2792 = vunpack.c.l.b16 %v2721
        %v2793 = vunpack.c.l.b16 %v2706
        %v2794 = vunpack.c.h.b16 %v2706
        %v2795 = vunpack.c.l.b16 %v2722
        %v2796 = vunpack.c.l.b16 %v2707
        %v2797 = vunpack.c.h.b16 %v2707
        %v2798 = vunpack.c.l.b16 %v2723
        %v2799 = vunpack.c.l.b16 %v2708
        %v2800 = vunpack.c.h.b16 %v2708
        %v2801 = vunpack.c.l.b16 %v2724
        %v2802 = vunpack.c.l.b16 %v2709
        %v2803 = vunpack.c.h.b16 %v2709
        %v2804 = vunpack.c.l.b16 %v2725
        %v2805 = vunpack.c.l.b16 %v2710
        %v2806 = vunpack.c.h.b16 %v2710
        %v2807 = vunpack.c.l.b16 %v2726
        %v2808 = vunpack.c.l.b16 %v2711
        %v2809 = vunpack.c.h.b16 %v2711
        %v2810 = vunpack.c.l.b16 %v2727
        %v2811 = vunpack.c.l.b16 %v2712
        %v2812 = vunpack.c.h.b16 %v2712
        %v2813 = vunpack.c.l.b16 %v2728
        %v2814 = vunpack.c.l.b16 %v2713
        %v2815 = vunpack.c.h.b16 %v2713
        %v2816 = vunpack.c.l.b16 %v2729
        %v2817 = vpack.c.b16 %v2769, %v2769
        %v2818 = vpack.c.b16 %v2770, %v2770
        %v2819 = vpack.c.b16 %v2771, %v2771
        %v2820 = vpack.c.b16 %v2772, %v2772
        %v2821 = vpack.c.b16 %v2773, %v2773
        %v2822 = vpack.c.b16 %v2774, %v2774
        %v2823 = vpack.c.b16 %v2775, %v2775
        %v2824 = vpack.c.b16 %v2776, %v2776
        %v2825 = vpack.c.b16 %v2777, %v2777
        %v2826 = vpack.c.b16 %v2778, %v2778
        %v2827 = vpack.c.b16 %v2779, %v2779
        %v2828 = vpack.c.b16 %v2780, %v2780
        %v2829 = vpack.c.b16 %v2781, %v2781
        %v2830 = vpack.c.b16 %v2782, %v2782
        %v2831 = vpack.c.b16 %v2783, %v2783
        %v2832 = vpack.c.b16 %v2784, %v2784
        %v2833 = vpack.c.b16 %v2785, %v2785
        %v2834 = vpack.c.b16 %v2786, %v2786
        %v2835 = vpack.c.b16 %v2787, %v2787
        %v2836 = vpack.c.b16 %v2788, %v2788
        %v2837 = vpack.c.b16 %v2789, %v2789
        %v2838 = vpack.c.b16 %v2790, %v2790
        %v2839 = vpack.c.b16 %v2791, %v2791
        %v2840 = vpack.c.b16 %v2792, %v2792
        %v2841 = vpack.c.b16 %v2793, %v2793
        %v2842 = vpack.c.b16 %v2794, %v2794
        %v2843 = vpack.c.b16 %v2795, %v2795
        %v2844 = vpack.c.b16 %v2796, %v2796
        %v2845 = vpack.c.b16 %v2797, %v2797
        %v2846 = vpack.c.b16 %v2798, %v2798
        %v2847 = vpack.c.b16 %v2799, %v2799
        %v2848 = vpack.c.b16 %v2800, %v2800
        %v2849 = vpack.c.b16 %v2801, %v2801
        %v2850 = vpack.c.b16 %v2802, %v2802
        %v2851 = vpack.c.b16 %v2803, %v2803
        %v2852 = vpack.c.b16 %v2804, %v2804
        %v2853 = vpack.c.b16 %v2805, %v2805
        %v2854 = vpack.c.b16 %v2806, %v2806
        %v2855 = vpack.c.b16 %v2807, %v2807
        %v2856 = vpack.c.b16 %v2808, %v2808
        %v2857 = vpack.c.b16 %v2809, %v2809
        %v2858 = vpack.c.b16 %v2810, %v2810
        %v2859 = vpack.c.b16 %v2811, %v2811
        %v2860 = vpack.c.b16 %v2812, %v2812
        %v2861 = vpack.c.b16 %v2813, %v2813
        %v2862 = vpack.c.b16 %v2814, %v2814
        %v2863 = vpack.c.b16 %v2815, %v2815
        %v2864 = vpack.c.b16 %v2816, %v2816
        %s2913 = scalar_lea.vmem [#allocation2], 12
        %2914 = vst [vmem:[%s2913] sm:$0xf] %v2817
        %2915 = vst [vmem:[%s2913 + $0x4] sm:$0xf] %v2818
        %2916 = vst [vmem:[%s2913 + $0x8] sm:$0x1] %v2819
        %2917 = vst [vmem:[%s2913 + $0xc] sm:$0xf] %v2820
        %2918 = vst [vmem:[%s2913 + $0x10] sm:$0xf] %v2821
        %2919 = vst [vmem:[%s2913 + $0x14] sm:$0x1] %v2822
        %2920 = vst [vmem:[%s2913 + $0x18] sm:$0xf] %v2823
        %2921 = vst [vmem:[%s2913 + $0x1c] sm:$0xf] %v2824
        %2922 = vst [vmem:[%s2913 + $0x20] sm:$0x1] %v2825
        %2923 = vst [vmem:[%s2913 + $0x24] sm:$0xf] %v2826
        %2924 = vst [vmem:[%s2913 + $0x28] sm:$0xf] %v2827
        %2925 = vst [vmem:[%s2913 + $0x2c] sm:$0x1] %v2828
        %2926 = vst [vmem:[%s2913 + $0x30] sm:$0xf] %v2829
        %2927 = vst [vmem:[%s2913 + $0x34] sm:$0xf] %v2830
        %2928 = vst [vmem:[%s2913 + $0x38] sm:$0x1] %v2831
        %2929 = vst [vmem:[%s2913 + $0x3c] sm:$0xf] %v2832
        %2930 = vst [vmem:[%s2913 + $0x40] sm:$0xf] %v2833
        %2931 = vst [vmem:[%s2913 + $0x44] sm:$0x1] %v2834
        %2932 = vst [vmem:[%s2913 + $0x48] sm:$0xf] %v2835
        %2933 = vst [vmem:[%s2913 + $0x4c] sm:$0xf] %v2836
        %2934 = vst [vmem:[%s2913 + $0x50] sm:$0x1] %v2837
        %2935 = vst [vmem:[%s2913 + $0x54] sm:$0xf] %v2838
        %2936 = vst [vmem:[%s2913 + $0x58] sm:$0xf] %v2839
        %2937 = vst [vmem:[%s2913 + $0x5c] sm:$0x1] %v2840
        %2938 = vst [vmem:[%s2913 + $0x60] sm:$0xf] %v2841
        %2939 = vst [vmem:[%s2913 + $0x64] sm:$0xf] %v2842
        %2940 = vst [vmem:[%s2913 + $0x68] sm:$0x1] %v2843
        %2941 = vst [vmem:[%s2913 + $0x6c] sm:$0xf] %v2844
        %2942 = vst [vmem:[%s2913 + $0x70] sm:$0xf] %v2845
        %2943 = vst [vmem:[%s2913 + $0x74] sm:$0x1] %v2846
        %2944 = vst [vmem:[%s2913 + $0x78] sm:$0xf] %v2847
        %2945 = vst [vmem:[%s2913 + $0x7c] sm:$0xf] %v2848
        %2946 = vst [vmem:[%s2913 + $0x80] sm:$0x1] %v2849
        %2947 = vst [vmem:[%s2913 + $0x84] sm:$0xf] %v2850
        %2948 = vst [vmem:[%s2913 + $0x88] sm:$0xf] %v2851
        %2949 = vst [vmem:[%s2913 + $0x8c] sm:$0x1] %v2852
        %2950 = vst [vmem:[%s2913 + $0x90] sm:$0xf] %v2853
        %2951 = vst [vmem:[%s2913 + $0x94] sm:$0xf] %v2854
        %2952 = vst [vmem:[%s2913 + $0x98] sm:$0x1] %v2855
        %2953 = vst [vmem:[%s2913 + $0x9c] sm:$0xf] %v2856
        %2954 = vst [vmem:[%s2913 + $0xa0] sm:$0xf] %v2857
        %2955 = vst [vmem:[%s2913 + $0xa4] sm:$0x1] %v2858
        %2956 = vst [vmem:[%s2913 + $0xa8] sm:$0xf] %v2859
        %2957 = vst [vmem:[%s2913 + $0xac] sm:$0xf] %v2860
        %2958 = vst [vmem:[%s2913 + $0xb0] sm:$0x1] %v2861
        %2959 = vst [vmem:[%s2913 + $0xb4] sm:$0xf] %v2862
        %2960 = vst [vmem:[%s2913 + $0xb8] sm:$0xf] %v2863
        %2961 = vst [vmem:[%s2913 + $0xbc] sm:$0x1] %v2864
        %v2962 = vld [vmem:[#allocation2] sm:$0xf]
        %v2963 = vld [vmem:[#allocation2 + $0x4] sm:$0xf]
        %v2964 = vld [vmem:[#allocation2 + $0x8] sm:$0x1]
        %v2965 = vld [vmem:[#allocation2 + $0xc] sm:$0xf]
        %v2966 = vld [vmem:[#allocation2 + $0x10] sm:$0xf]
        %v2967 = vld [vmem:[#allocation2 + $0x14] sm:$0x1]
        %v2968 = vld [vmem:[#allocation2 + $0x18] sm:$0xf]
        %v2969 = vld [vmem:[#allocation2 + $0x1c] sm:$0xf]
        %v2970 = vld [vmem:[#allocation2 + $0x20] sm:$0x1]
        %v2971 = vld [vmem:[#allocation2 + $0x24] sm:$0xf]
        %v2972 = vld [vmem:[#allocation2 + $0x28] sm:$0xf]
        %v2973 = vld [vmem:[#allocation2 + $0x2c] sm:$0x1]
        %v2974 = vld [vmem:[#allocation2 + $0x30] sm:$0xf]
        %v2975 = vld [vmem:[#allocation2 + $0x34] sm:$0xf]
        %v2976 = vld [vmem:[#allocation2 + $0x38] sm:$0x1]
        %v2977 = vld [vmem:[#allocation2 + $0x3c] sm:$0xf]
        %v2978 = vld [vmem:[#allocation2 + $0x40] sm:$0xf]
        %v2979 = vld [vmem:[#allocation2 + $0x44] sm:$0x1]
        %v2980 = vld [vmem:[#allocation2 + $0x48] sm:$0xf]
        %v2981 = vld [vmem:[#allocation2 + $0x4c] sm:$0xf]
        %v2982 = vld [vmem:[#allocation2 + $0x50] sm:$0x1]
        %v2983 = vld [vmem:[#allocation2 + $0x54] sm:$0xf]
        %v2984 = vld [vmem:[#allocation2 + $0x58] sm:$0xf]
        %v2985 = vld [vmem:[#allocation2 + $0x5c] sm:$0x1]
        %v2986 = vld [vmem:[#allocation2 + $0x60] sm:$0xf]
        %v2987 = vld [vmem:[#allocation2 + $0x64] sm:$0xf]
        %v2988 = vld [vmem:[#allocation2 + $0x68] sm:$0x1]
        %v2989 = vld [vmem:[#allocation2 + $0x6c] sm:$0xf]
        %v2990 = vld [vmem:[#allocation2 + $0x70] sm:$0xf]
        %v2991 = vld [vmem:[#allocation2 + $0x74] sm:$0x1]
        %v2992 = vld [vmem:[#allocation2 + $0x78] sm:$0xf]
        %v2993 = vld [vmem:[#allocation2 + $0x7c] sm:$0xf]
        %v2994 = vld [vmem:[#allocation2 + $0x80] sm:$0x1]
        %v2995 = vld [vmem:[#allocation2 + $0x84] sm:$0xf]
        %v2996 = vld [vmem:[#allocation2 + $0x88] sm:$0xf]
        %v2997 = vld [vmem:[#allocation2 + $0x8c] sm:$0x1]
        %v2998 = vld [vmem:[#allocation2 + $0x90] sm:$0xf]
        %v2999 = vld [vmem:[#allocation2 + $0x94] sm:$0xf]
        %v3000 = vld [vmem:[#allocation2 + $0x98] sm:$0x1]
        %v3001 = vld [vmem:[#allocation2 + $0x9c] sm:$0xf]
        %v3002 = vld [vmem:[#allocation2 + $0xa0] sm:$0xf]
        %v3003 = vld [vmem:[#allocation2 + $0xa4] sm:$0x1]
        %v3004 = vld [vmem:[#allocation2 + $0xa8] sm:$0xf]
        %v3005 = vld [vmem:[#allocation2 + $0xac] sm:$0xf]
        %v3006 = vld [vmem:[#allocation2 + $0xb0] sm:$0x1]
        %v3007 = vld [vmem:[#allocation2 + $0xb4] sm:$0xf]
        %v3008 = vld [vmem:[#allocation2 + $0xb8] sm:$0xf]
        %v3009 = vld [vmem:[#allocation2 + $0xbc] sm:$0x1]
        %v3010 = vld [vmem:[#allocation2 + $0xc0] sm:$0xf]
        %v3011 = vld [vmem:[#allocation2 + $0xc4] sm:$0xf]
        %v3012 = vld [vmem:[#allocation2 + $0xc8] sm:$0x1]
        %v3013 = vld [vmem:[#allocation2 + $0xcc] sm:$0xf]
        %v3014 = vld [vmem:[#allocation2 + $0xd0] sm:$0xf]
        %v3015 = vld [vmem:[#allocation2 + $0xd4] sm:$0x1]
        %v3052 = vunpack.c.l.b16 %v2962
        %v3053 = vunpack.c.l.b16 %v2963
        %v3054 = vunpack.c.l.b16 %v2965
        %v3055 = vunpack.c.l.b16 %v2966
        %v3056 = vunpack.c.l.b16 %v2968
        %v3057 = vunpack.c.l.b16 %v2969
        %v3058 = vunpack.c.l.b16 %v2971
        %v3059 = vunpack.c.l.b16 %v2972
        %v3060 = vunpack.c.l.b16 %v2974
        %v3061 = vunpack.c.l.b16 %v2975
        %v3062 = vunpack.c.l.b16 %v2977
        %v3063 = vunpack.c.l.b16 %v2978
        %v3064 = vunpack.c.l.b16 %v2980
        %v3065 = vunpack.c.l.b16 %v2981
        %v3066 = vunpack.c.l.b16 %v2983
        %v3067 = vunpack.c.l.b16 %v2984
        %v3068 = vunpack.c.l.b16 %v2986
        %v3069 = vunpack.c.l.b16 %v2987
        %v3070 = vunpack.c.l.b16 %v2989
        %v3071 = vunpack.c.l.b16 %v2990
        %v3072 = vunpack.c.l.b16 %v2992
        %v3073 = vunpack.c.l.b16 %v2993
        %v3074 = vunpack.c.l.b16 %v2995
        %v3075 = vunpack.c.l.b16 %v2996
        %v3076 = vunpack.c.l.b16 %v2998
        %v3077 = vunpack.c.l.b16 %v2999
        %v3078 = vunpack.c.l.b16 %v3001
        %v3079 = vunpack.c.l.b16 %v3002
        %v3080 = vunpack.c.l.b16 %v3004
        %v3081 = vunpack.c.l.b16 %v3005
        %v3082 = vunpack.c.l.b16 %v3007
        %v3083 = vunpack.c.l.b16 %v3008
        %v3084 = vunpack.c.l.b16 %v3010
        %v3085 = vunpack.c.l.b16 %v3011
        %v3086 = vunpack.c.l.b16 %v3013
        %v3087 = vunpack.c.l.b16 %v3014
        %v3088 = vpack.c.b16 %v3053, %v3052
        %v3089 = vpack.c.b16 %v3055, %v3054
        %v3090 = vpack.c.b16 %v3057, %v3056
        %v3091 = vpack.c.b16 %v3059, %v3058
        %v3092 = vpack.c.b16 %v3061, %v3060
        %v3093 = vpack.c.b16 %v3063, %v3062
        %v3094 = vpack.c.b16 %v3065, %v3064
        %v3095 = vpack.c.b16 %v3067, %v3066
        %v3096 = vpack.c.b16 %v3069, %v3068
        %v3097 = vpack.c.b16 %v3071, %v3070
        %v3098 = vpack.c.b16 %v3073, %v3072
        %v3099 = vpack.c.b16 %v3075, %v3074
        %v3100 = vpack.c.b16 %v3077, %v3076
        %v3101 = vpack.c.b16 %v3079, %v3078
        %v3102 = vpack.c.b16 %v3081, %v3080
        %v3103 = vpack.c.b16 %v3083, %v3082
        %v3104 = vpack.c.b16 %v3085, %v3084
        %v3105 = vpack.c.b16 %v3087, %v3086
        %v3142 = vunpack.c.l.b16 %v2964
        %v3143 = vunpack.c.l.b16 %v2967
        %v3144 = vunpack.c.l.b16 %v2970
        %v3145 = vunpack.c.l.b16 %v2973
        %v3146 = vunpack.c.l.b16 %v2976
        %v3147 = vunpack.c.l.b16 %v2979
        %v3148 = vunpack.c.l.b16 %v2982
        %v3149 = vunpack.c.l.b16 %v2985
        %v3150 = vunpack.c.l.b16 %v2988
        %v3151 = vunpack.c.l.b16 %v2991
        %v3152 = vunpack.c.l.b16 %v2994
        %v3153 = vunpack.c.l.b16 %v2997
        %v3154 = vunpack.c.l.b16 %v3000
        %v3155 = vunpack.c.l.b16 %v3003
        %v3156 = vunpack.c.l.b16 %v3006
        %v3157 = vunpack.c.l.b16 %v3009
        %v3158 = vunpack.c.l.b16 %v3012
        %v3159 = vunpack.c.l.b16 %v3015
        %v3160 = vpack.c.b16 %v3142, %v3142
        %v3161 = vpack.c.b16 %v3143, %v3143
        %v3162 = vpack.c.b16 %v3144, %v3144
        %v3163 = vpack.c.b16 %v3145, %v3145
        %v3164 = vpack.c.b16 %v3146, %v3146
        %v3165 = vpack.c.b16 %v3147, %v3147
        %v3166 = vpack.c.b16 %v3148, %v3148
        %v3167 = vpack.c.b16 %v3149, %v3149
        %v3168 = vpack.c.b16 %v3150, %v3150
        %v3169 = vpack.c.b16 %v3151, %v3151
        %v3170 = vpack.c.b16 %v3152, %v3152
        %v3171 = vpack.c.b16 %v3153, %v3153
        %v3172 = vpack.c.b16 %v3154, %v3154
        %v3173 = vpack.c.b16 %v3155, %v3155
        %v3174 = vpack.c.b16 %v3156, %v3156
        %v3175 = vpack.c.b16 %v3157, %v3157
        %v3176 = vpack.c.b16 %v3158, %v3158
        %v3177 = vpack.c.b16 %v3159, %v3159
        %v3179 = vshrl.u32 %v3088, 16
        %v3181 = vshll.u32 %v3088, 16
        %v3183 = vrot.slane %v3181, 1
        %v3184 = vor.u32 %v3179, %v3183
        %v3186 = vshll.u32 %v3160, 16
        %v3188 = vrot.slane %v3186, 1
        %v3189 = vsel %vm509, %v3184, %v3188
        %v3191 = vshrl.u32 %v3089, 16
        %v3193 = vshll.u32 %v3089, 16
        %v3195 = vrot.slane %v3193, 1
        %v3196 = vor.u32 %v3191, %v3195
        %v3198 = vshll.u32 %v3161, 16
        %v3200 = vrot.slane %v3198, 1
        %v3201 = vsel %vm509, %v3196, %v3200
        %v3203 = vshrl.u32 %v3090, 16
        %v3205 = vshll.u32 %v3090, 16
        %v3207 = vrot.slane %v3205, 1
        %v3208 = vor.u32 %v3203, %v3207
        %v3210 = vshll.u32 %v3162, 16
        %v3212 = vrot.slane %v3210, 1
        %v3213 = vsel %vm509, %v3208, %v3212
        %v3215 = vshrl.u32 %v3091, 16
        %v3217 = vshll.u32 %v3091, 16
        %v3219 = vrot.slane %v3217, 1
        %v3220 = vor.u32 %v3215, %v3219
        %v3222 = vshll.u32 %v3163, 16
        %v3224 = vrot.slane %v3222, 1
        %v3225 = vsel %vm509, %v3220, %v3224
        %v3227 = vshrl.u32 %v3092, 16
        %v3229 = vshll.u32 %v3092, 16
        %v3231 = vrot.slane %v3229, 1
        %v3232 = vor.u32 %v3227, %v3231
        %v3234 = vshll.u32 %v3164, 16
        %v3236 = vrot.slane %v3234, 1
        %v3237 = vsel %vm509, %v3232, %v3236
        %v3239 = vshrl.u32 %v3093, 16
        %v3241 = vshll.u32 %v3093, 16
        %v3243 = vrot.slane %v3241, 1
        %v3244 = vor.u32 %v3239, %v3243
        %v3246 = vshll.u32 %v3165, 16
        %v3248 = vrot.slane %v3246, 1
        %v3249 = vsel %vm509, %v3244, %v3248
        %v3251 = vshrl.u32 %v3094, 16
        %v3253 = vshll.u32 %v3094, 16
        %v3255 = vrot.slane %v3253, 1
        %v3256 = vor.u32 %v3251, %v3255
        %v3258 = vshll.u32 %v3166, 16
        %v3260 = vrot.slane %v3258, 1
        %v3261 = vsel %vm509, %v3256, %v3260
        %v3263 = vshrl.u32 %v3095, 16
        %v3265 = vshll.u32 %v3095, 16
        %v3267 = vrot.slane %v3265, 1
        %v3268 = vor.u32 %v3263, %v3267
        %v3270 = vshll.u32 %v3167, 16
        %v3272 = vrot.slane %v3270, 1
        %v3273 = vsel %vm509, %v3268, %v3272
        %v3275 = vshrl.u32 %v3096, 16
        %v3277 = vshll.u32 %v3096, 16
        %v3279 = vrot.slane %v3277, 1
        %v3280 = vor.u32 %v3275, %v3279
        %v3282 = vshll.u32 %v3168, 16
        %v3284 = vrot.slane %v3282, 1
        %v3285 = vsel %vm509, %v3280, %v3284
        %v3287 = vshrl.u32 %v3097, 16
        %v3289 = vshll.u32 %v3097, 16
        %v3291 = vrot.slane %v3289, 1
        %v3292 = vor.u32 %v3287, %v3291
        %v3294 = vshll.u32 %v3169, 16
        %v3296 = vrot.slane %v3294, 1
        %v3297 = vsel %vm509, %v3292, %v3296
        %v3299 = vshrl.u32 %v3098, 16
        %v3301 = vshll.u32 %v3098, 16
        %v3303 = vrot.slane %v3301, 1
        %v3304 = vor.u32 %v3299, %v3303
        %v3306 = vshll.u32 %v3170, 16
        %v3308 = vrot.slane %v3306, 1
        %v3309 = vsel %vm509, %v3304, %v3308
        %v3311 = vshrl.u32 %v3099, 16
        %v3313 = vshll.u32 %v3099, 16
        %v3315 = vrot.slane %v3313, 1
        %v3316 = vor.u32 %v3311, %v3315
        %v3318 = vshll.u32 %v3171, 16
        %v3320 = vrot.slane %v3318, 1
        %v3321 = vsel %vm509, %v3316, %v3320
        %v3323 = vshrl.u32 %v3100, 16
        %v3325 = vshll.u32 %v3100, 16
        %v3327 = vrot.slane %v3325, 1
        %v3328 = vor.u32 %v3323, %v3327
        %v3330 = vshll.u32 %v3172, 16
        %v3332 = vrot.slane %v3330, 1
        %v3333 = vsel %vm509, %v3328, %v3332
        %v3335 = vshrl.u32 %v3101, 16
        %v3337 = vshll.u32 %v3101, 16
        %v3339 = vrot.slane %v3337, 1
        %v3340 = vor.u32 %v3335, %v3339
        %v3342 = vshll.u32 %v3173, 16
        %v3344 = vrot.slane %v3342, 1
        %v3345 = vsel %vm509, %v3340, %v3344
        %v3347 = vshrl.u32 %v3102, 16
        %v3349 = vshll.u32 %v3102, 16
        %v3351 = vrot.slane %v3349, 1
        %v3352 = vor.u32 %v3347, %v3351
        %v3354 = vshll.u32 %v3174, 16
        %v3356 = vrot.slane %v3354, 1
        %v3357 = vsel %vm509, %v3352, %v3356
        %v3359 = vshrl.u32 %v3103, 16
        %v3361 = vshll.u32 %v3103, 16
        %v3363 = vrot.slane %v3361, 1
        %v3364 = vor.u32 %v3359, %v3363
        %v3366 = vshll.u32 %v3175, 16
        %v3368 = vrot.slane %v3366, 1
        %v3369 = vsel %vm509, %v3364, %v3368
        %v3371 = vshrl.u32 %v3104, 16
        %v3373 = vshll.u32 %v3104, 16
        %v3375 = vrot.slane %v3373, 1
        %v3376 = vor.u32 %v3371, %v3375
        %v3378 = vshll.u32 %v3176, 16
        %v3380 = vrot.slane %v3378, 1
        %v3381 = vsel %vm509, %v3376, %v3380
        %v3383 = vshrl.u32 %v3105, 16
        %v3385 = vshll.u32 %v3105, 16
        %v3387 = vrot.slane %v3385, 1
        %v3388 = vor.u32 %v3383, %v3387
        %v3390 = vshll.u32 %v3177, 16
        %v3392 = vrot.slane %v3390, 1
        %v3393 = vsel %vm509, %v3388, %v3392
        %v3412 = vrot.slane %v3088, 1
        %v3413 = vrot.slane %v3160, 1
        %v3414 = vsel %vm744, %v3412, %v3413
        %v3415 = vrot.slane %v3089, 1
        %v3416 = vrot.slane %v3161, 1
        %v3417 = vsel %vm744, %v3415, %v3416
        %v3418 = vrot.slane %v3090, 1
        %v3419 = vrot.slane %v3162, 1
        %v3420 = vsel %vm744, %v3418, %v3419
        %v3421 = vrot.slane %v3091, 1
        %v3422 = vrot.slane %v3163, 1
        %v3423 = vsel %vm744, %v3421, %v3422
        %v3424 = vrot.slane %v3092, 1
        %v3425 = vrot.slane %v3164, 1
        %v3426 = vsel %vm744, %v3424, %v3425
        %v3427 = vrot.slane %v3093, 1
        %v3428 = vrot.slane %v3165, 1
        %v3429 = vsel %vm744, %v3427, %v3428
        %v3430 = vrot.slane %v3094, 1
        %v3431 = vrot.slane %v3166, 1
        %v3432 = vsel %vm744, %v3430, %v3431
        %v3433 = vrot.slane %v3095, 1
        %v3434 = vrot.slane %v3167, 1
        %v3435 = vsel %vm744, %v3433, %v3434
        %v3436 = vrot.slane %v3096, 1
        %v3437 = vrot.slane %v3168, 1
        %v3438 = vsel %vm744, %v3436, %v3437
        %v3439 = vrot.slane %v3097, 1
        %v3440 = vrot.slane %v3169, 1
        %v3441 = vsel %vm744, %v3439, %v3440
        %v3442 = vrot.slane %v3098, 1
        %v3443 = vrot.slane %v3170, 1
        %v3444 = vsel %vm744, %v3442, %v3443
        %v3445 = vrot.slane %v3099, 1
        %v3446 = vrot.slane %v3171, 1
        %v3447 = vsel %vm744, %v3445, %v3446
        %v3448 = vrot.slane %v3100, 1
        %v3449 = vrot.slane %v3172, 1
        %v3450 = vsel %vm744, %v3448, %v3449
        %v3451 = vrot.slane %v3101, 1
        %v3452 = vrot.slane %v3173, 1
        %v3453 = vsel %vm744, %v3451, %v3452
        %v3454 = vrot.slane %v3102, 1
        %v3455 = vrot.slane %v3174, 1
        %v3456 = vsel %vm744, %v3454, %v3455
        %v3457 = vrot.slane %v3103, 1
        %v3458 = vrot.slane %v3175, 1
        %v3459 = vsel %vm744, %v3457, %v3458
        %v3460 = vrot.slane %v3104, 1
        %v3461 = vrot.slane %v3176, 1
        %v3462 = vsel %vm744, %v3460, %v3461
        %v3463 = vrot.slane %v3105, 1
        %v3464 = vrot.slane %v3177, 1
        %v3465 = vsel %vm744, %v3463, %v3464
        %v3484 = vld [vmem:[#allocation3] sm:$0xf]
        %v3485 = vld [vmem:[#allocation3 + $0x4] sm:$0xf]
        %v3486 = vld [vmem:[#allocation3 + $0x8] sm:$0xf]
        %v3487 = vld [vmem:[#allocation3 + $0xc] sm:$0xf]
        %v3488 = vld [vmem:[#allocation3 + $0x10] sm:$0xf]
        %v3489 = vld [vmem:[#allocation3 + $0x14] sm:$0xf]
        %v3490 = vld [vmem:[#allocation3 + $0x18] sm:$0xf]
        %v3491 = vld [vmem:[#allocation3 + $0x1c] sm:$0xf]
        %v3492 = vld [vmem:[#allocation3 + $0x20] sm:$0xf]
        %v3493 = vld [vmem:[#allocation3 + $0x24] sm:$0xf]
        %v3494 = vld [vmem:[#allocation3 + $0x28] sm:$0xf]
        %v3495 = vld [vmem:[#allocation3 + $0x2c] sm:$0xf]
        %v3496 = vld [vmem:[#allocation3 + $0x30] sm:$0xf]
        %v3497 = vld [vmem:[#allocation3 + $0x34] sm:$0xf]
        %v3498 = vld [vmem:[#allocation3 + $0x38] sm:$0xf]
        %v3499 = vld [vmem:[#allocation3 + $0x3c] sm:$0xf]
        %v3500 = vld [vmem:[#allocation3 + $0x40] sm:$0xf]
        %v3501 = vld [vmem:[#allocation3 + $0x44] sm:$0xf]
        %v3502 = vld [vmem:[#allocation3 + $0x48] sm:$0xf]
        %v3503 = vld [vmem:[#allocation3 + $0x4c] sm:$0xf]
        %v3504 = vld [vmem:[#allocation3 + $0x50] sm:$0xf]
        %v3505 = vld [vmem:[#allocation3 + $0x54] sm:$0xf]
        %v3506 = vld [vmem:[#allocation3 + $0x58] sm:$0xf]
        %v3507 = vld [vmem:[#allocation3 + $0x5c] sm:$0xf]
        %v3508 = vld [vmem:[#allocation3 + $0x60] sm:$0xf]
        %v3509 = vld [vmem:[#allocation3 + $0x64] sm:$0xf]
        %v3510 = vld [vmem:[#allocation3 + $0x68] sm:$0xf]
        %v3511 = vld [vmem:[#allocation3 + $0x6c] sm:$0xf]
        %v3512 = vld [vmem:[#allocation3 + $0x70] sm:$0xf]
        %v3513 = vld [vmem:[#allocation3 + $0x74] sm:$0xf]
        %v3514 = vld [vmem:[#allocation3 + $0x78] sm:$0xf]
        %v3515 = vld [vmem:[#allocation3 + $0x7c] sm:$0xf]
        %v3516 = vld [vmem:[#allocation3 + $0x80] sm:$0xf]
        %v3517 = vld [vmem:[#allocation3 + $0x84] sm:$0xf]
        %v3518 = vld [vmem:[#allocation3 + $0x88] sm:$0xf]
        %v3519 = vld [vmem:[#allocation3 + $0x8c] sm:$0xf]
        %v3520 = vld [vmem:[#allocation3 + $0x90] sm:$0xf]
        %v3521 = vld [vmem:[#allocation3 + $0x94] sm:$0xf]
        %v3522 = vld [vmem:[#allocation3 + $0x98] sm:$0xf]
        %v3523 = vld [vmem:[#allocation3 + $0x9c] sm:$0xf]
        %v3524 = vld [vmem:[#allocation3 + $0xa0] sm:$0xf]
        %v3525 = vld [vmem:[#allocation3 + $0xa4] sm:$0xf]
        %v3526 = vld [vmem:[#allocation3 + $0xa8] sm:$0xf]
        %v3527 = vld [vmem:[#allocation3 + $0xac] sm:$0xf]
        %v3528 = vld [vmem:[#allocation3 + $0xb0] sm:$0xf]
        %v3529 = vld [vmem:[#allocation3 + $0xb4] sm:$0xf]
        %v3530 = vld [vmem:[#allocation3 + $0xb8] sm:$0xf]
        %v3531 = vld [vmem:[#allocation3 + $0xbc] sm:$0xf]
        %s3532 = scalar_lea.vmem [#allocation3], 192
        %v3533 = vld [vmem:[%s3532] sm:$0xf]
        %v3534 = vld [vmem:[%s3532 + $0x4] sm:$0xf]
        %v3535 = vld [vmem:[%s3532 + $0x8] sm:$0xf]
        %v3536 = vld [vmem:[%s3532 + $0xc] sm:$0xf]
        %v3537 = vld [vmem:[%s3532 + $0x10] sm:$0xf]
        %v3538 = vld [vmem:[%s3532 + $0x14] sm:$0xf]
        %v3539 = vld [vmem:[%s3532 + $0x18] sm:$0xf]
        %v3540 = vld [vmem:[%s3532 + $0x1c] sm:$0xf]
        %v3541 = vld [vmem:[%s3532 + $0x20] sm:$0xf]
        %v3542 = vld [vmem:[%s3532 + $0x24] sm:$0xf]
        %v3543 = vld [vmem:[%s3532 + $0x28] sm:$0xf]
        %v3544 = vld [vmem:[%s3532 + $0x2c] sm:$0xf]
        %v3545 = vld [vmem:[%s3532 + $0x30] sm:$0xf]
        %v3546 = vld [vmem:[%s3532 + $0x34] sm:$0xf]
        %v3547 = vld [vmem:[%s3532 + $0x38] sm:$0xf]
        %v3548 = vld [vmem:[%s3532 + $0x3c] sm:$0xf]
        %v3549 = vld [vmem:[%s3532 + $0x40] sm:$0xf]
        %v3550 = vld [vmem:[%s3532 + $0x44] sm:$0xf]
        %v3551 = vld [vmem:[%s3532 + $0x48] sm:$0xf]
        %v3552 = vld [vmem:[%s3532 + $0x4c] sm:$0xf]
        %v3553 = vld [vmem:[%s3532 + $0x50] sm:$0xf]
        %v3554 = vld [vmem:[%s3532 + $0x54] sm:$0xf]
        %v3555 = vld [vmem:[%s3532 + $0x58] sm:$0xf]
        %v3556 = vld [vmem:[%s3532 + $0x5c] sm:$0xf]
        %v3557 = vld [vmem:[%s3532 + $0x60] sm:$0xf]
        %v3558 = vld [vmem:[%s3532 + $0x64] sm:$0xf]
        %v3559 = vld [vmem:[%s3532 + $0x68] sm:$0xf]
        %v3560 = vld [vmem:[%s3532 + $0x6c] sm:$0xf]
        %v3561 = vld [vmem:[%s3532 + $0x70] sm:$0xf]
        %v3562 = vld [vmem:[%s3532 + $0x74] sm:$0xf]
        %v3563 = vld [vmem:[%s3532 + $0x78] sm:$0xf]
        %v3564 = vld [vmem:[%s3532 + $0x7c] sm:$0xf]
        %v3565 = vld [vmem:[%s3532 + $0x80] sm:$0xf]
        %v3566 = vld [vmem:[%s3532 + $0x84] sm:$0xf]
        %v3567 = vld [vmem:[%s3532 + $0x88] sm:$0xf]
        %v3568 = vld [vmem:[%s3532 + $0x8c] sm:$0xf]
        %v3569 = vld [vmem:[%s3532 + $0x90] sm:$0xf]
        %v3570 = vld [vmem:[%s3532 + $0x94] sm:$0xf]
        %v3571 = vld [vmem:[%s3532 + $0x98] sm:$0xf]
        %v3572 = vld [vmem:[%s3532 + $0x9c] sm:$0xf]
        %v3573 = vld [vmem:[%s3532 + $0xa0] sm:$0xf]
        %v3574 = vld [vmem:[%s3532 + $0xa4] sm:$0xf]
        %v3575 = vld [vmem:[%s3532 + $0xa8] sm:$0xf]
        %v3576 = vld [vmem:[%s3532 + $0xac] sm:$0xf]
        %v3577 = vld [vmem:[%s3532 + $0xb0] sm:$0xf]
        %v3578 = vld [vmem:[%s3532 + $0xb4] sm:$0xf]
        %v3579 = vld [vmem:[%s3532 + $0xb8] sm:$0xf]
        %v3580 = vld [vmem:[%s3532 + $0xbc] sm:$0xf]
        %v3629 = vunpack.c.l.b16 %v3533
        %v3630 = vunpack.c.l.b16 %v3534
        %v3631 = vunpack.c.l.b16 %v3535
        %v3632 = vunpack.c.l.b16 %v3536
        %v3633 = vunpack.c.l.b16 %v3537
        %v3634 = vunpack.c.l.b16 %v3538
        %v3635 = vunpack.c.l.b16 %v3539
        %v3636 = vunpack.c.l.b16 %v3540
        %v3637 = vunpack.c.l.b16 %v3541
        %v3638 = vunpack.c.l.b16 %v3542
        %v3639 = vunpack.c.l.b16 %v3543
        %v3640 = vunpack.c.l.b16 %v3544
        %v3641 = vunpack.c.l.b16 %v3545
        %v3642 = vunpack.c.l.b16 %v3546
        %v3643 = vunpack.c.l.b16 %v3547
        %v3644 = vunpack.c.l.b16 %v3548
        %v3645 = vunpack.c.l.b16 %v3549
        %v3646 = vunpack.c.l.b16 %v3550
        %v3647 = vunpack.c.l.b16 %v3551
        %v3648 = vunpack.c.l.b16 %v3552
        %v3649 = vunpack.c.l.b16 %v3553
        %v3650 = vunpack.c.l.b16 %v3554
        %v3651 = vunpack.c.l.b16 %v3555
        %v3652 = vunpack.c.l.b16 %v3556
        %v3653 = vunpack.c.l.b16 %v3557
        %v3654 = vunpack.c.l.b16 %v3558
        %v3655 = vunpack.c.l.b16 %v3559
        %v3656 = vunpack.c.l.b16 %v3560
        %v3657 = vunpack.c.l.b16 %v3561
        %v3658 = vunpack.c.l.b16 %v3562
        %v3659 = vunpack.c.l.b16 %v3563
        %v3660 = vunpack.c.l.b16 %v3564
        %v3661 = vunpack.c.l.b16 %v3565
        %v3662 = vunpack.c.l.b16 %v3566
        %v3663 = vunpack.c.l.b16 %v3567
        %v3664 = vunpack.c.l.b16 %v3568
        %v3665 = vunpack.c.l.b16 %v3569
        %v3666 = vunpack.c.l.b16 %v3570
        %v3667 = vunpack.c.l.b16 %v3571
        %v3668 = vunpack.c.l.b16 %v3572
        %v3669 = vunpack.c.l.b16 %v3573
        %v3670 = vunpack.c.l.b16 %v3574
        %v3671 = vunpack.c.l.b16 %v3575
        %v3672 = vunpack.c.l.b16 %v3576
        %v3673 = vunpack.c.l.b16 %v3577
        %v3674 = vunpack.c.l.b16 %v3578
        %v3675 = vunpack.c.l.b16 %v3579
        %v3676 = vunpack.c.l.b16 %v3580
        %v3677 = vpack.c.b16 %v3630, %v3629
        %v3678 = vpack.c.b16 %v3632, %v3631
        %v3679 = vpack.c.b16 %v3634, %v3633
        %v3680 = vpack.c.b16 %v3636, %v3635
        %v3681 = vpack.c.b16 %v3638, %v3637
        %v3682 = vpack.c.b16 %v3640, %v3639
        %v3683 = vpack.c.b16 %v3642, %v3641
        %v3684 = vpack.c.b16 %v3644, %v3643
        %v3685 = vpack.c.b16 %v3646, %v3645
        %v3686 = vpack.c.b16 %v3648, %v3647
        %v3687 = vpack.c.b16 %v3650, %v3649
        %v3688 = vpack.c.b16 %v3652, %v3651
        %v3689 = vpack.c.b16 %v3654, %v3653
        %v3690 = vpack.c.b16 %v3656, %v3655
        %v3691 = vpack.c.b16 %v3658, %v3657
        %v3692 = vpack.c.b16 %v3660, %v3659
        %v3693 = vpack.c.b16 %v3662, %v3661
        %v3694 = vpack.c.b16 %v3664, %v3663
        %v3695 = vpack.c.b16 %v3666, %v3665
        %v3696 = vpack.c.b16 %v3668, %v3667
        %v3697 = vpack.c.b16 %v3670, %v3669
        %v3698 = vpack.c.b16 %v3672, %v3671
        %v3699 = vpack.c.b16 %v3674, %v3673
        %v3700 = vpack.c.b16 %v3676, %v3675
        %3725 = vmatprep.subr.bf16.mxu0 0
        %3726 = vmatpush1.bf16.msra.mxu0 %v3677
        %3727 = vmatprep.subr.bf16.mxu0 0
        %3728 = vmatpush1.bf16.msra.mxu0 %v3678
        %3729 = vmatprep.subr.bf16.mxu0 0
        %3730 = vmatpush1.bf16.msra.mxu0 %v3679
        %3731 = vmatprep.subr.bf16.mxu0 0
        %3732 = vmatpush1.bf16.msra.mxu0 %v3680
        %3733 = vmatprep.subr.bf16.mxu0 0
        %3734 = vmatpush1.bf16.msra.mxu0 %v3681
        %3735 = vmatprep.subr.bf16.mxu0 0
        %3736 = vmatpush1.bf16.msra.mxu0 %v3682
        %3737 = vmatprep.subr.bf16.mxu0 0
        %3738 = vmatpush1.bf16.msra.mxu0 %v3683
        %3739 = vmatprep.subr.bf16.mxu0 0
        %3740 = vmatpush1.bf16.msra.mxu0 %v3684
        %3741 = vmatprep.subr.bf16.mxu0 0
        %3742 = vmatpush1.bf16.msra.mxu0 %v3685
        %3743 = vmatprep.subr.bf16.mxu0 0
        %3744 = vmatpush1.bf16.msra.mxu0 %v3686
        %3745 = vmatprep.subr.bf16.mxu0 0
        %3746 = vmatpush1.bf16.msra.mxu0 %v3687
        %3747 = vmatprep.subr.bf16.mxu0 0
        %3748 = vmatpush1.bf16.msra.mxu0 %v3688
        %3749 = vmatprep.subr.bf16.mxu0 0
        %3750 = vmatpush1.bf16.msra.mxu0 %v3689
        %3751 = vmatprep.subr.bf16.mxu0 0
        %3752 = vmatpush1.bf16.msra.mxu0 %v3690
        %3753 = vmatprep.subr.bf16.mxu0 0
        %3754 = vmatpush1.bf16.msra.mxu0 %v3691
        %3755 = vmatprep.subr.bf16.mxu0 0
        %3756 = vmatpush1.bf16.msra.mxu0 %v3692
        %3757 = vmatprep.mubr.bf16.mxu0 %v3201
        %3758 = vmatmul.mubr.bf16.gmra.mrb[0].mxu0 %v3089
        %v3759 = vpop.f32.mrb[0].mxu0
        %v3760 = vadd.f32 0.0, %v3759
        %v3761 = vpop.f32.mrb[0].mxu0
        %v3762 = vpop.f32.mrb[0].mxu0
        %v3763 = vadd.f32 0.0, %v3762
        %v3764 = vpop.f32.mrb[0].mxu0
        %3765 = vmatprep.mubr.bf16.mxu0 %v3213
        %3766 = vmatmul.mubr.bf16.gmra.mrb[0].mxu0 %v3090
        %v3767 = vpop.f32.mrb[0].mxu0
        %v3768 = vadd.f32 0.0, %v3767
        %v3769 = vpop.f32.mrb[0].mxu0
        %v3770 = vpop.f32.mrb[0].mxu0
        %v3771 = vadd.f32 0.0, %v3770
        %v3772 = vpop.f32.mrb[0].mxu0
        %3773 = vmatprep.mubr.bf16.mxu0 %v3225
        %3774 = vmatmul.mubr.bf16.gmra.mrb[0].mxu0 %v3091
        %v3775 = vpop.f32.mrb[0].mxu0
        %v3776 = vadd.f32 0.0, %v3775
        %v3777 = vpop.f32.mrb[0].mxu0
        %v3778 = vpop.f32.mrb[0].mxu0
        %v3779 = vadd.f32 0.0, %v3778
        %v3780 = vpop.f32.mrb[0].mxu0
        %3781 = vmatprep.mubr.bf16.mxu0 %v3237
        %3782 = vmatmul.mubr.bf16.gmra.mrb[0].mxu0 %v3092
        %v3783 = vpop.f32.mrb[0].mxu0
        %v3784 = vadd.f32 0.0, %v3783
        %v3785 = vpop.f32.mrb[0].mxu0
        %v3786 = vpop.f32.mrb[0].mxu0
        %v3787 = vadd.f32 0.0, %v3786
        %v3788 = vpop.f32.mrb[0].mxu0
        %3789 = vmatprep.mubr.bf16.mxu0 %v3249
        %3790 = vmatmul.mubr.bf16.gmra.mrb[0].mxu0 %v3093
        %v3791 = vpop.f32.mrb[0].mxu0
        %v3792 = vadd.f32 0.0, %v3791
        %v3793 = vpop.f32.mrb[0].mxu0
        %v3794 = vpop.f32.mrb[0].mxu0
        %v3795 = vadd.f32 0.0, %v3794
        %v3796 = vpop.f32.mrb[0].mxu0
        %3797 = vmatprep.mubr.bf16.mxu0 %v3261
        %3798 = vmatmul.mubr.bf16.gmra.mrb[0].mxu0 %v3094
        %v3799 = vpop.f32.mrb[0].mxu0
        %v3800 = vadd.f32 0.0, %v3799
        %v3801 = vpop.f32.mrb[0].mxu0
        %v3802 = vpop.f32.mrb[0].mxu0
        %v3803 = vadd.f32 0.0, %v3802
        %v3804 = vpop.f32.mrb[0].mxu0
        %3805 = vmatprep.mubr.bf16.mxu0 %v3273
        %3806 = vmatmul.mubr.bf16.gmra.mrb[0].mxu0 %v3095
        %v3807 = vpop.f32.mrb[0].mxu0
        %v3808 = vadd.f32 0.0, %v3807
        %v3809 = vpop.f32.mrb[0].mxu0
        %v3810 = vpop.f32.mrb[0].mxu0
        %v3811 = vadd.f32 0.0, %v3810
        %v3812 = vpop.f32.mrb[0].mxu0
        %3813 = vmatprep.mubr.bf16.mxu0 %v3285
        %3814 = vmatmul.mubr.bf16.gmra.mrb[0].mxu0 %v3096
        %v3815 = vpop.f32.mrb[0].mxu0
        %v3816 = vadd.f32 0.0, %v3815
        %v3817 = vpop.f32.mrb[0].mxu0
        %v3818 = vpop.f32.mrb[0].mxu0
        %v3819 = vadd.f32 0.0, %v3818
        %v3820 = vpop.f32.mrb[0].mxu0
        %3821 = vmatprep.mubr.bf16.mxu0 %v3297
        %3822 = vmatmul.mubr.bf16.gmra.mrb[0].mxu0 %v3097
        %v3823 = vpop.f32.mrb[0].mxu0
        %v3824 = vadd.f32 0.0, %v3823
        %v3825 = vpop.f32.mrb[0].mxu0
        %v3826 = vpop.f32.mrb[0].mxu0
        %v3827 = vadd.f32 0.0, %v3826
        %v3828 = vpop.f32.mrb[0].mxu0
        %3829 = vmatprep.mubr.bf16.mxu0 %v3309
        %3830 = vmatmul.mubr.bf16.gmra.mrb[0].mxu0 %v3098
        %v3831 = vpop.f32.mrb[0].mxu0
        %v3832 = vadd.f32 0.0, %v3831
        %v3833 = vpop.f32.mrb[0].mxu0
        %v3834 = vpop.f32.mrb[0].mxu0
        %v3835 = vadd.f32 0.0, %v3834
        %v3836 = vpop.f32.mrb[0].mxu0
        %3837 = vmatprep.mubr.bf16.mxu0 %v3321
        %3838 = vmatmul.mubr.bf16.gmra.mrb[0].mxu0 %v3099
        %v3839 = vpop.f32.mrb[0].mxu0
        %v3840 = vadd.f32 0.0, %v3839
        %v3841 = vpop.f32.mrb[0].mxu0
        %v3842 = vpop.f32.mrb[0].mxu0
        %v3843 = vadd.f32 0.0, %v3842
        %v3844 = vpop.f32.mrb[0].mxu0
        %3845 = vmatprep.mubr.bf16.mxu0 %v3333
        %3846 = vmatmul.mubr.bf16.gmra.mrb[0].mxu0 %v3100
        %v3847 = vpop.f32.mrb[0].mxu0
        %v3848 = vadd.f32 0.0, %v3847
        %v3849 = vpop.f32.mrb[0].mxu0
        %v3850 = vpop.f32.mrb[0].mxu0
        %v3851 = vadd.f32 0.0, %v3850
        %v3852 = vpop.f32.mrb[0].mxu0
        %3853 = vmatprep.mubr.bf16.mxu0 %v3345
        %3854 = vmatmul.mubr.bf16.gmra.mrb[0].mxu0 %v3101
        %v3855 = vpop.f32.mrb[0].mxu0
        %v3856 = vadd.f32 0.0, %v3855
        %v3857 = vpop.f32.mrb[0].mxu0
        %v3858 = vpop.f32.mrb[0].mxu0
        %v3859 = vadd.f32 0.0, %v3858
        %v3860 = vpop.f32.mrb[0].mxu0
        %3861 = vmatprep.mubr.bf16.mxu0 %v3357
        %3862 = vmatmul.mubr.bf16.gmra.mrb[0].mxu0 %v3102
        %v3863 = vpop.f32.mrb[0].mxu0
        %v3864 = vadd.f32 0.0, %v3863
        %v3865 = vpop.f32.mrb[0].mxu0
        %v3866 = vpop.f32.mrb[0].mxu0
        %v3867 = vadd.f32 0.0, %v3866
        %v3868 = vpop.f32.mrb[0].mxu0
        %3869 = vmatprep.mubr.bf16.mxu0 %v3369
        %3870 = vmatmul.mubr.bf16.gmra.mrb[0].mxu0 %v3103
        %v3871 = vpop.f32.mrb[0].mxu0
        %v3872 = vadd.f32 0.0, %v3871
        %v3873 = vpop.f32.mrb[0].mxu0
        %v3874 = vpop.f32.mrb[0].mxu0
        %v3875 = vadd.f32 0.0, %v3874
        %v3876 = vpop.f32.mrb[0].mxu0
        %3877 = vmatprep.mubr.bf16.mxu0 %v3381
        %3878 = vmatmul.mubr.bf16.gmra.mrb[0].mxu0 %v3104
        %v3879 = vpop.f32.mrb[0].mxu0
        %v3880 = vadd.f32 0.0, %v3879
        %v3881 = vpop.f32.mrb[0].mxu0
        %v3882 = vpop.f32.mrb[0].mxu0
        %v3883 = vadd.f32 0.0, %v3882
        %v3884 = vpop.f32.mrb[0].mxu0
        %3885 = vdwg.mxu0
        %3886 = vmatprep.subr.bf16.mxu0 0
        %3887 = vmatpush1.bf16.msra.mxu0 %v3693
        %3888 = vmatprep.subr.bf16.mxu0 0
        %3889 = vmatpush1.bf16.msra.mxu0 %v3694
        %3890 = vmatprep.subr.bf16.mxu0 0
        %3891 = vmatpush1.bf16.msra.mxu0 %v3695
        %3892 = vmatprep.subr.bf16.mxu0 0
        %3893 = vmatpush1.bf16.msra.mxu0 %v3696
        %3894 = vmatprep.subr.bf16.mxu0 0
        %3895 = vmatpush1.bf16.msra.mxu0 %v3697
        %3896 = vmatprep.subr.bf16.mxu0 0
        %3897 = vmatpush1.bf16.msra.mxu0 %v3698
        %3898 = vmatprep.subr.bf16.mxu0 0
        %3899 = vmatpush1.bf16.msra.mxu0 %v3699
        %3900 = vmatprep.subr.bf16.mxu0 0
        %3901 = vmatpush1.bf16.msra.mxu0 %v3700
        %3902 = vmatprep.subr.bf16.mxu0 0
        %3903 = vmatpush1.bf16.msra.mxu0 0
        %3904 = vmatprep.subr.bf16.mxu0 0
        %3905 = vmatpush1.bf16.msra.mxu0 0
        %3906 = vmatprep.subr.bf16.mxu0 0
        %3907 = vmatpush1.bf16.msra.mxu0 0
        %3908 = vmatprep.subr.bf16.mxu0 0
        %3909 = vmatpush1.bf16.msra.mxu0 0
        %3910 = vmatprep.subr.bf16.mxu0 0
        %3911 = vmatpush1.bf16.msra.mxu0 0
        %3912 = vmatprep.subr.bf16.mxu0 0
        %3913 = vmatpush1.bf16.msra.mxu0 0
        %3914 = vmatprep.subr.bf16.mxu0 0
        %3915 = vmatpush1.bf16.msra.mxu0 0
        %3916 = vmatprep.subr.bf16.mxu0 0
        %3917 = vmatpush1.bf16.msra.mxu0 0
        %3918 = vmatprep.mubr.bf16.mxu0 0
        %3919 = vmatmul.mubr.bf16.gmra.mrb[0].mxu0 %v3417
        %v3920 = vpop.f32.mrb[0].mxu0
        %v3921 = vadd.f32 %v3760, %v3920
        %v3922 = vpop.f32.mrb[0].mxu0
        %v3923 = vpop.f32.mrb[0].mxu0
        %v3924 = vadd.f32 %v3763, %v3923
        %v3925 = vpop.f32.mrb[0].mxu0
        %3926 = vmatprep.mubr.bf16.mxu0 0
        %3927 = vmatmul.mubr.bf16.gmra.mrb[0].mxu0 %v3420
        %v3928 = vpop.f32.mrb[0].mxu0
        %v3929 = vadd.f32 %v3768, %v3928
        %v3930 = vpop.f32.mrb[0].mxu0
        %v3931 = vpop.f32.mrb[0].mxu0
        %v3932 = vadd.f32 %v3771, %v3931
        %v3933 = vpop.f32.mrb[0].mxu0
        %3934 = vmatprep.mubr.bf16.mxu0 0
        %3935 = vmatmul.mubr.bf16.gmra.mrb[0].mxu0 %v3423
        %v3936 = vpop.f32.mrb[0].mxu0
        %v3937 = vadd.f32 %v3776, %v3936
        %v3938 = vpop.f32.mrb[0].mxu0
        %v3939 = vpop.f32.mrb[0].mxu0
        %v3940 = vadd.f32 %v3779, %v3939
        %v3941 = vpop.f32.mrb[0].mxu0
        %3942 = vmatprep.mubr.bf16.mxu0 0
        %3943 = vmatmul.mubr.bf16.gmra.mrb[0].mxu0 %v3426
        %v3944 = vpop.f32.mrb[0].mxu0
        %v3945 = vadd.f32 %v3784, %v3944
        %v3946 = vpop.f32.mrb[0].mxu0
        %v3947 = vpop.f32.mrb[0].mxu0
        %v3948 = vadd.f32 %v3787, %v3947
        %v3949 = vpop.f32.mrb[0].mxu0
        %3950 = vmatprep.mubr.bf16.mxu0 0
        %3951 = vmatmul.mubr.bf16.gmra.mrb[0].mxu0 %v3429
        %v3952 = vpop.f32.mrb[0].mxu0
        %v3953 = vadd.f32 %v3792, %v3952
        %v3954 = vpop.f32.mrb[0].mxu0
        %v3955 = vpop.f32.mrb[0].mxu0
        %v3956 = vadd.f32 %v3795, %v3955
        %v3957 = vpop.f32.mrb[0].mxu0
        %3958 = vmatprep.mubr.bf16.mxu0 0
        %3959 = vmatmul.mubr.bf16.gmra.mrb[0].mxu0 %v3432
        %v3960 = vpop.f32.mrb[0].mxu0
        %v3961 = vadd.f32 %v3800, %v3960
        %v3962 = vpop.f32.mrb[0].mxu0
        %v3963 = vpop.f32.mrb[0].mxu0
        %v3964 = vadd.f32 %v3803, %v3963
        %v3965 = vpop.f32.mrb[0].mxu0
        %3966 = vmatprep.mubr.bf16.mxu0 0
        %3967 = vmatmul.mubr.bf16.gmra.mrb[0].mxu0 %v3435
        %v3968 = vpop.f32.mrb[0].mxu0
        %v3969 = vadd.f32 %v3808, %v3968
        %v3970 = vpop.f32.mrb[0].mxu0
        %v3971 = vpop.f32.mrb[0].mxu0
        %v3972 = vadd.f32 %v3811, %v3971
        %v3973 = vpop.f32.mrb[0].mxu0
        %3974 = vmatprep.mubr.bf16.mxu0 0
        %3975 = vmatmul.mubr.bf16.gmra.mrb[0].mxu0 %v3438
        %v3976 = vpop.f32.mrb[0].mxu0
        %v3977 = vadd.f32 %v3816, %v3976
        %v3978 = vpop.f32.mrb[0].mxu0
        %v3979 = vpop.f32.mrb[0].mxu0
        %v3980 = vadd.f32 %v3819, %v3979
        %v3981 = vpop.f32.mrb[0].mxu0
        %3982 = vmatprep.mubr.bf16.mxu0 0
        %3983 = vmatmul.mubr.bf16.gmra.mrb[0].mxu0 %v3441
        %v3984 = vpop.f32.mrb[0].mxu0
        %v3985 = vadd.f32 %v3824, %v3984
        %v3986 = vpop.f32.mrb[0].mxu0
        %v3987 = vpop.f32.mrb[0].mxu0
        %v3988 = vadd.f32 %v3827, %v3987
        %v3989 = vpop.f32.mrb[0].mxu0
        %3990 = vmatprep.mubr.bf16.mxu0 0
        %3991 = vmatmul.mubr.bf16.gmra.mrb[0].mxu0 %v3444
        %v3992 = vpop.f32.mrb[0].mxu0
        %v3993 = vadd.f32 %v3832, %v3992
        %v3994 = vpop.f32.mrb[0].mxu0
        %v3995 = vpop.f32.mrb[0].mxu0
        %v3996 = vadd.f32 %v3835, %v3995
        %v3997 = vpop.f32.mrb[0].mxu0
        %3998 = vmatprep.mubr.bf16.mxu0 0
        %3999 = vmatmul.mubr.bf16.gmra.mrb[0].mxu0 %v3447
        %v4000 = vpop.f32.mrb[0].mxu0
        %v4001 = vadd.f32 %v3840, %v4000
        %v4002 = vpop.f32.mrb[0].mxu0
        %v4003 = vpop.f32.mrb[0].mxu0
        %v4004 = vadd.f32 %v3843, %v4003
        %v4005 = vpop.f32.mrb[0].mxu0
        %4006 = vmatprep.mubr.bf16.mxu0 0
        %4007 = vmatmul.mubr.bf16.gmra.mrb[0].mxu0 %v3450
        %v4008 = vpop.f32.mrb[0].mxu0
        %v4009 = vadd.f32 %v3848, %v4008
        %v4010 = vpop.f32.mrb[0].mxu0
        %v4011 = vpop.f32.mrb[0].mxu0
        %v4012 = vadd.f32 %v3851, %v4011
        %v4013 = vpop.f32.mrb[0].mxu0
        %4014 = vmatprep.mubr.bf16.mxu0 0
        %4015 = vmatmul.mubr.bf16.gmra.mrb[0].mxu0 %v3453
        %v4016 = vpop.f32.mrb[0].mxu0
        %v4017 = vadd.f32 %v3856, %v4016
        %v4018 = vpop.f32.mrb[0].mxu0
        %v4019 = vpop.f32.mrb[0].mxu0
        %v4020 = vadd.f32 %v3859, %v4019
        %v4021 = vpop.f32.mrb[0].mxu0
        %4022 = vmatprep.mubr.bf16.mxu0 0
        %4023 = vmatmul.mubr.bf16.gmra.mrb[0].mxu0 %v3456
        %v4024 = vpop.f32.mrb[0].mxu0
        %v4025 = vadd.f32 %v3864, %v4024
        %v4026 = vpop.f32.mrb[0].mxu0
        %v4027 = vpop.f32.mrb[0].mxu0
        %v4028 = vadd.f32 %v3867, %v4027
        %v4029 = vpop.f32.mrb[0].mxu0
        %4030 = vmatprep.mubr.bf16.mxu0 0
        %4031 = vmatmul.mubr.bf16.gmra.mrb[0].mxu0 %v3459
        %v4032 = vpop.f32.mrb[0].mxu0
        %v4033 = vadd.f32 %v3872, %v4032
        %v4034 = vpop.f32.mrb[0].mxu0
        %v4035 = vpop.f32.mrb[0].mxu0
        %v4036 = vadd.f32 %v3875, %v4035
        %v4037 = vpop.f32.mrb[0].mxu0
        %4038 = vmatprep.mubr.bf16.mxu0 0
        %4039 = vmatmul.mubr.bf16.gmra.mrb[0].mxu0 %v3462
        %v4040 = vpop.f32.mrb[0].mxu0
        %v4041 = vadd.f32 %v3880, %v4040
        %v4042 = vpop.f32.mrb[0].mxu0
        %v4043 = vpop.f32.mrb[0].mxu0
        %v4044 = vadd.f32 %v3883, %v4043
        %v4045 = vpop.f32.mrb[0].mxu0
        %4046 = vdwg.mxu0
        %v4095 = vunpack.c.l.b16 %v3484
        %v4096 = vunpack.c.l.b16 %v3485
        %v4097 = vunpack.c.l.b16 %v3486
        %v4098 = vunpack.c.l.b16 %v3487
        %v4099 = vunpack.c.l.b16 %v3488
        %v4100 = vunpack.c.l.b16 %v3489
        %v4101 = vunpack.c.l.b16 %v3490
        %v4102 = vunpack.c.l.b16 %v3491
        %v4103 = vunpack.c.l.b16 %v3492
        %v4104 = vunpack.c.l.b16 %v3493
        %v4105 = vunpack.c.l.b16 %v3494
        %v4106 = vunpack.c.l.b16 %v3495
        %v4107 = vunpack.c.l.b16 %v3496
        %v4108 = vunpack.c.l.b16 %v3497
        %v4109 = vunpack.c.l.b16 %v3498
        %v4110 = vunpack.c.l.b16 %v3499
        %v4111 = vunpack.c.l.b16 %v3500
        %v4112 = vunpack.c.l.b16 %v3501
        %v4113 = vunpack.c.l.b16 %v3502
        %v4114 = vunpack.c.l.b16 %v3503
        %v4115 = vunpack.c.l.b16 %v3504
        %v4116 = vunpack.c.l.b16 %v3505
        %v4117 = vunpack.c.l.b16 %v3506
        %v4118 = vunpack.c.l.b16 %v3507
        %v4119 = vunpack.c.l.b16 %v3508
        %v4120 = vunpack.c.l.b16 %v3509
        %v4121 = vunpack.c.l.b16 %v3510
        %v4122 = vunpack.c.l.b16 %v3511
        %v4123 = vunpack.c.l.b16 %v3512
        %v4124 = vunpack.c.l.b16 %v3513
        %v4125 = vunpack.c.l.b16 %v3514
        %v4126 = vunpack.c.l.b16 %v3515
        %v4127 = vunpack.c.l.b16 %v3516
        %v4128 = vunpack.c.l.b16 %v3517
        %v4129 = vunpack.c.l.b16 %v3518
        %v4130 = vunpack.c.l.b16 %v3519
        %v4131 = vunpack.c.l.b16 %v3520
        %v4132 = vunpack.c.l.b16 %v3521
        %v4133 = vunpack.c.l.b16 %v3522
        %v4134 = vunpack.c.l.b16 %v3523
        %v4135 = vunpack.c.l.b16 %v3524
        %v4136 = vunpack.c.l.b16 %v3525
        %v4137 = vunpack.c.l.b16 %v3526
        %v4138 = vunpack.c.l.b16 %v3527
        %v4139 = vunpack.c.l.b16 %v3528
        %v4140 = vunpack.c.l.b16 %v3529
        %v4141 = vunpack.c.l.b16 %v3530
        %v4142 = vunpack.c.l.b16 %v3531
        %v4143 = vpack.c.b16 %v4096, %v4095
        %v4144 = vpack.c.b16 %v4098, %v4097
        %v4145 = vpack.c.b16 %v4100, %v4099
        %v4146 = vpack.c.b16 %v4102, %v4101
        %v4147 = vpack.c.b16 %v4104, %v4103
        %v4148 = vpack.c.b16 %v4106, %v4105
        %v4149 = vpack.c.b16 %v4108, %v4107
        %v4150 = vpack.c.b16 %v4110, %v4109
        %v4151 = vpack.c.b16 %v4112, %v4111
        %v4152 = vpack.c.b16 %v4114, %v4113
        %v4153 = vpack.c.b16 %v4116, %v4115
        %v4154 = vpack.c.b16 %v4118, %v4117
        %v4155 = vpack.c.b16 %v4120, %v4119
        %v4156 = vpack.c.b16 %v4122, %v4121
        %v4157 = vpack.c.b16 %v4124, %v4123
        %v4158 = vpack.c.b16 %v4126, %v4125
        %v4159 = vpack.c.b16 %v4128, %v4127
        %v4160 = vpack.c.b16 %v4130, %v4129
        %v4161 = vpack.c.b16 %v4132, %v4131
        %v4162 = vpack.c.b16 %v4134, %v4133
        %v4163 = vpack.c.b16 %v4136, %v4135
        %v4164 = vpack.c.b16 %v4138, %v4137
        %v4165 = vpack.c.b16 %v4140, %v4139
        %v4166 = vpack.c.b16 %v4142, %v4141
        %4191 = vmatprep.subr.bf16.mxu0 0
        %4192 = vmatpush1.bf16.msra.mxu0 %v4143
        %4193 = vmatprep.subr.bf16.mxu0 0
        %4194 = vmatpush1.bf16.msra.mxu0 %v4144
        %4195 = vmatprep.subr.bf16.mxu0 0
        %4196 = vmatpush1.bf16.msra.mxu0 %v4145
        %4197 = vmatprep.subr.bf16.mxu0 0
        %4198 = vmatpush1.bf16.msra.mxu0 %v4146
        %4199 = vmatprep.subr.bf16.mxu0 0
        %4200 = vmatpush1.bf16.msra.mxu0 %v4147
        %4201 = vmatprep.subr.bf16.mxu0 0
        %4202 = vmatpush1.bf16.msra.mxu0 %v4148
        %4203 = vmatprep.subr.bf16.mxu0 0
        %4204 = vmatpush1.bf16.msra.mxu0 %v4149
        %4205 = vmatprep.subr.bf16.mxu0 0
        %4206 = vmatpush1.bf16.msra.mxu0 %v4150
        %4207 = vmatprep.subr.bf16.mxu0 0
        %4208 = vmatpush1.bf16.msra.mxu0 %v4151
        %4209 = vmatprep.subr.bf16.mxu0 0
        %4210 = vmatpush1.bf16.msra.mxu0 %v4152
        %4211 = vmatprep.subr.bf16.mxu0 0
        %4212 = vmatpush1.bf16.msra.mxu0 %v4153
        %4213 = vmatprep.subr.bf16.mxu0 0
        %4214 = vmatpush1.bf16.msra.mxu0 %v4154
        %4215 = vmatprep.subr.bf16.mxu0 0
        %4216 = vmatpush1.bf16.msra.mxu0 %v4155
        %4217 = vmatprep.subr.bf16.mxu0 0
        %4218 = vmatpush1.bf16.msra.mxu0 %v4156
        %4219 = vmatprep.subr.bf16.mxu0 0
        %4220 = vmatpush1.bf16.msra.mxu0 %v4157
        %4221 = vmatprep.subr.bf16.mxu0 0
        %4222 = vmatpush1.bf16.msra.mxu0 %v4158
        %4223 = vmatprep.mubr.bf16.mxu0 %v3189
        %4224 = vmatmul.mubr.bf16.gmra.mrb[0].mxu0 %v3088
        %v4225 = vpop.f32.mrb[0].mxu0
        %v4226 = vadd.f32 %v3921, %v4225
        %v4227 = vpop.f32.mrb[0].mxu0
        %v4228 = vpop.f32.mrb[0].mxu0
        %v4229 = vadd.f32 %v3924, %v4228
        %v4230 = vpop.f32.mrb[0].mxu0
        %4231 = vmatprep.mubr.bf16.mxu0 %v3201
        %4232 = vmatmul.mubr.bf16.gmra.mrb[0].mxu0 %v3089
        %v4233 = vpop.f32.mrb[0].mxu0
        %v4234 = vadd.f32 %v3929, %v4233
        %v4235 = vpop.f32.mrb[0].mxu0
        %v4236 = vpop.f32.mrb[0].mxu0
        %v4237 = vadd.f32 %v3932, %v4236
        %v4238 = vpop.f32.mrb[0].mxu0
        %4239 = vmatprep.mubr.bf16.mxu0 %v3213
        %4240 = vmatmul.mubr.bf16.gmra.mrb[0].mxu0 %v3090
        %v4241 = vpop.f32.mrb[0].mxu0
        %v4242 = vadd.f32 %v3937, %v4241
        %v4243 = vpop.f32.mrb[0].mxu0
        %v4244 = vpop.f32.mrb[0].mxu0
        %v4245 = vadd.f32 %v3940, %v4244
        %v4246 = vpop.f32.mrb[0].mxu0
        %4247 = vmatprep.mubr.bf16.mxu0 %v3225
        %4248 = vmatmul.mubr.bf16.gmra.mrb[0].mxu0 %v3091
        %v4249 = vpop.f32.mrb[0].mxu0
        %v4250 = vadd.f32 %v3945, %v4249
        %v4251 = vpop.f32.mrb[0].mxu0
        %v4252 = vpop.f32.mrb[0].mxu0
        %v4253 = vadd.f32 %v3948, %v4252
        %v4254 = vpop.f32.mrb[0].mxu0
        %4255 = vmatprep.mubr.bf16.mxu0 %v3237
        %4256 = vmatmul.mubr.bf16.gmra.mrb[0].mxu0 %v3092
        %v4257 = vpop.f32.mrb[0].mxu0
        %v4258 = vadd.f32 %v3953, %v4257
        %v4259 = vpop.f32.mrb[0].mxu0
        %v4260 = vpop.f32.mrb[0].mxu0
        %v4261 = vadd.f32 %v3956, %v4260
        %v4262 = vpop.f32.mrb[0].mxu0
        %4263 = vmatprep.mubr.bf16.mxu0 %v3249
        %4264 = vmatmul.mubr.bf16.gmra.mrb[0].mxu0 %v3093
        %v4265 = vpop.f32.mrb[0].mxu0
        %v4266 = vadd.f32 %v3961, %v4265
        %v4267 = vpop.f32.mrb[0].mxu0
        %v4268 = vpop.f32.mrb[0].mxu0
        %v4269 = vadd.f32 %v3964, %v4268
        %v4270 = vpop.f32.mrb[0].mxu0
        %4271 = vmatprep.mubr.bf16.mxu0 %v3261
        %4272 = vmatmul.mubr.bf16.gmra.mrb[0].mxu0 %v3094
        %v4273 = vpop.f32.mrb[0].mxu0
        %v4274 = vadd.f32 %v3969, %v4273
        %v4275 = vpop.f32.mrb[0].mxu0
        %v4276 = vpop.f32.mrb[0].mxu0
        %v4277 = vadd.f32 %v3972, %v4276
        %v4278 = vpop.f32.mrb[0].mxu0
        %4279 = vmatprep.mubr.bf16.mxu0 %v3273
        %4280 = vmatmul.mubr.bf16.gmra.mrb[0].mxu0 %v3095
        %v4281 = vpop.f32.mrb[0].mxu0
        %v4282 = vadd.f32 %v3977, %v4281
        %v4283 = vpop.f32.mrb[0].mxu0
        %v4284 = vpop.f32.mrb[0].mxu0
        %v4285 = vadd.f32 %v3980, %v4284
        %v4286 = vpop.f32.mrb[0].mxu0
        %4287 = vmatprep.mubr.bf16.mxu0 %v3285
        %4288 = vmatmul.mubr.bf16.gmra.mrb[0].mxu0 %v3096
        %v4289 = vpop.f32.mrb[0].mxu0
        %v4290 = vadd.f32 %v3985, %v4289
        %v4291 = vpop.f32.mrb[0].mxu0
        %v4292 = vpop.f32.mrb[0].mxu0
        %v4293 = vadd.f32 %v3988, %v4292
        %v4294 = vpop.f32.mrb[0].mxu0
        %4295 = vmatprep.mubr.bf16.mxu0 %v3297
        %4296 = vmatmul.mubr.bf16.gmra.mrb[0].mxu0 %v3097
        %v4297 = vpop.f32.mrb[0].mxu0
        %v4298 = vadd.f32 %v3993, %v4297
        %v4299 = vpop.f32.mrb[0].mxu0
        %v4300 = vpop.f32.mrb[0].mxu0
        %v4301 = vadd.f32 %v3996, %v4300
        %v4302 = vpop.f32.mrb[0].mxu0
        %4303 = vmatprep.mubr.bf16.mxu0 %v3309
        %4304 = vmatmul.mubr.bf16.gmra.mrb[0].mxu0 %v3098
        %v4305 = vpop.f32.mrb[0].mxu0
        %v4306 = vadd.f32 %v4001, %v4305
        %v4307 = vpop.f32.mrb[0].mxu0
        %v4308 = vpop.f32.mrb[0].mxu0
        %v4309 = vadd.f32 %v4004, %v4308
        %v4310 = vpop.f32.mrb[0].mxu0
        %4311 = vmatprep.mubr.bf16.mxu0 %v3321
        %4312 = vmatmul.mubr.bf16.gmra.mrb[0].mxu0 %v3099
        %v4313 = vpop.f32.mrb[0].mxu0
        %v4314 = vadd.f32 %v4009, %v4313
        %v4315 = vpop.f32.mrb[0].mxu0
        %v4316 = vpop.f32.mrb[0].mxu0
        %v4317 = vadd.f32 %v4012, %v4316
        %v4318 = vpop.f32.mrb[0].mxu0
        %4319 = vmatprep.mubr.bf16.mxu0 %v3333
        %4320 = vmatmul.mubr.bf16.gmra.mrb[0].mxu0 %v3100
        %v4321 = vpop.f32.mrb[0].mxu0
        %v4322 = vadd.f32 %v4017, %v4321
        %v4323 = vpop.f32.mrb[0].mxu0
        %v4324 = vpop.f32.mrb[0].mxu0
        %v4325 = vadd.f32 %v4020, %v4324
        %v4326 = vpop.f32.mrb[0].mxu0
        %4327 = vmatprep.mubr.bf16.mxu0 %v3345
        %4328 = vmatmul.mubr.bf16.gmra.mrb[0].mxu0 %v3101
        %v4329 = vpop.f32.mrb[0].mxu0
        %v4330 = vadd.f32 %v4025, %v4329
        %v4331 = vpop.f32.mrb[0].mxu0
        %v4332 = vpop.f32.mrb[0].mxu0
        %v4333 = vadd.f32 %v4028, %v4332
        %v4334 = vpop.f32.mrb[0].mxu0
        %4335 = vmatprep.mubr.bf16.mxu0 %v3357
        %4336 = vmatmul.mubr.bf16.gmra.mrb[0].mxu0 %v3102
        %v4337 = vpop.f32.mrb[0].mxu0
        %v4338 = vadd.f32 %v4033, %v4337
        %v4339 = vpop.f32.mrb[0].mxu0
        %v4340 = vpop.f32.mrb[0].mxu0
        %v4341 = vadd.f32 %v4036, %v4340
        %v4342 = vpop.f32.mrb[0].mxu0
        %4343 = vmatprep.mubr.bf16.mxu0 %v3369
        %4344 = vmatmul.mubr.bf16.gmra.mrb[0].mxu0 %v3103
        %v4345 = vpop.f32.mrb[0].mxu0
        %v4346 = vadd.f32 %v4041, %v4345
        %v4347 = vpop.f32.mrb[0].mxu0
        %v4348 = vpop.f32.mrb[0].mxu0
        %v4349 = vadd.f32 %v4044, %v4348
        %v4350 = vpop.f32.mrb[0].mxu0
        %4351 = vdwg.mxu0
        %4352 = vmatprep.subr.bf16.mxu0 0
        %4353 = vmatpush1.bf16.msra.mxu0 %v4159
        %4354 = vmatprep.subr.bf16.mxu0 0
        %4355 = vmatpush1.bf16.msra.mxu0 %v4160
        %4356 = vmatprep.subr.bf16.mxu0 0
        %4357 = vmatpush1.bf16.msra.mxu0 %v4161
        %4358 = vmatprep.subr.bf16.mxu0 0
        %4359 = vmatpush1.bf16.msra.mxu0 %v4162
        %4360 = vmatprep.subr.bf16.mxu0 0
        %4361 = vmatpush1.bf16.msra.mxu0 %v4163
        %4362 = vmatprep.subr.bf16.mxu0 0
        %4363 = vmatpush1.bf16.msra.mxu0 %v4164
        %4364 = vmatprep.subr.bf16.mxu0 0
        %4365 = vmatpush1.bf16.msra.mxu0 %v4165
        %4366 = vmatprep.subr.bf16.mxu0 0
        %4367 = vmatpush1.bf16.msra.mxu0 %v4166
        %4368 = vmatprep.subr.bf16.mxu0 0
        %4369 = vmatpush1.bf16.msra.mxu0 0
        %4370 = vmatprep.subr.bf16.mxu0 0
        %4371 = vmatpush1.bf16.msra.mxu0 0
        %4372 = vmatprep.subr.bf16.mxu0 0
        %4373 = vmatpush1.bf16.msra.mxu0 0
        %4374 = vmatprep.subr.bf16.mxu0 0
        %4375 = vmatpush1.bf16.msra.mxu0 0
        %4376 = vmatprep.subr.bf16.mxu0 0
        %4377 = vmatpush1.bf16.msra.mxu0 0
        %4378 = vmatprep.subr.bf16.mxu0 0
        %4379 = vmatpush1.bf16.msra.mxu0 0
        %4380 = vmatprep.subr.bf16.mxu0 0
        %4381 = vmatpush1.bf16.msra.mxu0 0
        %4382 = vmatprep.subr.bf16.mxu0 0
        %4383 = vmatpush1.bf16.msra.mxu0 0
        %4384 = vmatprep.mubr.bf16.mxu0 0
        %4385 = vmatmul.mubr.bf16.gmra.mrb[0].mxu0 %v3414
        %v4386 = vpop.f32.mrb[0].mxu0
        %v4387 = vadd.f32 %v4226, %v4386
        %v4388 = vpop.f32.mrb[0].mxu0
        %v4389 = vpop.f32.mrb[0].mxu0
        %v4390 = vadd.f32 %v4229, %v4389
        %v4391 = vpop.f32.mrb[0].mxu0
        %4392 = vmatprep.mubr.bf16.mxu0 0
        %4393 = vmatmul.mubr.bf16.gmra.mrb[0].mxu0 %v3417
        %v4394 = vpop.f32.mrb[0].mxu0
        %v4395 = vadd.f32 %v4234, %v4394
        %v4396 = vpop.f32.mrb[0].mxu0
        %v4397 = vpop.f32.mrb[0].mxu0
        %v4398 = vadd.f32 %v4237, %v4397
        %v4399 = vpop.f32.mrb[0].mxu0
        %4400 = vmatprep.mubr.bf16.mxu0 0
        %4401 = vmatmul.mubr.bf16.gmra.mrb[0].mxu0 %v3420
        %v4402 = vpop.f32.mrb[0].mxu0
        %v4403 = vadd.f32 %v4242, %v4402
        %v4404 = vpop.f32.mrb[0].mxu0
        %v4405 = vpop.f32.mrb[0].mxu0
        %v4406 = vadd.f32 %v4245, %v4405
        %v4407 = vpop.f32.mrb[0].mxu0
        %4408 = vmatprep.mubr.bf16.mxu0 0
        %4409 = vmatmul.mubr.bf16.gmra.mrb[0].mxu0 %v3423
        %v4410 = vpop.f32.mrb[0].mxu0
        %v4411 = vadd.f32 %v4250, %v4410
        %v4412 = vpop.f32.mrb[0].mxu0
        %v4413 = vpop.f32.mrb[0].mxu0
        %v4414 = vadd.f32 %v4253, %v4413
        %v4415 = vpop.f32.mrb[0].mxu0
        %4416 = vmatprep.mubr.bf16.mxu0 0
        %4417 = vmatmul.mubr.bf16.gmra.mrb[0].mxu0 %v3426
        %v4418 = vpop.f32.mrb[0].mxu0
        %v4419 = vadd.f32 %v4258, %v4418
        %v4420 = vpop.f32.mrb[0].mxu0
        %v4421 = vpop.f32.mrb[0].mxu0
        %v4422 = vadd.f32 %v4261, %v4421
        %v4423 = vpop.f32.mrb[0].mxu0
        %4424 = vmatprep.mubr.bf16.mxu0 0
        %4425 = vmatmul.mubr.bf16.gmra.mrb[0].mxu0 %v3429
        %v4426 = vpop.f32.mrb[0].mxu0
        %v4427 = vadd.f32 %v4266, %v4426
        %v4428 = vpop.f32.mrb[0].mxu0
        %v4429 = vpop.f32.mrb[0].mxu0
        %v4430 = vadd.f32 %v4269, %v4429
        %v4431 = vpop.f32.mrb[0].mxu0
        %4432 = vmatprep.mubr.bf16.mxu0 0
        %4433 = vmatmul.mubr.bf16.gmra.mrb[0].mxu0 %v3432
        %v4434 = vpop.f32.mrb[0].mxu0
        %v4435 = vadd.f32 %v4274, %v4434
        %v4436 = vpop.f32.mrb[0].mxu0
        %v4437 = vpop.f32.mrb[0].mxu0
        %v4438 = vadd.f32 %v4277, %v4437
        %v4439 = vpop.f32.mrb[0].mxu0
        %4440 = vmatprep.mubr.bf16.mxu0 0
        %4441 = vmatmul.mubr.bf16.gmra.mrb[0].mxu0 %v3435
        %v4442 = vpop.f32.mrb[0].mxu0
        %v4443 = vadd.f32 %v4282, %v4442
        %v4444 = vpop.f32.mrb[0].mxu0
        %v4445 = vpop.f32.mrb[0].mxu0
        %v4446 = vadd.f32 %v4285, %v4445
        %v4447 = vpop.f32.mrb[0].mxu0
        %4448 = vmatprep.mubr.bf16.mxu0 0
        %4449 = vmatmul.mubr.bf16.gmra.mrb[0].mxu0 %v3438
        %v4450 = vpop.f32.mrb[0].mxu0
        %v4451 = vadd.f32 %v4290, %v4450
        %v4452 = vpop.f32.mrb[0].mxu0
        %v4453 = vpop.f32.mrb[0].mxu0
        %v4454 = vadd.f32 %v4293, %v4453
        %v4455 = vpop.f32.mrb[0].mxu0
        %4456 = vmatprep.mubr.bf16.mxu0 0
        %4457 = vmatmul.mubr.bf16.gmra.mrb[0].mxu0 %v3441
        %v4458 = vpop.f32.mrb[0].mxu0
        %v4459 = vadd.f32 %v4298, %v4458
        %v4460 = vpop.f32.mrb[0].mxu0
        %v4461 = vpop.f32.mrb[0].mxu0
        %v4462 = vadd.f32 %v4301, %v4461
        %v4463 = vpop.f32.mrb[0].mxu0
        %4464 = vmatprep.mubr.bf16.mxu0 0
        %4465 = vmatmul.mubr.bf16.gmra.mrb[0].mxu0 %v3444
        %v4466 = vpop.f32.mrb[0].mxu0
        %v4467 = vadd.f32 %v4306, %v4466
        %v4468 = vpop.f32.mrb[0].mxu0
        %v4469 = vpop.f32.mrb[0].mxu0
        %v4470 = vadd.f32 %v4309, %v4469
        %v4471 = vpop.f32.mrb[0].mxu0
        %4472 = vmatprep.mubr.bf16.mxu0 0
        %4473 = vmatmul.mubr.bf16.gmra.mrb[0].mxu0 %v3447
        %v4474 = vpop.f32.mrb[0].mxu0
        %v4475 = vadd.f32 %v4314, %v4474
        %v4476 = vpop.f32.mrb[0].mxu0
        %v4477 = vpop.f32.mrb[0].mxu0
        %v4478 = vadd.f32 %v4317, %v4477
        %v4479 = vpop.f32.mrb[0].mxu0
        %4480 = vmatprep.mubr.bf16.mxu0 0
        %4481 = vmatmul.mubr.bf16.gmra.mrb[0].mxu0 %v3450
        %v4482 = vpop.f32.mrb[0].mxu0
        %v4483 = vadd.f32 %v4322, %v4482
        %v4484 = vpop.f32.mrb[0].mxu0
        %v4485 = vpop.f32.mrb[0].mxu0
        %v4486 = vadd.f32 %v4325, %v4485
        %v4487 = vpop.f32.mrb[0].mxu0
        %4488 = vmatprep.mubr.bf16.mxu0 0
        %4489 = vmatmul.mubr.bf16.gmra.mrb[0].mxu0 %v3453
        %v4490 = vpop.f32.mrb[0].mxu0
        %v4491 = vadd.f32 %v4330, %v4490
        %v4492 = vpop.f32.mrb[0].mxu0
        %v4493 = vpop.f32.mrb[0].mxu0
        %v4494 = vadd.f32 %v4333, %v4493
        %v4495 = vpop.f32.mrb[0].mxu0
        %4496 = vmatprep.mubr.bf16.mxu0 0
        %4497 = vmatmul.mubr.bf16.gmra.mrb[0].mxu0 %v3456
        %v4498 = vpop.f32.mrb[0].mxu0
        %v4499 = vadd.f32 %v4338, %v4498
        %v4500 = vpop.f32.mrb[0].mxu0
        %v4501 = vpop.f32.mrb[0].mxu0
        %v4502 = vadd.f32 %v4341, %v4501
        %v4503 = vpop.f32.mrb[0].mxu0
        %4504 = vmatprep.mubr.bf16.mxu0 0
        %4505 = vmatmul.mubr.bf16.gmra.mrb[0].mxu0 %v3459
        %v4506 = vpop.f32.mrb[0].mxu0
        %v4507 = vadd.f32 %v4346, %v4506
        %v4508 = vpop.f32.mrb[0].mxu0
        %v4509 = vpop.f32.mrb[0].mxu0
        %v4510 = vadd.f32 %v4349, %v4509
        %v4511 = vpop.f32.mrb[0].mxu0
        %4512 = vdwg.mxu0
        %s4513 = scalar_lea.vmem [#allocation3], 384
        %v4514 = vld [vmem:[%s4513] sm:$0xf]
        %v4515 = vld [vmem:[%s4513 + $0x4] sm:$0xf]
        %v4516 = vld [vmem:[%s4513 + $0x8] sm:$0xf]
        %v4517 = vld [vmem:[%s4513 + $0xc] sm:$0xf]
        %v4518 = vld [vmem:[%s4513 + $0x10] sm:$0xf]
        %v4519 = vld [vmem:[%s4513 + $0x14] sm:$0xf]
        %v4520 = vld [vmem:[%s4513 + $0x18] sm:$0xf]
        %v4521 = vld [vmem:[%s4513 + $0x1c] sm:$0xf]
        %v4522 = vld [vmem:[%s4513 + $0x20] sm:$0xf]
        %v4523 = vld [vmem:[%s4513 + $0x24] sm:$0xf]
        %v4524 = vld [vmem:[%s4513 + $0x28] sm:$0xf]
        %v4525 = vld [vmem:[%s4513 + $0x2c] sm:$0xf]
        %v4526 = vld [vmem:[%s4513 + $0x30] sm:$0xf]
        %v4527 = vld [vmem:[%s4513 + $0x34] sm:$0xf]
        %v4528 = vld [vmem:[%s4513 + $0x38] sm:$0xf]
        %v4529 = vld [vmem:[%s4513 + $0x3c] sm:$0xf]
        %v4530 = vld [vmem:[%s4513 + $0x40] sm:$0xf]
        %v4531 = vld [vmem:[%s4513 + $0x44] sm:$0xf]
        %v4532 = vld [vmem:[%s4513 + $0x48] sm:$0xf]
        %v4533 = vld [vmem:[%s4513 + $0x4c] sm:$0xf]
        %v4534 = vld [vmem:[%s4513 + $0x50] sm:$0xf]
        %v4535 = vld [vmem:[%s4513 + $0x54] sm:$0xf]
        %v4536 = vld [vmem:[%s4513 + $0x58] sm:$0xf]
        %v4537 = vld [vmem:[%s4513 + $0x5c] sm:$0xf]
        %v4538 = vld [vmem:[%s4513 + $0x60] sm:$0xf]
        %v4539 = vld [vmem:[%s4513 + $0x64] sm:$0xf]
        %v4540 = vld [vmem:[%s4513 + $0x68] sm:$0xf]
        %v4541 = vld [vmem:[%s4513 + $0x6c] sm:$0xf]
        %v4542 = vld [vmem:[%s4513 + $0x70] sm:$0xf]
        %v4543 = vld [vmem:[%s4513 + $0x74] sm:$0xf]
        %v4544 = vld [vmem:[%s4513 + $0x78] sm:$0xf]
        %v4545 = vld [vmem:[%s4513 + $0x7c] sm:$0xf]
        %v4546 = vld [vmem:[%s4513 + $0x80] sm:$0xf]
        %v4547 = vld [vmem:[%s4513 + $0x84] sm:$0xf]
        %v4548 = vld [vmem:[%s4513 + $0x88] sm:$0xf]
        %v4549 = vld [vmem:[%s4513 + $0x8c] sm:$0xf]
        %v4550 = vld [vmem:[%s4513 + $0x90] sm:$0xf]
        %v4551 = vld [vmem:[%s4513 + $0x94] sm:$0xf]
        %v4552 = vld [vmem:[%s4513 + $0x98] sm:$0xf]
        %v4553 = vld [vmem:[%s4513 + $0x9c] sm:$0xf]
        %v4554 = vld [vmem:[%s4513 + $0xa0] sm:$0xf]
        %v4555 = vld [vmem:[%s4513 + $0xa4] sm:$0xf]
        %v4556 = vld [vmem:[%s4513 + $0xa8] sm:$0xf]
        %v4557 = vld [vmem:[%s4513 + $0xac] sm:$0xf]
        %v4558 = vld [vmem:[%s4513 + $0xb0] sm:$0xf]
        %v4559 = vld [vmem:[%s4513 + $0xb4] sm:$0xf]
        %v4560 = vld [vmem:[%s4513 + $0xb8] sm:$0xf]
        %v4561 = vld [vmem:[%s4513 + $0xbc] sm:$0xf]
        %v4610 = vunpack.c.l.b16 %v4514
        %v4611 = vunpack.c.l.b16 %v4515
        %v4612 = vunpack.c.l.b16 %v4516
        %v4613 = vunpack.c.l.b16 %v4517
        %v4614 = vunpack.c.l.b16 %v4518
        %v4615 = vunpack.c.l.b16 %v4519
        %v4616 = vunpack.c.l.b16 %v4520
        %v4617 = vunpack.c.l.b16 %v4521
        %v4618 = vunpack.c.l.b16 %v4522
        %v4619 = vunpack.c.l.b16 %v4523
        %v4620 = vunpack.c.l.b16 %v4524
        %v4621 = vunpack.c.l.b16 %v4525
        %v4622 = vunpack.c.l.b16 %v4526
        %v4623 = vunpack.c.l.b16 %v4527
        %v4624 = vunpack.c.l.b16 %v4528
        %v4625 = vunpack.c.l.b16 %v4529
        %v4626 = vunpack.c.l.b16 %v4530
        %v4627 = vunpack.c.l.b16 %v4531
        %v4628 = vunpack.c.l.b16 %v4532
        %v4629 = vunpack.c.l.b16 %v4533
        %v4630 = vunpack.c.l.b16 %v4534
        %v4631 = vunpack.c.l.b16 %v4535
        %v4632 = vunpack.c.l.b16 %v4536
        %v4633 = vunpack.c.l.b16 %v4537
        %v4634 = vunpack.c.l.b16 %v4538
        %v4635 = vunpack.c.l.b16 %v4539
        %v4636 = vunpack.c.l.b16 %v4540
        %v4637 = vunpack.c.l.b16 %v4541
        %v4638 = vunpack.c.l.b16 %v4542
        %v4639 = vunpack.c.l.b16 %v4543
        %v4640 = vunpack.c.l.b16 %v4544
        %v4641 = vunpack.c.l.b16 %v4545
        %v4642 = vunpack.c.l.b16 %v4546
        %v4643 = vunpack.c.l.b16 %v4547
        %v4644 = vunpack.c.l.b16 %v4548
        %v4645 = vunpack.c.l.b16 %v4549
        %v4646 = vunpack.c.l.b16 %v4550
        %v4647 = vunpack.c.l.b16 %v4551
        %v4648 = vunpack.c.l.b16 %v4552
        %v4649 = vunpack.c.l.b16 %v4553
        %v4650 = vunpack.c.l.b16 %v4554
        %v4651 = vunpack.c.l.b16 %v4555
        %v4652 = vunpack.c.l.b16 %v4556
        %v4653 = vunpack.c.l.b16 %v4557
        %v4654 = vunpack.c.l.b16 %v4558
        %v4655 = vunpack.c.l.b16 %v4559
        %v4656 = vunpack.c.l.b16 %v4560
        %v4657 = vunpack.c.l.b16 %v4561
        %v4658 = vpack.c.b16 %v4611, %v4610
        %v4659 = vpack.c.b16 %v4613, %v4612
        %v4660 = vpack.c.b16 %v4615, %v4614
        %v4661 = vpack.c.b16 %v4617, %v4616
        %v4662 = vpack.c.b16 %v4619, %v4618
        %v4663 = vpack.c.b16 %v4621, %v4620
        %v4664 = vpack.c.b16 %v4623, %v4622
        %v4665 = vpack.c.b16 %v4625, %v4624
        %v4666 = vpack.c.b16 %v4627, %v4626
        %v4667 = vpack.c.b16 %v4629, %v4628
        %v4668 = vpack.c.b16 %v4631, %v4630
        %v4669 = vpack.c.b16 %v4633, %v4632
        %v4670 = vpack.c.b16 %v4635, %v4634
        %v4671 = vpack.c.b16 %v4637, %v4636
        %v4672 = vpack.c.b16 %v4639, %v4638
        %v4673 = vpack.c.b16 %v4641, %v4640
        %v4674 = vpack.c.b16 %v4643, %v4642
        %v4675 = vpack.c.b16 %v4645, %v4644
        %v4676 = vpack.c.b16 %v4647, %v4646
        %v4677 = vpack.c.b16 %v4649, %v4648
        %v4678 = vpack.c.b16 %v4651, %v4650
        %v4679 = vpack.c.b16 %v4653, %v4652
        %v4680 = vpack.c.b16 %v4655, %v4654
        %v4681 = vpack.c.b16 %v4657, %v4656
        %4706 = vmatprep.subr.bf16.mxu0 0
        %4707 = vmatpush1.bf16.msra.mxu0 %v4658
        %4708 = vmatprep.subr.bf16.mxu0 0
        %4709 = vmatpush1.bf16.msra.mxu0 %v4659
        %4710 = vmatprep.subr.bf16.mxu0 0
        %4711 = vmatpush1.bf16.msra.mxu0 %v4660
        %4712 = vmatprep.subr.bf16.mxu0 0
        %4713 = vmatpush1.bf16.msra.mxu0 %v4661
        %4714 = vmatprep.subr.bf16.mxu0 0
        %4715 = vmatpush1.bf16.msra.mxu0 %v4662
        %4716 = vmatprep.subr.bf16.mxu0 0
        %4717 = vmatpush1.bf16.msra.mxu0 %v4663
        %4718 = vmatprep.subr.bf16.mxu0 0
        %4719 = vmatpush1.bf16.msra.mxu0 %v4664
        %4720 = vmatprep.subr.bf16.mxu0 0
        %4721 = vmatpush1.bf16.msra.mxu0 %v4665
        %4722 = vmatprep.subr.bf16.mxu0 0
        %4723 = vmatpush1.bf16.msra.mxu0 %v4666
        %4724 = vmatprep.subr.bf16.mxu0 0
        %4725 = vmatpush1.bf16.msra.mxu0 %v4667
        %4726 = vmatprep.subr.bf16.mxu0 0
        %4727 = vmatpush1.bf16.msra.mxu0 %v4668
        %4728 = vmatprep.subr.bf16.mxu0 0
        %4729 = vmatpush1.bf16.msra.mxu0 %v4669
        %4730 = vmatprep.subr.bf16.mxu0 0
        %4731 = vmatpush1.bf16.msra.mxu0 %v4670
        %4732 = vmatprep.subr.bf16.mxu0 0
        %4733 = vmatpush1.bf16.msra.mxu0 %v4671
        %4734 = vmatprep.subr.bf16.mxu0 0
        %4735 = vmatpush1.bf16.msra.mxu0 %v4672
        %4736 = vmatprep.subr.bf16.mxu0 0
        %4737 = vmatpush1.bf16.msra.mxu0 %v4673
        %4738 = vmatprep.mubr.bf16.mxu0 %v3213
        %4739 = vmatmul.mubr.bf16.gmra.mrb[0].mxu0 %v3090
        %v4740 = vpop.f32.mrb[0].mxu0
        %v4741 = vadd.f32 0.0, %v4740
        %v4742 = vpop.f32.mrb[0].mxu0
        %v4743 = vpop.f32.mrb[0].mxu0
        %v4744 = vadd.f32 0.0, %v4743
        %v4745 = vpop.f32.mrb[0].mxu0
        %4746 = vmatprep.mubr.bf16.mxu0 %v3225
        %4747 = vmatmul.mubr.bf16.gmra.mrb[0].mxu0 %v3091
        %v4748 = vpop.f32.mrb[0].mxu0
        %v4749 = vadd.f32 0.0, %v4748
        %v4750 = vpop.f32.mrb[0].mxu0
        %v4751 = vpop.f32.mrb[0].mxu0
        %v4752 = vadd.f32 0.0, %v4751
        %v4753 = vpop.f32.mrb[0].mxu0
        %4754 = vmatprep.mubr.bf16.mxu0 %v3237
        %4755 = vmatmul.mubr.bf16.gmra.mrb[0].mxu0 %v3092
        %v4756 = vpop.f32.mrb[0].mxu0
        %v4757 = vadd.f32 0.0, %v4756
        %v4758 = vpop.f32.mrb[0].mxu0
        %v4759 = vpop.f32.mrb[0].mxu0
        %v4760 = vadd.f32 0.0, %v4759
        %v4761 = vpop.f32.mrb[0].mxu0
        %4762 = vmatprep.mubr.bf16.mxu0 %v3249
        %4763 = vmatmul.mubr.bf16.gmra.mrb[0].mxu0 %v3093
        %v4764 = vpop.f32.mrb[0].mxu0
        %v4765 = vadd.f32 0.0, %v4764
        %v4766 = vpop.f32.mrb[0].mxu0
        %v4767 = vpop.f32.mrb[0].mxu0
        %v4768 = vadd.f32 0.0, %v4767
        %v4769 = vpop.f32.mrb[0].mxu0
        %4770 = vmatprep.mubr.bf16.mxu0 %v3261
        %4771 = vmatmul.mubr.bf16.gmra.mrb[0].mxu0 %v3094
        %v4772 = vpop.f32.mrb[0].mxu0
        %v4773 = vadd.f32 0.0, %v4772
        %v4774 = vpop.f32.mrb[0].mxu0
        %v4775 = vpop.f32.mrb[0].mxu0
        %v4776 = vadd.f32 0.0, %v4775
        %v4777 = vpop.f32.mrb[0].mxu0
        %4778 = vmatprep.mubr.bf16.mxu0 %v3273
        %4779 = vmatmul.mubr.bf16.gmra.mrb[0].mxu0 %v3095
        %v4780 = vpop.f32.mrb[0].mxu0
        %v4781 = vadd.f32 0.0, %v4780
        %v4782 = vpop.f32.mrb[0].mxu0
        %v4783 = vpop.f32.mrb[0].mxu0
        %v4784 = vadd.f32 0.0, %v4783
        %v4785 = vpop.f32.mrb[0].mxu0
        %4786 = vmatprep.mubr.bf16.mxu0 %v3285
        %4787 = vmatmul.mubr.bf16.gmra.mrb[0].mxu0 %v3096
        %v4788 = vpop.f32.mrb[0].mxu0
        %v4789 = vadd.f32 0.0, %v4788
        %v4790 = vpop.f32.mrb[0].mxu0
        %v4791 = vpop.f32.mrb[0].mxu0
        %v4792 = vadd.f32 0.0, %v4791
        %v4793 = vpop.f32.mrb[0].mxu0
        %4794 = vmatprep.mubr.bf16.mxu0 %v3297
        %4795 = vmatmul.mubr.bf16.gmra.mrb[0].mxu0 %v3097
        %v4796 = vpop.f32.mrb[0].mxu0
        %v4797 = vadd.f32 0.0, %v4796
        %v4798 = vpop.f32.mrb[0].mxu0
        %v4799 = vpop.f32.mrb[0].mxu0
        %v4800 = vadd.f32 0.0, %v4799
        %v4801 = vpop.f32.mrb[0].mxu0
        %4802 = vmatprep.mubr.bf16.mxu0 %v3309
        %4803 = vmatmul.mubr.bf16.gmra.mrb[0].mxu0 %v3098
        %v4804 = vpop.f32.mrb[0].mxu0
        %v4805 = vadd.f32 0.0, %v4804
        %v4806 = vpop.f32.mrb[0].mxu0
        %v4807 = vpop.f32.mrb[0].mxu0
        %v4808 = vadd.f32 0.0, %v4807
        %v4809 = vpop.f32.mrb[0].mxu0
        %4810 = vmatprep.mubr.bf16.mxu0 %v3321
        %4811 = vmatmul.mubr.bf16.gmra.mrb[0].mxu0 %v3099
        %v4812 = vpop.f32.mrb[0].mxu0
        %v4813 = vadd.f32 0.0, %v4812
        %v4814 = vpop.f32.mrb[0].mxu0
        %v4815 = vpop.f32.mrb[0].mxu0
        %v4816 = vadd.f32 0.0, %v4815
        %v4817 = vpop.f32.mrb[0].mxu0
        %4818 = vmatprep.mubr.bf16.mxu0 %v3333
        %4819 = vmatmul.mubr.bf16.gmra.mrb[0].mxu0 %v3100
        %v4820 = vpop.f32.mrb[0].mxu0
        %v4821 = vadd.f32 0.0, %v4820
        %v4822 = vpop.f32.mrb[0].mxu0
        %v4823 = vpop.f32.mrb[0].mxu0
        %v4824 = vadd.f32 0.0, %v4823
        %v4825 = vpop.f32.mrb[0].mxu0
        %4826 = vmatprep.mubr.bf16.mxu0 %v3345
        %4827 = vmatmul.mubr.bf16.gmra.mrb[0].mxu0 %v3101
        %v4828 = vpop.f32.mrb[0].mxu0
        %v4829 = vadd.f32 0.0, %v4828
        %v4830 = vpop.f32.mrb[0].mxu0
        %v4831 = vpop.f32.mrb[0].mxu0
        %v4832 = vadd.f32 0.0, %v4831
        %v4833 = vpop.f32.mrb[0].mxu0
        %4834 = vmatprep.mubr.bf16.mxu0 %v3357
        %4835 = vmatmul.mubr.bf16.gmra.mrb[0].mxu0 %v3102
        %v4836 = vpop.f32.mrb[0].mxu0
        %v4837 = vadd.f32 0.0, %v4836
        %v4838 = vpop.f32.mrb[0].mxu0
        %v4839 = vpop.f32.mrb[0].mxu0
        %v4840 = vadd.f32 0.0, %v4839
        %v4841 = vpop.f32.mrb[0].mxu0
        %4842 = vmatprep.mubr.bf16.mxu0 %v3369
        %4843 = vmatmul.mubr.bf16.gmra.mrb[0].mxu0 %v3103
        %v4844 = vpop.f32.mrb[0].mxu0
        %v4845 = vadd.f32 0.0, %v4844
        %v4846 = vpop.f32.mrb[0].mxu0
        %v4847 = vpop.f32.mrb[0].mxu0
        %v4848 = vadd.f32 0.0, %v4847
        %v4849 = vpop.f32.mrb[0].mxu0
        %4850 = vmatprep.mubr.bf16.mxu0 %v3381
        %4851 = vmatmul.mubr.bf16.gmra.mrb[0].mxu0 %v3104
        %v4852 = vpop.f32.mrb[0].mxu0
        %v4853 = vadd.f32 0.0, %v4852
        %v4854 = vpop.f32.mrb[0].mxu0
        %v4855 = vpop.f32.mrb[0].mxu0
        %v4856 = vadd.f32 0.0, %v4855
        %v4857 = vpop.f32.mrb[0].mxu0
        %4858 = vmatprep.mubr.bf16.mxu0 %v3393
        %4859 = vmatmul.mubr.bf16.gmra.mrb[0].mxu0 %v3105
        %v4860 = vpop.f32.mrb[0].mxu0
        %v4861 = vadd.f32 0.0, %v4860
        %v4862 = vpop.f32.mrb[0].mxu0
        %v4863 = vpop.f32.mrb[0].mxu0
        %v4864 = vadd.f32 0.0, %v4863
        %v4865 = vpop.f32.mrb[0].mxu0
        %4866 = vdwg.mxu0
        %4867 = vmatprep.subr.bf16.mxu0 0
        %4868 = vmatpush1.bf16.msra.mxu0 %v4674
        %4869 = vmatprep.subr.bf16.mxu0 0
        %4870 = vmatpush1.bf16.msra.mxu0 %v4675
        %4871 = vmatprep.subr.bf16.mxu0 0
        %4872 = vmatpush1.bf16.msra.mxu0 %v4676
        %4873 = vmatprep.subr.bf16.mxu0 0
        %4874 = vmatpush1.bf16.msra.mxu0 %v4677
        %4875 = vmatprep.subr.bf16.mxu0 0
        %4876 = vmatpush1.bf16.msra.mxu0 %v4678
        %4877 = vmatprep.subr.bf16.mxu0 0
        %4878 = vmatpush1.bf16.msra.mxu0 %v4679
        %4879 = vmatprep.subr.bf16.mxu0 0
        %4880 = vmatpush1.bf16.msra.mxu0 %v4680
        %4881 = vmatprep.subr.bf16.mxu0 0
        %4882 = vmatpush1.bf16.msra.mxu0 %v4681
        %4883 = vmatprep.subr.bf16.mxu0 0
        %4884 = vmatpush1.bf16.msra.mxu0 0
        %4885 = vmatprep.subr.bf16.mxu0 0
        %4886 = vmatpush1.bf16.msra.mxu0 0
        %4887 = vmatprep.subr.bf16.mxu0 0
        %4888 = vmatpush1.bf16.msra.mxu0 0
        %4889 = vmatprep.subr.bf16.mxu0 0
        %4890 = vmatpush1.bf16.msra.mxu0 0
        %4891 = vmatprep.subr.bf16.mxu0 0
        %4892 = vmatpush1.bf16.msra.mxu0 0
        %4893 = vmatprep.subr.bf16.mxu0 0
        %4894 = vmatpush1.bf16.msra.mxu0 0
        %4895 = vmatprep.subr.bf16.mxu0 0
        %4896 = vmatpush1.bf16.msra.mxu0 0
        %4897 = vmatprep.subr.bf16.mxu0 0
        %4898 = vmatpush1.bf16.msra.mxu0 0
        %4899 = vmatprep.mubr.bf16.mxu0 0
        %4900 = vmatmul.mubr.bf16.gmra.mrb[0].mxu0 %v3420
        %v4901 = vpop.f32.mrb[0].mxu0
        %v4902 = vadd.f32 %v4741, %v4901
        %v4903 = vpop.f32.mrb[0].mxu0
        %v4904 = vpop.f32.mrb[0].mxu0
        %v4905 = vadd.f32 %v4744, %v4904
        %v4906 = vpop.f32.mrb[0].mxu0
        %4907 = vmatprep.mubr.bf16.mxu0 0
        %4908 = vmatmul.mubr.bf16.gmra.mrb[0].mxu0 %v3423
        %v4909 = vpop.f32.mrb[0].mxu0
        %v4910 = vadd.f32 %v4749, %v4909
        %v4911 = vpop.f32.mrb[0].mxu0
        %v4912 = vpop.f32.mrb[0].mxu0
        %v4913 = vadd.f32 %v4752, %v4912
        %v4914 = vpop.f32.mrb[0].mxu0
        %4915 = vmatprep.mubr.bf16.mxu0 0
        %4916 = vmatmul.mubr.bf16.gmra.mrb[0].mxu0 %v3426
        %v4917 = vpop.f32.mrb[0].mxu0
        %v4918 = vadd.f32 %v4757, %v4917
        %v4919 = vpop.f32.mrb[0].mxu0
        %v4920 = vpop.f32.mrb[0].mxu0
        %v4921 = vadd.f32 %v4760, %v4920
        %v4922 = vpop.f32.mrb[0].mxu0
        %4923 = vmatprep.mubr.bf16.mxu0 0
        %4924 = vmatmul.mubr.bf16.gmra.mrb[0].mxu0 %v3429
        %v4925 = vpop.f32.mrb[0].mxu0
        %v4926 = vadd.f32 %v4765, %v4925
        %v4927 = vpop.f32.mrb[0].mxu0
        %v4928 = vpop.f32.mrb[0].mxu0
        %v4929 = vadd.f32 %v4768, %v4928
        %v4930 = vpop.f32.mrb[0].mxu0
        %4931 = vmatprep.mubr.bf16.mxu0 0
        %4932 = vmatmul.mubr.bf16.gmra.mrb[0].mxu0 %v3432
        %v4933 = vpop.f32.mrb[0].mxu0
        %v4934 = vadd.f32 %v4773, %v4933
        %v4935 = vpop.f32.mrb[0].mxu0
        %v4936 = vpop.f32.mrb[0].mxu0
        %v4937 = vadd.f32 %v4776, %v4936
        %v4938 = vpop.f32.mrb[0].mxu0
        %4939 = vmatprep.mubr.bf16.mxu0 0
        %4940 = vmatmul.mubr.bf16.gmra.mrb[0].mxu0 %v3435
        %v4941 = vpop.f32.mrb[0].mxu0
        %v4942 = vadd.f32 %v4781, %v4941
        %v4943 = vpop.f32.mrb[0].mxu0
        %v4944 = vpop.f32.mrb[0].mxu0
        %v4945 = vadd.f32 %v4784, %v4944
        %v4946 = vpop.f32.mrb[0].mxu0
        %4947 = vmatprep.mubr.bf16.mxu0 0
        %4948 = vmatmul.mubr.bf16.gmra.mrb[0].mxu0 %v3438
        %v4949 = vpop.f32.mrb[0].mxu0
        %v4950 = vadd.f32 %v4789, %v4949
        %v4951 = vpop.f32.mrb[0].mxu0
        %v4952 = vpop.f32.mrb[0].mxu0
        %v4953 = vadd.f32 %v4792, %v4952
        %v4954 = vpop.f32.mrb[0].mxu0
        %4955 = vmatprep.mubr.bf16.mxu0 0
        %4956 = vmatmul.mubr.bf16.gmra.mrb[0].mxu0 %v3441
        %v4957 = vpop.f32.mrb[0].mxu0
        %v4958 = vadd.f32 %v4797, %v4957
        %v4959 = vpop.f32.mrb[0].mxu0
        %v4960 = vpop.f32.mrb[0].mxu0
        %v4961 = vadd.f32 %v4800, %v4960
        %v4962 = vpop.f32.mrb[0].mxu0
        %4963 = vmatprep.mubr.bf16.mxu0 0
        %4964 = vmatmul.mubr.bf16.gmra.mrb[0].mxu0 %v3444
        %v4965 = vpop.f32.mrb[0].mxu0
        %v4966 = vadd.f32 %v4805, %v4965
        %v4967 = vpop.f32.mrb[0].mxu0
        %v4968 = vpop.f32.mrb[0].mxu0
        %v4969 = vadd.f32 %v4808, %v4968
        %v4970 = vpop.f32.mrb[0].mxu0
        %4971 = vmatprep.mubr.bf16.mxu0 0
        %4972 = vmatmul.mubr.bf16.gmra.mrb[0].mxu0 %v3447
        %v4973 = vpop.f32.mrb[0].mxu0
        %v4974 = vadd.f32 %v4813, %v4973
        %v4975 = vpop.f32.mrb[0].mxu0
        %v4976 = vpop.f32.mrb[0].mxu0
        %v4977 = vadd.f32 %v4816, %v4976
        %v4978 = vpop.f32.mrb[0].mxu0
        %4979 = vmatprep.mubr.bf16.mxu0 0
        %4980 = vmatmul.mubr.bf16.gmra.mrb[0].mxu0 %v3450
        %v4981 = vpop.f32.mrb[0].mxu0
        %v4982 = vadd.f32 %v4821, %v4981
        %v4983 = vpop.f32.mrb[0].mxu0
        %v4984 = vpop.f32.mrb[0].mxu0
        %v4985 = vadd.f32 %v4824, %v4984
        %v4986 = vpop.f32.mrb[0].mxu0
        %4987 = vmatprep.mubr.bf16.mxu0 0
        %4988 = vmatmul.mubr.bf16.gmra.mrb[0].mxu0 %v3453
        %v4989 = vpop.f32.mrb[0].mxu0
        %v4990 = vadd.f32 %v4829, %v4989
        %v4991 = vpop.f32.mrb[0].mxu0
        %v4992 = vpop.f32.mrb[0].mxu0
        %v4993 = vadd.f32 %v4832, %v4992
        %v4994 = vpop.f32.mrb[0].mxu0
        %4995 = vmatprep.mubr.bf16.mxu0 0
        %4996 = vmatmul.mubr.bf16.gmra.mrb[0].mxu0 %v3456
        %v4997 = vpop.f32.mrb[0].mxu0
        %v4998 = vadd.f32 %v4837, %v4997
        %v4999 = vpop.f32.mrb[0].mxu0
        %v5000 = vpop.f32.mrb[0].mxu0
        %v5001 = vadd.f32 %v4840, %v5000
        %v5002 = vpop.f32.mrb[0].mxu0
        %5003 = vmatprep.mubr.bf16.mxu0 0
        %5004 = vmatmul.mubr.bf16.gmra.mrb[0].mxu0 %v3459
        %v5005 = vpop.f32.mrb[0].mxu0
        %v5006 = vadd.f32 %v4845, %v5005
        %v5007 = vpop.f32.mrb[0].mxu0
        %v5008 = vpop.f32.mrb[0].mxu0
        %v5009 = vadd.f32 %v4848, %v5008
        %v5010 = vpop.f32.mrb[0].mxu0
        %5011 = vmatprep.mubr.bf16.mxu0 0
        %5012 = vmatmul.mubr.bf16.gmra.mrb[0].mxu0 %v3462
        %v5013 = vpop.f32.mrb[0].mxu0
        %v5014 = vadd.f32 %v4853, %v5013
        %v5015 = vpop.f32.mrb[0].mxu0
        %v5016 = vpop.f32.mrb[0].mxu0
        %v5017 = vadd.f32 %v4856, %v5016
        %v5018 = vpop.f32.mrb[0].mxu0
        %5019 = vmatprep.mubr.bf16.mxu0 0
        %5020 = vmatmul.mubr.bf16.gmra.mrb[0].mxu0 %v3465
        %v5021 = vpop.f32.mrb[0].mxu0
        %v5022 = vadd.f32 %v4861, %v5021
        %v5023 = vpop.f32.mrb[0].mxu0
        %v5024 = vpop.f32.mrb[0].mxu0
        %v5025 = vadd.f32 %v4864, %v5024
        %v5026 = vpop.f32.mrb[0].mxu0
        %5027 = vdwg.mxu0
        %v5028 = vadd.f32 %v4387, %v4902
        %v5029 = vadd.f32 %v4390, %v4905
        %v5030 = vadd.f32 %v4395, %v4910
        %v5031 = vadd.f32 %v4398, %v4913
        %v5032 = vadd.f32 %v4403, %v4918
        %v5033 = vadd.f32 %v4406, %v4921
        %v5034 = vadd.f32 %v4411, %v4926
        %v5035 = vadd.f32 %v4414, %v4929
        %v5036 = vadd.f32 %v4419, %v4934
        %v5037 = vadd.f32 %v4422, %v4937
        %v5038 = vadd.f32 %v4427, %v4942
        %v5039 = vadd.f32 %v4430, %v4945
        %v5040 = vadd.f32 %v4435, %v4950
        %v5041 = vadd.f32 %v4438, %v4953
        %v5042 = vadd.f32 %v4443, %v4958
        %v5043 = vadd.f32 %v4446, %v4961
        %v5044 = vadd.f32 %v4451, %v4966
        %v5045 = vadd.f32 %v4454, %v4969
        %v5046 = vadd.f32 %v4459, %v4974
        %v5047 = vadd.f32 %v4462, %v4977
        %v5048 = vadd.f32 %v4467, %v4982
        %v5049 = vadd.f32 %v4470, %v4985
        %v5050 = vadd.f32 %v4475, %v4990
        %v5051 = vadd.f32 %v4478, %v4993
        %v5052 = vadd.f32 %v4483, %v4998
        %v5053 = vadd.f32 %v4486, %v5001
        %v5054 = vadd.f32 %v4491, %v5006
        %v5055 = vadd.f32 %v4494, %v5009
        %v5056 = vadd.f32 %v4499, %v5014
        %v5057 = vadd.f32 %v4502, %v5017
        %v5058 = vadd.f32 %v4507, %v5022
        %v5059 = vadd.f32 %v4510, %v5025
        %v5060 = vld [vmem:[%s5] sm:$0x1]
        %v5062 = vlaneseq
        %v5063 = vshrl.u32 %v5062, 7
        %v5064 = vsub.s32 0, %v5063
        %v5065 = vrot.slane %v5060, %v5064
        %v5067 = vmul.f32 %v5028, %v5065
        %v5068 = vmul.f32 %v5029, %v5065
        %v5069 = vmul.f32 %v5030, %v5065
        %v5070 = vmul.f32 %v5031, %v5065
        %v5071 = vmul.f32 %v5032, %v5065
        %v5072 = vmul.f32 %v5033, %v5065
        %v5073 = vmul.f32 %v5034, %v5065
        %v5074 = vmul.f32 %v5035, %v5065
        %v5075 = vmul.f32 %v5036, %v5065
        %v5076 = vmul.f32 %v5037, %v5065
        %v5077 = vmul.f32 %v5038, %v5065
        %v5078 = vmul.f32 %v5039, %v5065
        %v5079 = vmul.f32 %v5040, %v5065
        %v5080 = vmul.f32 %v5041, %v5065
        %v5081 = vmul.f32 %v5042, %v5065
        %v5082 = vmul.f32 %v5043, %v5065
        %v5083 = vmul.f32 %v5044, %v5065
        %v5084 = vmul.f32 %v5045, %v5065
        %v5085 = vmul.f32 %v5046, %v5065
        %v5086 = vmul.f32 %v5047, %v5065
        %v5087 = vmul.f32 %v5048, %v5065
        %v5088 = vmul.f32 %v5049, %v5065
        %v5089 = vmul.f32 %v5050, %v5065
        %v5090 = vmul.f32 %v5051, %v5065
        %v5091 = vmul.f32 %v5052, %v5065
        %v5092 = vmul.f32 %v5053, %v5065
        %v5093 = vmul.f32 %v5054, %v5065
        %v5094 = vmul.f32 %v5055, %v5065
        %v5095 = vmul.f32 %v5056, %v5065
        %v5096 = vmul.f32 %v5057, %v5065
        %v5097 = vmul.f32 %v5058, %v5065
        %v5098 = vmul.f32 %v5059, %v5065
        %v5099 = vld [vmem:[%s6] sm:$0x1]
        %v5101 = vlaneseq
        %v5102 = vshrl.u32 %v5101, 7
        %v5103 = vsub.s32 0, %v5102
        %v5104 = vrot.slane %v5099, %v5103
        %v5106 = vadd.f32 %v5067, %v5104
        %v5107 = vadd.f32 %v5068, %v5104
        %v5108 = vadd.f32 %v5069, %v5104
        %v5109 = vadd.f32 %v5070, %v5104
        %v5110 = vadd.f32 %v5071, %v5104
        %v5111 = vadd.f32 %v5072, %v5104
        %v5112 = vadd.f32 %v5073, %v5104
        %v5113 = vadd.f32 %v5074, %v5104
        %v5114 = vadd.f32 %v5075, %v5104
        %v5115 = vadd.f32 %v5076, %v5104
        %v5116 = vadd.f32 %v5077, %v5104
        %v5117 = vadd.f32 %v5078, %v5104
        %v5118 = vadd.f32 %v5079, %v5104
        %v5119 = vadd.f32 %v5080, %v5104
        %v5120 = vadd.f32 %v5081, %v5104
        %v5121 = vadd.f32 %v5082, %v5104
        %v5122 = vadd.f32 %v5083, %v5104
        %v5123 = vadd.f32 %v5084, %v5104
        %v5124 = vadd.f32 %v5085, %v5104
        %v5125 = vadd.f32 %v5086, %v5104
        %v5126 = vadd.f32 %v5087, %v5104
        %v5127 = vadd.f32 %v5088, %v5104
        %v5128 = vadd.f32 %v5089, %v5104
        %v5129 = vadd.f32 %v5090, %v5104
        %v5130 = vadd.f32 %v5091, %v5104
        %v5131 = vadd.f32 %v5092, %v5104
        %v5132 = vadd.f32 %v5093, %v5104
        %v5133 = vadd.f32 %v5094, %v5104
        %v5134 = vadd.f32 %v5095, %v5104
        %v5135 = vadd.f32 %v5096, %v5104
        %v5136 = vadd.f32 %v5097, %v5104
        %v5137 = vadd.f32 %v5098, %v5104
        %v5138 = vunpack.c.l.bf16 %v533
        %v5139 = vunpack.c.h.bf16 %v533
        %v5140 = vunpack.c.l.bf16 %v545
        %v5141 = vunpack.c.h.bf16 %v545
        %v5142 = vunpack.c.l.bf16 %v557
        %v5143 = vunpack.c.h.bf16 %v557
        %v5144 = vunpack.c.l.bf16 %v569
        %v5145 = vunpack.c.h.bf16 %v569
        %v5146 = vunpack.c.l.bf16 %v581
        %v5147 = vunpack.c.h.bf16 %v581
        %v5148 = vunpack.c.l.bf16 %v593
        %v5149 = vunpack.c.h.bf16 %v593
        %v5150 = vunpack.c.l.bf16 %v605
        %v5151 = vunpack.c.h.bf16 %v605
        %v5152 = vunpack.c.l.bf16 %v617
        %v5153 = vunpack.c.h.bf16 %v617
        %v5154 = vunpack.c.l.bf16 %v629
        %v5155 = vunpack.c.h.bf16 %v629
        %v5156 = vunpack.c.l.bf16 %v641
        %v5157 = vunpack.c.h.bf16 %v641
        %v5158 = vunpack.c.l.bf16 %v653
        %v5159 = vunpack.c.h.bf16 %v653
        %v5160 = vunpack.c.l.bf16 %v665
        %v5161 = vunpack.c.h.bf16 %v665
        %v5162 = vunpack.c.l.bf16 %v677
        %v5163 = vunpack.c.h.bf16 %v677
        %v5164 = vunpack.c.l.bf16 %v689
        %v5165 = vunpack.c.h.bf16 %v689
        %v5166 = vunpack.c.l.bf16 %v701
        %v5167 = vunpack.c.h.bf16 %v701
        %v5168 = vunpack.c.l.bf16 %v713
        %v5169 = vunpack.c.h.bf16 %v713
        %v5170 = vadd.f32 %v5106, %v5138
        %v5171 = vadd.f32 %v5107, %v5139
        %v5172 = vadd.f32 %v5108, %v5140
        %v5173 = vadd.f32 %v5109, %v5141
        %v5174 = vadd.f32 %v5110, %v5142
        %v5175 = vadd.f32 %v5111, %v5143
        %v5176 = vadd.f32 %v5112, %v5144
        %v5177 = vadd.f32 %v5113, %v5145
        %v5178 = vadd.f32 %v5114, %v5146
        %v5179 = vadd.f32 %v5115, %v5147
        %v5180 = vadd.f32 %v5116, %v5148
        %v5181 = vadd.f32 %v5117, %v5149
        %v5182 = vadd.f32 %v5118, %v5150
        %v5183 = vadd.f32 %v5119, %v5151
        %v5184 = vadd.f32 %v5120, %v5152
        %v5185 = vadd.f32 %v5121, %v5153
        %v5186 = vadd.f32 %v5122, %v5154
        %v5187 = vadd.f32 %v5123, %v5155
        %v5188 = vadd.f32 %v5124, %v5156
        %v5189 = vadd.f32 %v5125, %v5157
        %v5190 = vadd.f32 %v5126, %v5158
        %v5191 = vadd.f32 %v5127, %v5159
        %v5192 = vadd.f32 %v5128, %v5160
        %v5193 = vadd.f32 %v5129, %v5161
        %v5194 = vadd.f32 %v5130, %v5162
        %v5195 = vadd.f32 %v5131, %v5163
        %v5196 = vadd.f32 %v5132, %v5164
        %v5197 = vadd.f32 %v5133, %v5165
        %v5198 = vadd.f32 %v5134, %v5166
        %v5199 = vadd.f32 %v5135, %v5167
        %v5200 = vadd.f32 %v5136, %v5168
        %v5201 = vadd.f32 %v5137, %v5169
        %v5202 = vmax.f32 %v5170, 0.0
        %v5203 = vmax.f32 %v5171, 0.0
        %v5204 = vmax.f32 %v5172, 0.0
        %v5205 = vmax.f32 %v5173, 0.0
        %v5206 = vmax.f32 %v5174, 0.0
        %v5207 = vmax.f32 %v5175, 0.0
        %v5208 = vmax.f32 %v5176, 0.0
        %v5209 = vmax.f32 %v5177, 0.0
        %v5210 = vmax.f32 %v5178, 0.0
        %v5211 = vmax.f32 %v5179, 0.0
        %v5212 = vmax.f32 %v5180, 0.0
        %v5213 = vmax.f32 %v5181, 0.0
        %v5214 = vmax.f32 %v5182, 0.0
        %v5215 = vmax.f32 %v5183, 0.0
        %v5216 = vmax.f32 %v5184, 0.0
        %v5217 = vmax.f32 %v5185, 0.0
        %v5218 = vmax.f32 %v5186, 0.0
        %v5219 = vmax.f32 %v5187, 0.0
        %v5220 = vmax.f32 %v5188, 0.0
        %v5221 = vmax.f32 %v5189, 0.0
        %v5222 = vmax.f32 %v5190, 0.0
        %v5223 = vmax.f32 %v5191, 0.0
        %v5224 = vmax.f32 %v5192, 0.0
        %v5225 = vmax.f32 %v5193, 0.0
        %v5226 = vmax.f32 %v5194, 0.0
        %v5227 = vmax.f32 %v5195, 0.0
        %v5228 = vmax.f32 %v5196, 0.0
        %v5229 = vmax.f32 %v5197, 0.0
        %v5230 = vmax.f32 %v5198, 0.0
        %v5231 = vmax.f32 %v5199, 0.0
        %v5232 = vmax.f32 %v5200, 0.0
        %v5233 = vmax.f32 %v5201, 0.0
        %v5234 = vmin.f32 %v5202, 20.0
        %v5235 = vmin.f32 %v5203, 20.0
        %v5236 = vmin.f32 %v5204, 20.0
        %v5237 = vmin.f32 %v5205, 20.0
        %v5238 = vmin.f32 %v5206, 20.0
        %v5239 = vmin.f32 %v5207, 20.0
        %v5240 = vmin.f32 %v5208, 20.0
        %v5241 = vmin.f32 %v5209, 20.0
        %v5242 = vmin.f32 %v5210, 20.0
        %v5243 = vmin.f32 %v5211, 20.0
        %v5244 = vmin.f32 %v5212, 20.0
        %v5245 = vmin.f32 %v5213, 20.0
        %v5246 = vmin.f32 %v5214, 20.0
        %v5247 = vmin.f32 %v5215, 20.0
        %v5248 = vmin.f32 %v5216, 20.0
        %v5249 = vmin.f32 %v5217, 20.0
        %v5250 = vmin.f32 %v5218, 20.0
        %v5251 = vmin.f32 %v5219, 20.0
        %v5252 = vmin.f32 %v5220, 20.0
        %v5253 = vmin.f32 %v5221, 20.0
        %v5254 = vmin.f32 %v5222, 20.0
        %v5255 = vmin.f32 %v5223, 20.0
        %v5256 = vmin.f32 %v5224, 20.0
        %v5257 = vmin.f32 %v5225, 20.0
        %v5258 = vmin.f32 %v5226, 20.0
        %v5259 = vmin.f32 %v5227, 20.0
        %v5260 = vmin.f32 %v5228, 20.0
        %v5261 = vmin.f32 %v5229, 20.0
        %v5262 = vmin.f32 %v5230, 20.0
        %v5263 = vmin.f32 %v5231, 20.0
        %v5264 = vmin.f32 %v5232, 20.0
        %v5265 = vmin.f32 %v5233, 20.0
        %5266 = vst [vmem:[%s286] sm:$0xff] %v5234
        %5267 = vst [vmem:[%s286 + $0x8] sm:$0xff] %v5235
        %5268 = vst [vmem:[%s286 + $0x10] sm:$0xff] %v5236
        %5269 = vst [vmem:[%s286 + $0x18] sm:$0xff] %v5237
        %5270 = vst [vmem:[%s286 + $0x20] sm:$0xff] %v5238
        %5271 = vst [vmem:[%s286 + $0x28] sm:$0xff] %v5239
        %5272 = vst [vmem:[%s286 + $0x30] sm:$0xff] %v5240
        %5273 = vst [vmem:[%s286 + $0x38] sm:$0xff] %v5241
        %5274 = vst [vmem:[%s286 + $0x40] sm:$0xff] %v5242
        %5275 = vst [vmem:[%s286 + $0x48] sm:$0xff] %v5243
        %5276 = vst [vmem:[%s286 + $0x50] sm:$0xff] %v5244
        %5277 = vst [vmem:[%s286 + $0x58] sm:$0xff] %v5245
        %5278 = vst [vmem:[%s286 + $0x60] sm:$0xff] %v5246
        %5279 = vst [vmem:[%s286 + $0x68] sm:$0xff] %v5247
        %5280 = vst [vmem:[%s286 + $0x70] sm:$0xff] %v5248
        %5281 = vst [vmem:[%s286 + $0x78] sm:$0xff] %v5249
        %5282 = vst [vmem:[%s286 + $0x80] sm:$0xff] %v5250
        %5283 = vst [vmem:[%s286 + $0x88] sm:$0xff] %v5251
        %5284 = vst [vmem:[%s286 + $0x90] sm:$0xff] %v5252
        %5285 = vst [vmem:[%s286 + $0x98] sm:$0xff] %v5253
        %5286 = vst [vmem:[%s286 + $0xa0] sm:$0xff] %v5254
        %5287 = vst [vmem:[%s286 + $0xa8] sm:$0xff] %v5255
        %5288 = vst [vmem:[%s286 + $0xb0] sm:$0xff] %v5256
        %5289 = vst [vmem:[%s286 + $0xb8] sm:$0xff] %v5257
        %5290 = vst [vmem:[%s286 + $0xc0] sm:$0xff] %v5258
        %5291 = vst [vmem:[%s286 + $0xc8] sm:$0xff] %v5259
        %5292 = vst [vmem:[%s286 + $0xd0] sm:$0xff] %v5260
        %5293 = vst [vmem:[%s286 + $0xd8] sm:$0xff] %v5261
        %5294 = vst [vmem:[%s286 + $0xe0] sm:$0xff] %v5262
        %5295 = vst [vmem:[%s286 + $0xe8] sm:$0xff] %v5263
        %5296 = vst [vmem:[%s286 + $0xf0] sm:$0xff] %v5264
        %5297 = vst [vmem:[%s286 + $0xf8] sm:$0xff] %v5265
        %s5298 = sand.u32 %s182, 1
        %s5299 = scalar_lea.sflag [#allocation5], %s5298
        %s5300 = sand.u32 %s182, 1
        %s5301 = smul.addr %s5300, 256
        %s5302 = scalar_lea.vmem [#allocation6], %s5301
        // Predicated region
        $region53: #{tpu_custom_call.1} parent=47 // pred_check
          %p5303 = pneg %p192
        $region54: #{tpu_custom_call.1} parent=47 // pred_check_branch
          %5305 = sbr.rel (%p5303) target = $region56
        $region55: #{tpu_custom_call.1} parent=47 // pred_region
          %s5307 = ssub.s32 4096, 4096
          %5308 = vsyncadd %s5299, %s5307
          %s5309 = smul.addr %s22, 32
          %s5310 = smul.addr %s5309, 128
          %s5311 = scalar_lea.hbm %s7, %s5310
          %s5312 = sshll.u32 %s5302, 4
          %s5313 = int_to_ptr.vmem [resolvable:$true] %s5312
          %5318 = dma.vmem_to_hbm [thread:$0]  %s5313, 4096, %s5311, %s5299, 128, 128, 8
        $region56: #{tpu_custom_call.1} parent=47 // pred_fallthru
          _
      $region48: #{tpu_custom_call.1} parent=5 // pred_fallthru
        _
      %p5319 = scmp.le.s32.totalorder 2, %s17
      // Predicated region
      $region57: #{tpu_custom_call.1} parent=5 // pred_check
        %p5320 = pneg %p5319
      $region58: #{tpu_custom_call.1} parent=5 // pred_check_branch
        %5322 = sbr.rel (%p5320) target = $region60
      $region59: #{tpu_custom_call.1} parent=5 // pred_region
        %s5323 = ssub.s32 %s17, 2
        // Predicated region
        $region61: #{tpu_custom_call.1} parent=59 // pred_check
          %p5324 = pneg %p198
        $region62: #{tpu_custom_call.1} parent=59 // pred_check_branch
          %5326 = sbr.rel (%p5324) target = $region64
        $region63: #{tpu_custom_call.1} parent=59 // pred_region
          %s5327 = sand.u32 %s183, 1
          %s5328 = scalar_lea.sflag [#allocation5], %s5327
          %s5329 = sand.u32 %s183, 1
          %s5330 = smul.addr %s5329, 256
          %s5331 = scalar_lea.vmem [#allocation6], %s5330
          %5332 = dma.done %s5328, 4096
        $region64: #{tpu_custom_call.1} parent=59 // pred_fallthru
          _
      $region60: #{tpu_custom_call.1} parent=5 // pred_fallthru
        _
    $region6: #{tpu_custom_call.1} parent=1 // loop_footer
      %s21 = sadd.s32 1, %s17
    $region7: #{tpu_custom_call.1} parent=1 // loop_footer_branch
      %16 = sbr.rel target = $region3
    $region8: #{tpu_custom_call.1} parent=1 // loop_exit
      _
    %5333 = vsyncpa [#allocation4], 1
    %s5334 = scalar_lea.sflag [#allocation4], 1
    %5335 = vsyncpa %s5334, 1
    %5336 = vsyncpa [#allocation5], 1
    %s5337 = scalar_lea.sflag [#allocation5], 1
    %5338 = vsyncpa %s5337, 1

</llo_original>
